<compile_context>
chip_gen: v6e
topology: v6e:2x2x1
jax: 0.10.0
libtpu: 0.0.40
codegen_flags: <defaults>
</compile_context>

<pallas_src>
import jax
import jax.numpy as jnp
from jax.experimental import pallas as pl
from jax.experimental.pallas import tpu as pltpu


def _round_up(x, m):
    return (x + m - 1) // m * m


def _cdiv(a, b):
    return (a + b - 1) // b


# ---------------------------------------------------------------------------
# Kernel
# ---------------------------------------------------------------------------
def _swiglu_kernel(x_ref, w13_ref, w2t_ref, o_ref, acc_ref):
    # x_ref:   (tm, H)     token tile (same block across the f axis)
    # w13_ref: (H, 2*tf)   fused [W1^T_f | W3^T_f] block for this f step (bf16)
    # w2t_ref: (tf, H)     W2^T block for this f step (bf16)
    # o_ref:   (tm, H)     output tile (resident across the f reduction axis)
    # acc_ref: (tm, H)     f32 accumulator scratch
    f = pl.program_id(1)
    tf = w2t_ref.shape[0]

    @pl.when(f == 0)
    def _():
        acc_ref[...] = jnp.zeros_like(acc_ref)

    # Cast activations to the MXU dtype in-kernel (avoids a wrapper-side pass).
    xb = x_ref[...].astype(w13_ref.dtype)

    # One MXU pass over x covers both the gate (W1) and up (W3) projections.
    h = jnp.dot(xb, w13_ref[...], preferred_element_type=jnp.float32)
    h1 = h[:, :tf]
    h3 = h[:, tf:]
    # SiLU + gating in f32; cast to bf16 only right before the second matmul.
    gated = (h1 * jax.nn.sigmoid(h1)) * h3
    acc_ref[...] += jnp.dot(gated.astype(w2t_ref.dtype), w2t_ref[...],
                            preferred_element_type=jnp.float32)

    @pl.when(f == pl.num_programs(1) - 1)
    def _():
        o_ref[...] = acc_ref[...].astype(o_ref.dtype)


# ---------------------------------------------------------------------------
# Generation-aware configuration
# ---------------------------------------------------------------------------
def _tpu_generation():
    try:
        kind = jax.devices()[0].device_kind.lower()
    except Exception:
        return "unknown"
    if "v7" in kind:
        return "v7x"
    if "v6" in kind:
        return "v6e"
    if "v5" in kind and ("lite" in kind or "5e" in kind):
        return "v5e"
    if "v5" in kind:
        return "v5p"
    return "unknown"


def _vmem_budget_bytes(gen):
    cap = None
    try:
        cap = int(pltpu.get_tpu_info().vmem_capacity_bytes)
    except Exception:
        cap = None
    if cap is None:
        cap = (64 << 20) if gen == "v7x" else (128 << 20)
    # Leave headroom for Mosaic internal scratch / compiler temporaries
    # (~50 MiB on v7x, ~100 MiB on v5e/v6e).
    return int(cap * 0.78)


def _vmem_estimate(tm, tf, H, x_isz, out_isz):
    """Double-buffered tiles + accumulator + in-kernel f32 intermediates."""
    return (2 * tm * H * x_isz            # x tile (x2 buffers)
            + 2 * (2 * H * tf) * 2        # w13 block bf16 (x2 buffers)
            + 2 * (tf * H) * 2            # w2t block bf16 (x2 buffers)
            + 2 * tm * H * out_isz        # out tile (x2 buffers)
            + tm * H * 4                  # f32 accumulator scratch
            + tm * 2 * tf * 4             # h (tm, 2*tf) f32
            + tm * tf * 4 + tm * tf * 2)  # gated f32 + bf16 copy


def _select_tiles(T, H, F, x_isz, out_isz, gen, vmem_budget):
    tm_target = {"v5e": 384, "v6e": 768, "v7x": 512}.get(gen, 256)
    tm = max(16, min(tm_target, _round_up(T, 16)))

    # v7x: make sure both TensorCores get a token tile.
    if gen == "v7x" and T >= 256 and _cdiv(T, tm) < 2:
        tm = min(max(128, _round_up(_cdiv(T, 2), 128)), _round_up(T, 16))

    # tf candidates: divisors of F, preferring lane-aligned (mult of 128) ones.
    tf_candidates = [d for d in range(F, 0, -1)
                     if F % d == 0 and (d % 128 == 0 or d == F)]
    if not tf_candidates:
        tf_candidates = [F]

    while True:
        tf = next((t for t in tf_candidates
                   if _vmem_estimate(tm, t, H, x_isz, out_isz) <= vmem_budget),
                  tf_candidates[-1])
        if _vmem_estimate(tm, tf, H, x_isz, out_isz) <= vmem_budget or tm <= 64:
            break
        tm = max(64, _round_up(tm // 2, 16))
    return tm, tf


# ---------------------------------------------------------------------------
# Weight preparation (one-time; hoist out of the per-call path in a real model)
# ---------------------------------------------------------------------------
def prepare_weights(w1, w2, w3, *, tf, dtype=jnp.bfloat16):
    """Transpose, fuse W1^T/W3^T per F-block (contiguous blocks), cast to bf16.

    Returns:
      w13: (nf, H, 2*tf)  — block f is the contiguous fused [W1^T_f | W3^T_f]
      w2t: (F, H)
    """
    F_, H = w1.shape
    assert F_ % tf == 0, "tf must divide ffn_dim"
    nf = F_ // tf
    w1t = w1.T.astype(dtype).reshape(H, nf, tf)
    w3t = w3.T.astype(dtype).reshape(H, nf, tf)
    w13 = jnp.concatenate([w1t, w3t], axis=2).transpose(1, 0, 2)  # (nf, H, 2*tf)
    w2t = w2.T.astype(dtype)                                      # (F, H)
    return w13, w2t


# ---------------------------------------------------------------------------
# Pallas call wrapper
# ---------------------------------------------------------------------------
def block_sparse_top2_mlp_prepared(hidden_states, w13, w2t, *, tm, vmem_budget):
    """hidden_states: (T, H); w13: (nf, H, 2*tf) fused; w2t: (F, H)."""
    T, H = hidden_states.shape
    nf, _, two_tf = w13.shape
    tf = two_tf // 2
    F_ = w2t.shape[0]
    out_dtype = hidden_states.dtype
    x_isz = jnp.dtype(hidden_states.dtype).itemsize
    out_isz = jnp.dtype(out_dtype).itemsize
    w_isz = jnp.dtype(w2t.dtype).itemsize

    # Token tiling: pad ragged T with zero rows (exact zeros flow through).
    tm = max(16, min(tm, _round_up(T, 16)))
    T_pad = _round_up(T, tm)
    x = hidden_states
    if T_pad != T:
        x = jnp.pad(x, ((0, T_pad - T), (0, 0)))
    n_i = T_pad // tm
    grid = (n_i, nf)

    vmem_bytes = _vmem_estimate(tm, tf, H, x_isz, out_isz)
    vmem_limit = int(min(max(int(vmem_bytes * 1.3) + (2 << 20), 24 << 20),
                         vmem_budget))

    weight_passes = n_i if nf > 1 else 1   # nf==1 -> constant block index, one stream
    cost = pl.CostEstimate(
        flops=2 * T_pad * H * F_ * 3,
        transcendentals=T_pad * F_,
        bytes_accessed=(T_pad * H * x_isz
                        + weight_passes * (w13.size + w2t.size) * w_isz
                        + T_pad * H * out_isz),
    )

    out = pl.pallas_call(
        _swiglu_kernel,
        out_shape=jax.ShapeDtypeStruct((T_pad, H), out_dtype),
        grid_spec=pltpu.PrefetchScalarGridSpec(
            num_scalar_prefetch=0,
            grid=grid,
            in_specs=[
                pl.BlockSpec((tm, H), lambda i, f: (i, 0)),            # x tile
                pl.BlockSpec((None, H, 2 * tf), lambda i, f: (f, 0, 0)),  # fused W1^T|W3^T block (contiguous)
                pl.BlockSpec((tf, H), lambda i, f: (f, 0)),            # W2^T block
            ],
            out_specs=pl.BlockSpec((tm, H), lambda i, f: (i, 0)),
            scratch_shapes=[pltpu.VMEM((tm, H), jnp.float32)],
        ),
        compiler_params=pltpu.CompilerParams(
            dimension_semantics=("parallel", "arbitrary"),
            vmem_limit_bytes=vmem_limit,
        ),
        cost_estimate=cost,
    )(x, w13, w2t)

    return out[:T] if T_pad != T else out


def block_sparse_top2_mlp(hidden_states, w1, w2, w3, *, tm=None, tf=None):
    """Convenience wrapper (real models should call prepare_weights() once)."""
    T, H = hidden_states.shape
    F_ = w1.shape[0]
    gen = _tpu_generation()
    vmem_budget = _vmem_budget_bytes(gen)
    x_isz = jnp.dtype(hidden_states.dtype).itemsize
    auto_tm, auto_tf = _select_tiles(T, H, F_, x_isz, x_isz, gen, vmem_budget)
    tm = auto_tm if tm is None else tm
    tf = auto_tf if tf is None else tf
    assert F_ % tf == 0, "tf must divide ffn_dim"
    w13, w2t = prepare_weights(w1, w2, w3, tf=tf)
    return block_sparse_top2_mlp_prepared(hidden_states, w13, w2t,
                                          tm=tm, vmem_budget=vmem_budget)


def _reference(hidden_states, w1, w2, w3):
    h1 = hidden_states @ w1.T
    h3 = hidden_states @ w3.T
    return ((h1 * jax.nn.sigmoid(h1)) * h3) @ w2.T


if __name__ == "__main__":
    hidden_dim = 128
    ffn_dim = 512
    tokens = 512          # flattened (batch*seq) token-major layout

    key = jax.random.PRNGKey(0)
    kx, k1, k2, k3 = jax.random.split(key, 4)

    x = jax.random.normal(kx, (tokens, hidden_dim), dtype=jnp.float32)
    # nn.Linear weight layout (out_features, in_features), no bias.
    w1 = jax.random.normal(k1, (ffn_dim, hidden_dim), dtype=jnp.float32) * 0.02
    w2 = jax.random.normal(k2, (hidden_dim, ffn_dim), dtype=jnp.float32) * 0.02
    w3 = jax.random.normal(k3, (ffn_dim, hidden_dim), dtype=jnp.float32) * 0.02

    ref = _reference(x, w1, w2, w3)

    # 1) Auto-tuned path (generation-aware tm/tf; typically nf=1 at this size
    #    so the whole weight set is streamed exactly once).
    out = jax.block_until_ready(block_sparse_top2_mlp(x, w1, w2, w3))
    assert out.shape == (tokens, hidden_dim)
    rel_err = jnp.max(jnp.abs(out - ref)) / (jnp.max(jnp.abs(ref)) + 1e-6)
    assert rel_err < 3e-2, f"auto-path mismatch vs reference (rel_err={rel_err})"

    # 2) Forced F-streaming path (tf < F) so the accumulator / reduction axis
    #    and multi token tiles are exercised.
    out_s = jax.block_until_ready(
        block_sparse_top2_mlp(x, w1, w2, w3, tm=256, tf=256))
    rel_err_s = jnp.max(jnp.abs(out_s - ref)) / (jnp.max(jnp.abs(ref)) + 1e-6)
    assert rel_err_s < 3e-2, f"streamed-path mismatch vs reference (rel_err={rel_err_s})"

    # 3) Ragged token count: exercises the padding + slice path.
    x2 = jax.random.normal(kx, (40, hidden_dim), dtype=jnp.float32)
    out2 = jax.block_until_ready(block_sparse_top2_mlp(x2, w1, w2, w3, tf=256))
    ref2 = _reference(x2, w1, w2, w3)
    rel_err2 = jnp.max(jnp.abs(out2 - ref2)) / (jnp.max(jnp.abs(ref2)) + 1e-6)
    assert out2.shape == (40, hidden_dim)
    assert rel_err2 < 3e-2, f"ragged-T mismatch vs reference (rel_err={rel_err2})"

    print("KERNEL_OK")
</pallas_src>

<mosaic_0001>
module attributes {stable_mosaic.version = 11 : i64} {
  func.func @_swiglu_kernel(%arg0: i32, %arg1: i32, %arg2: memref<256x128xf32, #tpu.memory_space<vmem>>, %arg3: memref<1x128x1024xbf16, #tpu.memory_space<vmem>>, %arg4: memref<512x128xbf16, #tpu.memory_space<vmem>>, %arg5: memref<256x128xf32, #tpu.memory_space<vmem>>, %arg6: memref<256x128xf32, #tpu.memory_space<vmem>>) attributes {dimension_semantics = [#tpu.dimension_semantics<parallel>, #tpu.dimension_semantics<arbitrary>], iteration_bounds = array<i64: 2, 1>, scalar_prefetch = 0 : i64, scratch_operands = 1 : i64, tpu.core_type = #tpu.core_type<tc>, window_params = [{transform_indices = @transform_0, window_bounds = array<i64: 256, 128>}, {transform_indices = @transform_1, window_bounds = array<i64: 1, 128, 1024>}, {transform_indices = @transform_2, window_bounds = array<i64: 512, 128>}, {transform_indices = @transform_3, window_bounds = array<i64: 256, 128>}]} {
    %c0_i32 = arith.constant 0 : i32
    %0 = arith.cmpi eq, %arg1, %c0_i32 : i32
    %1 = arith.extui %0 : i1 to i32
    %c0_i32_0 = arith.constant 0 : i32
    %2 = arith.cmpi ne, %1, %c0_i32_0 : i32
    scf.if %2 {
      %cst_15 = arith.constant 0.000000e+00 : f32
      %26 = vector.broadcast %cst_15 : f32 to vector<256x128xf32>
      %c0_16 = arith.constant 0 : index
      %c0_17 = arith.constant 0 : index
      %27 = vector.load %arg6[%c0_16, %c0_17] : memref<256x128xf32, #tpu.memory_space<vmem>>, vector<256x128xf32>
      tpu.vector_store %arg6[%c0_16, %c0_17], %26 {strides = array<i32>} : memref<256x128xf32, #tpu.memory_space<vmem>>, vector<256x128xf32>,
    } else {
    }
    %c0 = arith.constant 0 : index
    %c0_1 = arith.constant 0 : index
    %3 = vector.load %arg2[%c0, %c0_1] : memref<256x128xf32, #tpu.memory_space<vmem>>, vector<256x128xf32>
    %4 = arith.truncf %3 : vector<256x128xf32> to vector<256x128xbf16>
    %c0_2 = arith.constant 0 : index
    %c0_3 = arith.constant 0 : index
    %c0_4 = arith.constant 0 : index
    %5 = vector.load %arg3[%c0_2, %c0_3, %c0_4] : memref<1x128x1024xbf16, #tpu.memory_space<vmem>>, vector<1x128x1024xbf16>
    %6 = vector.shape_cast %5 : vector<1x128x1024xbf16> to vector<128x1024xbf16>
    %cst = arith.constant dense<0.000000e+00> : vector<256x1024xf32>
    %7 = tpu.matmul %4, %6, %cst {dimension_numbers = #tpu.dot_dimension_numbers<[1], [0], [0], [1], [0, 0, 1, 1], [], []>} : vector<256x128xbf16>, vector<128x1024xbf16>, vector<256x1024xf32> -> vector<256x1024xf32>
    %8 = vector.extract_strided_slice %7 {offsets = [0, 0], sizes = [256, 512], strides = [1, 1]} : vector<256x1024xf32> to vector<256x512xf32>
    %9 = vector.extract_strided_slice %7 {offsets = [0, 512], sizes = [256, 512], strides = [1, 1]} : vector<256x1024xf32> to vector<256x512xf32>
    %10 = arith.negf %8 : vector<256x512xf32>
    %11 = math.exp %10 : vector<256x512xf32>
    %cst_5 = arith.constant 1.000000e+00 : f32
    %12 = vector.broadcast %cst_5 : f32 to vector<256x512xf32>
    %13 = arith.addf %12, %11 : vector<256x512xf32>
    %14 = arith.divf %12, %13 : vector<256x512xf32>
    %15 = arith.mulf %8, %14 : vector<256x512xf32>
    %16 = arith.mulf %15, %9 : vector<256x512xf32>
    %c0_6 = arith.constant 0 : index
    %c0_7 = arith.constant 0 : index
    %17 = vector.load %arg6[%c0_6, %c0_7] : memref<256x128xf32, #tpu.memory_space<vmem>>, vector<256x128xf32>
    %18 = arith.truncf %16 : vector<256x512xf32> to vector<256x512xbf16>
    %c0_8 = arith.constant 0 : index
    %c0_9 = arith.constant 0 : index
    %19 = vector.load %arg4[%c0_8, %c0_9] : memref<512x128xbf16, #tpu.memory_space<vmem>>, vector<512x128xbf16>
    %cst_10 = arith.constant dense<0.000000e+00> : vector<256x128xf32>
    %20 = tpu.matmul %18, %19, %cst_10 {dimension_numbers = #tpu.dot_dimension_numbers<[1], [0], [0], [1], [0, 0, 1, 1], [], []>} : vector<256x512xbf16>, vector<512x128xbf16>, vector<256x128xf32> -> vector<256x128xf32>
    %21 = arith.addf %17, %20 : vector<256x128xf32>
    %c0_11 = arith.constant 0 : index
    %c0_12 = arith.constant 0 : index
    %22 = vector.load %arg6[%c0_11, %c0_12] : memref<256x128xf32, #tpu.memory_space<vmem>>, vector<256x128xf32>
    tpu.vector_store %arg6[%c0_11, %c0_12], %21 {strides = array<i32>} : memref<256x128xf32, #tpu.memory_space<vmem>>, vector<256x128xf32>,
    %c0_i32_13 = arith.constant 0 : i32
    %23 = arith.cmpi eq, %arg1, %c0_i32_13 : i32
    %24 = arith.extui %23 : i1 to i32
    %c0_i32_14 = arith.constant 0 : i32
    %25 = arith.cmpi ne, %24, %c0_i32_14 : i32
    scf.if %25 {
      %c0_15 = arith.constant 0 : index
      %c0_16 = arith.constant 0 : index
      %26 = vector.load %arg6[%c0_15, %c0_16] : memref<256x128xf32, #tpu.memory_space<vmem>>, vector<256x128xf32>
      %c0_17 = arith.constant 0 : index
      %c0_18 = arith.constant 0 : index
      %27 = vector.load %arg5[%c0_17, %c0_18] : memref<256x128xf32, #tpu.memory_space<vmem>>, vector<256x128xf32>
      tpu.vector_store %arg5[%c0_17, %c0_18], %26 {strides = array<i32>} : memref<256x128xf32, #tpu.memory_space<vmem>>, vector<256x128xf32>,
    } else {
    }
    return
  }
  func.func @transform_0(%arg0: i32, %arg1: i32) -> (i32, i32) {
    %c0_i32 = arith.constant 0 : i32
    %c0_i32_0 = arith.constant 0 : i32
    return %arg0, %c0_i32 : i32, i32
  }
  func.func @transform_1(%arg0: i32, %arg1: i32) -> (i32, i32, i32) {
    %c0_i32 = arith.constant 0 : i32
    %c0_i32_0 = arith.constant 0 : i32
    %c0_i32_1 = arith.constant 0 : i32
    return %arg1, %c0_i32, %c0_i32_0 : i32, i32, i32
  }
  func.func @transform_2(%arg0: i32, %arg1: i32) -> (i32, i32) {
    %c0_i32 = arith.constant 0 : i32
    %c0_i32_0 = arith.constant 0 : i32
    return %arg1, %c0_i32 : i32, i32
  }
  func.func @transform_3(%arg0: i32, %arg1: i32) -> (i32, i32) {
    %c0_i32 = arith.constant 0 : i32
    %c0_i32_0 = arith.constant 0 : i32
    return %arg0, %c0_i32 : i32, i32
  }
}

</mosaic_0001>

<llo_original>
// kernel: tpu_custom_call.1
$region0: #{tpu_custom_call.1}
  #allocation0 [shape = 'u32[]', space=smem, size = 0x4, offset = 0x4, fixed_abs, tag = 'smem constant byte address 0x4 - core index']
  #allocation1 [shape = 'u32[144,128]{1,0:T(1,128)}', space=vmem, size = 0x12000, scoped, tag = 'internal scratch']
  #allocation2 [shape = 'f32[256,128]{1,0:T(8,128)}', space=vmem, size = 0x20000, scoped, tag = 'scratch operand']
  %s0 = inlined_call_operand.hbm [shape: f32[512,128], index: 0, kind: input, shape index: {}]
  %s1 = inlined_call_operand.hbm [shape: bf16[1,128,1024], index: 1, kind: input, shape index: {}]
  %s2 = inlined_call_operand.hbm [shape: bf16[512,128], index: 2, kind: input, shape index: {}]
  %s3 = inlined_call_operand.hbm [shape: f32[512,128], index: 3, kind: output, shape index: {}]
  %s4 = sld [smem:[#allocation0]]
  $region65: #{tpu_custom_call.1} parent=0
    _
  %s6 = ssub.s32 1, %s4
  %s7 = scalar_select 0, %s6, %s4
  $region1: #{tpu_custom_call.1} parent=0
    #allocation3 [shape = 'u8[262144]{0}', space=vmem, size = 0x40000, scoped, tag = 'input window, operand 0']
    #allocation4 [shape = 's32[2]{0}', space=sflag, size = 0x8, scoped, tag = 'scoped memory for tpu_custom_call.1']
    #allocation5 [shape = 's32[2]{0}', space=sflag, size = 0x8, scoped, tag = 'scoped memory for tpu_custom_call.1']
    #allocation6 [shape = 'u8[262144]{0}', space=vmem, size = 0x40000, scoped, tag = 'input window, operand 1, single buffered']
    #allocation7 [shape = 's32[1]{0}', space=sflag, size = 0x4, scoped, tag = 'scoped memory for tpu_custom_call.1']
    #allocation8 [shape = 'u8[131072]{0}', space=vmem, size = 0x20000, scoped, tag = 'input window, operand 2, single buffered']
    #allocation9 [shape = 'u8[262144]{0}', space=vmem, size = 0x40000, scoped, tag = 'output window, operand 0']
    %8 = vsyncpa [#allocation4], 0
    %s9 = scalar_lea.sflag [#allocation4], 1
    %10 = vsyncpa %s9, 0
    %11 = vsyncpa [#allocation7], 0
    %12 = vsyncpa [#allocation5], 0
    %s13 = scalar_lea.sflag [#allocation5], 1
    %14 = vsyncpa %s13, 0
    loop: start=0, step=1, limit=4
    $region2: #{tpu_custom_call.1} parent=1 // loop_pre_header
      _
    $region3: #{tpu_custom_call.1} parent=1 // loop_header
      %s16 = sphi 0, %s20
      %p17 = scmp.ge.s32.totalorder %s16, 4
      %s23 = sphi 0, %s35
      %s24 = sphi 0, %s31
      %s25 = sphi 0, %s23
      %s26 = sphi 0, %s24
      %s27 = sphi 0, %s25
      %s28 = sphi 0, %s26
      %s38 = sphi 0, %s40
      %s41 = sphi 0, %s38
      %s42 = sphi 0, %s41
      %s58 = sphi 0, %s42
      %s64 = sphi 0, %s66
      %s67 = sphi 0, %s64
      %s68 = sphi 0, %s67
      %s84 = sphi 0, %s68
      %s90 = sphi 0, %s92
      %s93 = sphi 0, %s90
      %s94 = sphi 0, %s93
      %s110 = sphi 0, %s94
      %s116 = sphi 0, %s118
      %s119 = sphi 0, %s116
      %s120 = sphi 0, %s119
      %s136 = sphi 0, %s120
    $region4: #{tpu_custom_call.1} parent=1 // loop_header_branch
      %19 = sbr.rel (%p17) target = $region8
    $region5: #{tpu_custom_call.1} parent=1 // loop_body
      %s21 = ssub.s32 %s16, 1
      %s22 = ssub.s32 %s16, 2
      %s29 = sadd.s32 1, %s24
      %p30 = scmp.ge.s32.totalorder %s29, 1
      %s31 = scalar_select %p30, 0, %s29
      %s32 = sadd.s32 1, %s23
      %s33 = scalar_select %p30, %s32, %s23
      %p34 = scmp.ge.s32.totalorder %s33, 2
      %s35 = scalar_select %p34, 0, %s33
      %s36 = ssub.s32 %s23, %s35
      %p37 = scmp.eq.s32.totalorder %s36, 0
      %s39 = sadd.s32 %s38, 1
      %s40 = scalar_select %p37, %s38, %s39
      %p43 = pneg %p37
      %p44 = scmp.eq.s32.totalorder %s16, 1
      %p45 = por %p43, %p44
      %p46 = scmp.ne.s32.totalorder %s38, %s41
      %p47 = scmp.eq.s32.totalorder %s16, 0
      %p48 = por %p46, %p47
      %p49 = scmp.ne.s32.totalorder %s38, %s41
      %p50 = scmp.eq.s32.totalorder %s21, 1
      %p51 = por %p49, %p50
      %p52 = scmp.ne.s32.totalorder %s41, %s42
      %p53 = scmp.eq.s32.totalorder %s21, 0
      %p54 = por %p52, %p53
      %p55 = scmp.ne.s32.totalorder %s41, %s42
      %p56 = scmp.eq.s32.totalorder %s22, 1
      %p57 = por %p55, %p56
      %p59 = scmp.ne.s32.totalorder %s42, %s58
      %p60 = scmp.eq.s32.totalorder %s22, 0
      %p61 = por %p59, %p60
      %s62 = ssub.s32 %s24, %s31
      %p63 = scmp.eq.s32.totalorder %s62, 0
      %s65 = sadd.s32 %s64, 1
      %s66 = scalar_select %p63, %s64, %s65
      %p69 = pneg %p63
      %p70 = scmp.eq.s32.totalorder %s16, 1
      %p71 = por %p69, %p70
      %p72 = scmp.ne.s32.totalorder %s64, %s67
      %p73 = scmp.eq.s32.totalorder %s16, 0
      %p74 = por %p72, %p73
      %p75 = scmp.ne.s32.totalorder %s64, %s67
      %p76 = scmp.eq.s32.totalorder %s21, 1
      %p77 = por %p75, %p76
      %p78 = scmp.ne.s32.totalorder %s67, %s68
      %p79 = scmp.eq.s32.totalorder %s21, 0
      %p80 = por %p78, %p79
      %p81 = scmp.ne.s32.totalorder %s67, %s68
      %p82 = scmp.eq.s32.totalorder %s22, 1
      %p83 = por %p81, %p82
      %p85 = scmp.ne.s32.totalorder %s68, %s84
      %p86 = scmp.eq.s32.totalorder %s22, 0
      %p87 = por %p85, %p86
      %s88 = ssub.s32 %s24, %s31
      %p89 = scmp.eq.s32.totalorder %s88, 0
      %s91 = sadd.s32 %s90, 1
      %s92 = scalar_select %p89, %s90, %s91
      %p95 = pneg %p89
      %p96 = scmp.eq.s32.totalorder %s16, 1
      %p97 = por %p95, %p96
      %p98 = scmp.ne.s32.totalorder %s90, %s93
      %p99 = scmp.eq.s32.totalorder %s16, 0
      %p100 = por %p98, %p99
      %p101 = scmp.ne.s32.totalorder %s90, %s93
      %p102 = scmp.eq.s32.totalorder %s21, 1
      %p103 = por %p101, %p102
      %p104 = scmp.ne.s32.totalorder %s93, %s94
      %p105 = scmp.eq.s32.totalorder %s21, 0
      %p106 = por %p104, %p105
      %p107 = scmp.ne.s32.totalorder %s93, %s94
      %p108 = scmp.eq.s32.totalorder %s22, 1
      %p109 = por %p107, %p108
      %p111 = scmp.ne.s32.totalorder %s94, %s110
      %p112 = scmp.eq.s32.totalorder %s22, 0
      %p113 = por %p111, %p112
      %s114 = ssub.s32 %s23, %s35
      %p115 = scmp.eq.s32.totalorder %s114, 0
      %s117 = sadd.s32 %s116, 1
      %s118 = scalar_select %p115, %s116, %s117
      %p121 = pneg %p115
      %p122 = scmp.eq.s32.totalorder %s16, 1
      %p123 = por %p121, %p122
      %p124 = scmp.ne.s32.totalorder %s116, %s119
      %p125 = scmp.eq.s32.totalorder %s16, 0
      %p126 = por %p124, %p125
      %p127 = scmp.ne.s32.totalorder %s116, %s119
      %p128 = scmp.eq.s32.totalorder %s21, 1
      %p129 = por %p127, %p128
      %p130 = scmp.ne.s32.totalorder %s119, %s120
      %p131 = scmp.eq.s32.totalorder %s21, 0
      %p132 = por %p130, %p131
      %p133 = scmp.ne.s32.totalorder %s119, %s120
      %p134 = scmp.eq.s32.totalorder %s22, 1
      %p135 = por %p133, %p134
      %p137 = scmp.ne.s32.totalorder %s120, %s136
      %p138 = scmp.eq.s32.totalorder %s22, 0
      %p139 = por %p137, %p138
      %p140 = scmp.le.s32.totalorder 1, %s16
      %p141 = scmp.lt.s32.totalorder %s16, 3
      %p142 = pnand %p140, %p141
      %p143 = pneg %p142
      // Predicated region
      $region9: #{tpu_custom_call.1} parent=5 // pred_check
        _
      $region10: #{tpu_custom_call.1} parent=5 // pred_check_branch
        %145 = sbr.rel (%p142) target = $region12
      $region11: #{tpu_custom_call.1} parent=5 // pred_region
        %s146 = ssub.s32 %s16, 1
        // Predicated region
        $region13: #{tpu_custom_call.1} parent=11 // pred_check
          %p147 = pneg %p80
        $region14: #{tpu_custom_call.1} parent=11 // pred_check_branch
          %149 = sbr.rel (%p147) target = $region16
        $region15: #{tpu_custom_call.1} parent=11 // pred_region
          %s151 = ssub.s32 8192, 8192
          %152 = vsyncadd [#allocation7], %s151
          %s153 = smul.addr %s26, 128
          %s154 = smul.addr %s153, 64
          %s155 = scalar_lea.hbm %s1, %s154
          %s156 = sshll.u32 [#allocation6], 4
          %s157 = int_to_ptr.vmem [resolvable:$true] %s156
          %162 = dma.hbm_to_vmem [thread:$0]  %s155, 8192, %s157, [#allocation7], 512, 512, 32
        $region16: #{tpu_custom_call.1} parent=11 // pred_fallthru
          _
        // Predicated region
        $region17: #{tpu_custom_call.1} parent=11 // pred_check
          %p163 = pneg %p106
        $region18: #{tpu_custom_call.1} parent=11 // pred_check_branch
          %165 = sbr.rel (%p163) target = $region20
        $region19: #{tpu_custom_call.1} parent=11 // pred_region
          %s166 = smul.u32 64, %s26
          %s168 = ssub.s32 4096, 4096
          %169 = vsyncadd [#allocation7], %s168
          %s170 = smul.addr %s166, 64
          %s171 = scalar_lea.hbm %s2, %s170
          %s172 = sshll.u32 [#allocation8], 4
          %s173 = int_to_ptr.vmem [resolvable:$true] %s172
          %178 = dma.hbm_to_vmem [thread:$0]  %s171, 4096, %s173, [#allocation7], 64, 64, 4
        $region20: #{tpu_custom_call.1} parent=11 // pred_fallthru
          _
      $region12: #{tpu_custom_call.1} parent=5 // pred_fallthru
        _
      %p179 = scmp.lt.s32.totalorder %s16, 2
      // Predicated region
      $region21: #{tpu_custom_call.1} parent=5 // pred_check
        %p180 = pneg %p179
      $region22: #{tpu_custom_call.1} parent=5 // pred_check_branch
        %182 = sbr.rel (%p180) target = $region24
      $region23: #{tpu_custom_call.1} parent=5 // pred_region
        // Predicated region
        $region25: #{tpu_custom_call.1} parent=23 // pred_check
          %p183 = pneg %p48
        $region26: #{tpu_custom_call.1} parent=23 // pred_check_branch
          %185 = sbr.rel (%p183) target = $region28
        $region27: #{tpu_custom_call.1} parent=23 // pred_region
          %s186 = sand.u32 %s38, 1
          %s187 = scalar_lea.sflag [#allocation4], %s186
          %s188 = sand.u32 %s38, 1
          %s189 = smul.addr %s188, 256
          %s190 = scalar_lea.vmem [#allocation3], %s189
          %s191 = smul.u32 32, %s23
          %s193 = ssub.s32 4096, 4096
          %194 = vsyncadd %s187, %s193
          %s195 = smul.addr %s191, 128
          %s196 = scalar_lea.hbm %s0, %s195
          %s197 = sshll.u32 %s190, 4
          %s198 = int_to_ptr.vmem [resolvable:$true] %s197
          %203 = dma.hbm_to_vmem [thread:$0]  %s196, 4096, %s198, %s187, 128, 128, 8
        $region28: #{tpu_custom_call.1} parent=23 // pred_fallthru
          _
      $region24: #{tpu_custom_call.1} parent=5 // pred_fallthru
        _
      %p204 = scmp.le.s32.totalorder 1, %s16
      %p205 = scmp.lt.s32.totalorder %s16, 3
      %p206 = pnand %p204, %p205
      %p207 = pneg %p206
      // Predicated region
      $region29: #{tpu_custom_call.1} parent=5 // pred_check
        _
      $region30: #{tpu_custom_call.1} parent=5 // pred_check_branch
        %209 = sbr.rel (%p206) target = $region32
      $region31: #{tpu_custom_call.1} parent=5 // pred_region
        %s210 = ssub.s32 %s16, 1
        %s211 = sand.u32 %s41, 1
        %s212 = scalar_lea.sflag [#allocation4], %s211
        %s213 = sand.u32 %s41, 1
        %s214 = smul.addr %s213, 256
        %s215 = scalar_lea.vmem [#allocation3], %s214
        // Predicated region
        $region33: #{tpu_custom_call.1} parent=31 // pred_check
          %p216 = pneg %p54
        $region34: #{tpu_custom_call.1} parent=31 // pred_check_branch
          %218 = sbr.rel (%p216) target = $region36
        $region35: #{tpu_custom_call.1} parent=31 // pred_region
          %219 = dma.done %s212, 4096
        $region36: #{tpu_custom_call.1} parent=31 // pred_fallthru
          _
        // Predicated region
        $region37: #{tpu_custom_call.1} parent=31 // pred_check
          %p220 = pneg %p80
        $region38: #{tpu_custom_call.1} parent=31 // pred_check_branch
          %222 = sbr.rel (%p220) target = $region40
        $region39: #{tpu_custom_call.1} parent=31 // pred_region
          %223 = dma.done [#allocation7], 8192
        $region40: #{tpu_custom_call.1} parent=31 // pred_fallthru
          _
        // Predicated region
        $region41: #{tpu_custom_call.1} parent=31 // pred_check
          %p224 = pneg %p106
        $region42: #{tpu_custom_call.1} parent=31 // pred_check_branch
          %226 = sbr.rel (%p224) target = $region44
        $region43: #{tpu_custom_call.1} parent=31 // pred_region
          %227 = dma.done [#allocation7], 4096
        $region44: #{tpu_custom_call.1} parent=31 // pred_fallthru
          _
        %s228 = sand.u32 %s41, 1
        %s229 = scalar_lea.sflag [#allocation4], %s228
        %s230 = sand.u32 %s41, 1
        %s231 = smul.addr %s230, 256
        %s232 = scalar_lea.vmem [#allocation3], %s231
        %p233 = pneg %p54
        %p234 = pneg %p51
        %p235 = pneg %p80
        %p236 = pneg %p77
        %p237 = pneg %p106
        %p238 = pneg %p103
        %p239 = pneg %p132
        %p240 = pneg %p129
        %s241 = sand.u32 %s119, 1
        %s242 = scalar_lea.sflag [#allocation5], %s241
        %s243 = sand.u32 %s119, 1
        %s244 = smul.addr %s243, 256
        %s245 = scalar_lea.vmem [#allocation9], %s244
        %s246 = smul.u32 32, %s25
        %s247 = smul.u32 64, %s26
        %s248 = smul.u32 32, %s25
        %p250 = scmp.eq.s32.totalorder %s26, 0
        // Predicated region
        $region45: #{tpu_custom_call.1} parent=31 // pred_check
          %p251 = pneg %p250
        $region46: #{tpu_custom_call.1} parent=31 // pred_check_branch
          %253 = sbr.rel (%p251) target = $region48
        $region47: #{tpu_custom_call.1} parent=31 // pred_region
          %254 = vst [vmem:[#allocation2] sm:$0xff] 0.0
          %255 = vst [vmem:[#allocation2 + $0x8] sm:$0xff] 0.0
          %256 = vst [vmem:[#allocation2 + $0x10] sm:$0xff] 0.0
          %257 = vst [vmem:[#allocation2 + $0x18] sm:$0xff] 0.0
          %258 = vst [vmem:[#allocation2 + $0x20] sm:$0xff] 0.0
          %259 = vst [vmem:[#allocation2 + $0x28] sm:$0xff] 0.0
          %260 = vst [vmem:[#allocation2 + $0x30] sm:$0xff] 0.0
          %261 = vst [vmem:[#allocation2 + $0x38] sm:$0xff] 0.0
          %262 = vst [vmem:[#allocation2 + $0x40] sm:$0xff] 0.0
          %263 = vst [vmem:[#allocation2 + $0x48] sm:$0xff] 0.0
          %264 = vst [vmem:[#allocation2 + $0x50] sm:$0xff] 0.0
          %265 = vst [vmem:[#allocation2 + $0x58] sm:$0xff] 0.0
          %266 = vst [vmem:[#allocation2 + $0x60] sm:$0xff] 0.0
          %267 = vst [vmem:[#allocation2 + $0x68] sm:$0xff] 0.0
          %268 = vst [vmem:[#allocation2 + $0x70] sm:$0xff] 0.0
          %269 = vst [vmem:[#allocation2 + $0x78] sm:$0xff] 0.0
          %270 = vst [vmem:[#allocation2 + $0x80] sm:$0xff] 0.0
          %271 = vst [vmem:[#allocation2 + $0x88] sm:$0xff] 0.0
          %272 = vst [vmem:[#allocation2 + $0x90] sm:$0xff] 0.0
          %273 = vst [vmem:[#allocation2 + $0x98] sm:$0xff] 0.0
          %274 = vst [vmem:[#allocation2 + $0xa0] sm:$0xff] 0.0
          %275 = vst [vmem:[#allocation2 + $0xa8] sm:$0xff] 0.0
          %276 = vst [vmem:[#allocation2 + $0xb0] sm:$0xff] 0.0
          %277 = vst [vmem:[#allocation2 + $0xb8] sm:$0xff] 0.0
          %278 = vst [vmem:[#allocation2 + $0xc0] sm:$0xff] 0.0
          %279 = vst [vmem:[#allocation2 + $0xc8] sm:$0xff] 0.0
          %280 = vst [vmem:[#allocation2 + $0xd0] sm:$0xff] 0.0
          %281 = vst [vmem:[#allocation2 + $0xd8] sm:$0xff] 0.0
          %282 = vst [vmem:[#allocation2 + $0xe0] sm:$0xff] 0.0
          %283 = vst [vmem:[#allocation2 + $0xe8] sm:$0xff] 0.0
          %284 = vst [vmem:[#allocation2 + $0xf0] sm:$0xff] 0.0
          %285 = vst [vmem:[#allocation2 + $0xf8] sm:$0xff] 0.0
        $region48: #{tpu_custom_call.1} parent=31 // pred_fallthru
          _
        %v286 = vld [vmem:[%s215] sm:$0xff]
        %v287 = vld [vmem:[%s215 + $0x8] sm:$0xff]
        %v288 = vld [vmem:[%s215 + $0x10] sm:$0xff]
        %v289 = vld [vmem:[%s215 + $0x18] sm:$0xff]
        %v290 = vld [vmem:[%s215 + $0x20] sm:$0xff]
        %v291 = vld [vmem:[%s215 + $0x28] sm:$0xff]
        %v292 = vld [vmem:[%s215 + $0x30] sm:$0xff]
        %v293 = vld [vmem:[%s215 + $0x38] sm:$0xff]
        %v294 = vld [vmem:[%s215 + $0x40] sm:$0xff]
        %v295 = vld [vmem:[%s215 + $0x48] sm:$0xff]
        %v296 = vld [vmem:[%s215 + $0x50] sm:$0xff]
        %v297 = vld [vmem:[%s215 + $0x58] sm:$0xff]
        %v298 = vld [vmem:[%s215 + $0x60] sm:$0xff]
        %v299 = vld [vmem:[%s215 + $0x68] sm:$0xff]
        %v300 = vld [vmem:[%s215 + $0x70] sm:$0xff]
        %v301 = vld [vmem:[%s215 + $0x78] sm:$0xff]
        %v302 = vld [vmem:[%s215 + $0x80] sm:$0xff]
        %v303 = vld [vmem:[%s215 + $0x88] sm:$0xff]
        %v304 = vld [vmem:[%s215 + $0x90] sm:$0xff]
        %v305 = vld [vmem:[%s215 + $0x98] sm:$0xff]
        %v306 = vld [vmem:[%s215 + $0xa0] sm:$0xff]
        %v307 = vld [vmem:[%s215 + $0xa8] sm:$0xff]
        %v308 = vld [vmem:[%s215 + $0xb0] sm:$0xff]
        %v309 = vld [vmem:[%s215 + $0xb8] sm:$0xff]
        %v310 = vld [vmem:[%s215 + $0xc0] sm:$0xff]
        %v311 = vld [vmem:[%s215 + $0xc8] sm:$0xff]
        %v312 = vld [vmem:[%s215 + $0xd0] sm:$0xff]
        %v313 = vld [vmem:[%s215 + $0xd8] sm:$0xff]
        %v314 = vld [vmem:[%s215 + $0xe0] sm:$0xff]
        %v315 = vld [vmem:[%s215 + $0xe8] sm:$0xff]
        %v316 = vld [vmem:[%s215 + $0xf0] sm:$0xff]
        %v317 = vld [vmem:[%s215 + $0xf8] sm:$0xff]
        %v318 = vpack.c.bf16 %v287, %v286
        %v319 = vpack.c.bf16 %v289, %v288
        %v320 = vpack.c.bf16 %v291, %v290
        %v321 = vpack.c.bf16 %v293, %v292
        %v322 = vpack.c.bf16 %v295, %v294
        %v323 = vpack.c.bf16 %v297, %v296
        %v324 = vpack.c.bf16 %v299, %v298
        %v325 = vpack.c.bf16 %v301, %v300
        %v326 = vpack.c.bf16 %v303, %v302
        %v327 = vpack.c.bf16 %v305, %v304
        %v328 = vpack.c.bf16 %v307, %v306
        %v329 = vpack.c.bf16 %v309, %v308
        %v330 = vpack.c.bf16 %v311, %v310
        %v331 = vpack.c.bf16 %v313, %v312
        %v332 = vpack.c.bf16 %v315, %v314
        %v333 = vpack.c.bf16 %v317, %v316
        %v334 = vld [vmem:[#allocation6] sm:$0xff]
        %v335 = vld [vmem:[#allocation6 + $0x8] sm:$0xff]
        %v336 = vld [vmem:[#allocation6 + $0x10] sm:$0xff]
        %v337 = vld [vmem:[#allocation6 + $0x18] sm:$0xff]
        %v338 = vld [vmem:[#allocation6 + $0x20] sm:$0xff]
        %v339 = vld [vmem:[#allocation6 + $0x28] sm:$0xff]
        %v340 = vld [vmem:[#allocation6 + $0x30] sm:$0xff]
        %v341 = vld [vmem:[#allocation6 + $0x38] sm:$0xff]
        %v342 = vld [vmem:[#allocation6 + $0x40] sm:$0xff]
        %v343 = vld [vmem:[#allocation6 + $0x48] sm:$0xff]
        %v344 = vld [vmem:[#allocation6 + $0x50] sm:$0xff]
        %v345 = vld [vmem:[#allocation6 + $0x58] sm:$0xff]
        %v346 = vld [vmem:[#allocation6 + $0x60] sm:$0xff]
        %v347 = vld [vmem:[#allocation6 + $0x68] sm:$0xff]
        %v348 = vld [vmem:[#allocation6 + $0x70] sm:$0xff]
        %v349 = vld [vmem:[#allocation6 + $0x78] sm:$0xff]
        %v350 = vld [vmem:[#allocation6 + $0x80] sm:$0xff]
        %v351 = vld [vmem:[#allocation6 + $0x88] sm:$0xff]
        %v352 = vld [vmem:[#allocation6 + $0x90] sm:$0xff]
        %v353 = vld [vmem:[#allocation6 + $0x98] sm:$0xff]
        %v354 = vld [vmem:[#allocation6 + $0xa0] sm:$0xff]
        %v355 = vld [vmem:[#allocation6 + $0xa8] sm:$0xff]
        %v356 = vld [vmem:[#allocation6 + $0xb0] sm:$0xff]
        %v357 = vld [vmem:[#allocation6 + $0xb8] sm:$0xff]
        %v358 = vld [vmem:[#allocation6 + $0xc0] sm:$0xff]
        %v359 = vld [vmem:[#allocation6 + $0xc8] sm:$0xff]
        %v360 = vld [vmem:[#allocation6 + $0xd0] sm:$0xff]
        %v361 = vld [vmem:[#allocation6 + $0xd8] sm:$0xff]
        %v362 = vld [vmem:[#allocation6 + $0xe0] sm:$0xff]
        %v363 = vld [vmem:[#allocation6 + $0xe8] sm:$0xff]
        %v364 = vld [vmem:[#allocation6 + $0xf0] sm:$0xff]
        %v365 = vld [vmem:[#allocation6 + $0xf8] sm:$0xff]
        %v366 = vld [vmem:[#allocation6 + $0x100] sm:$0xff]
        %v367 = vld [vmem:[#allocation6 + $0x108] sm:$0xff]
        %v368 = vld [vmem:[#allocation6 + $0x110] sm:$0xff]
        %v369 = vld [vmem:[#allocation6 + $0x118] sm:$0xff]
        %v370 = vld [vmem:[#allocation6 + $0x120] sm:$0xff]
        %v371 = vld [vmem:[#allocation6 + $0x128] sm:$0xff]
        %v372 = vld [vmem:[#allocation6 + $0x130] sm:$0xff]
        %v373 = vld [vmem:[#allocation6 + $0x138] sm:$0xff]
        %v374 = vld [vmem:[#allocation6 + $0x140] sm:$0xff]
        %v375 = vld [vmem:[#allocation6 + $0x148] sm:$0xff]
        %v376 = vld [vmem:[#allocation6 + $0x150] sm:$0xff]
        %v377 = vld [vmem:[#allocation6 + $0x158] sm:$0xff]
        %v378 = vld [vmem:[#allocation6 + $0x160] sm:$0xff]
        %v379 = vld [vmem:[#allocation6 + $0x168] sm:$0xff]
        %v380 = vld [vmem:[#allocation6 + $0x170] sm:$0xff]
        %v381 = vld [vmem:[#allocation6 + $0x178] sm:$0xff]
        %v382 = vld [vmem:[#allocation6 + $0x180] sm:$0xff]
        %v383 = vld [vmem:[#allocation6 + $0x188] sm:$0xff]
        %v384 = vld [vmem:[#allocation6 + $0x190] sm:$0xff]
        %v385 = vld [vmem:[#allocation6 + $0x198] sm:$0xff]
        %v386 = vld [vmem:[#allocation6 + $0x1a0] sm:$0xff]
        %v387 = vld [vmem:[#allocation6 + $0x1a8] sm:$0xff]
        %v388 = vld [vmem:[#allocation6 + $0x1b0] sm:$0xff]
        %v389 = vld [vmem:[#allocation6 + $0x1b8] sm:$0xff]
        %v390 = vld [vmem:[#allocation6 + $0x1c0] sm:$0xff]
        %v391 = vld [vmem:[#allocation6 + $0x1c8] sm:$0xff]
        %v392 = vld [vmem:[#allocation6 + $0x1d0] sm:$0xff]
        %v393 = vld [vmem:[#allocation6 + $0x1d8] sm:$0xff]
        %v394 = vld [vmem:[#allocation6 + $0x1e0] sm:$0xff]
        %v395 = vld [vmem:[#allocation6 + $0x1e8] sm:$0xff]
        %v396 = vld [vmem:[#allocation6 + $0x1f0] sm:$0xff]
        %v397 = vld [vmem:[#allocation6 + $0x1f8] sm:$0xff]
        %v462 = vunpack.c.l.b16 %v334
        %v463 = vunpack.c.h.b16 %v334
        %v464 = vunpack.c.l.b16 %v335
        %v465 = vunpack.c.h.b16 %v335
        %v466 = vunpack.c.l.b16 %v336
        %v467 = vunpack.c.h.b16 %v336
        %v468 = vunpack.c.l.b16 %v337
        %v469 = vunpack.c.h.b16 %v337
        %v470 = vunpack.c.l.b16 %v338
        %v471 = vunpack.c.h.b16 %v338
        %v472 = vunpack.c.l.b16 %v339
        %v473 = vunpack.c.h.b16 %v339
        %v474 = vunpack.c.l.b16 %v340
        %v475 = vunpack.c.h.b16 %v340
        %v476 = vunpack.c.l.b16 %v341
        %v477 = vunpack.c.h.b16 %v341
        %v478 = vunpack.c.l.b16 %v342
        %v479 = vunpack.c.h.b16 %v342
        %v480 = vunpack.c.l.b16 %v343
        %v481 = vunpack.c.h.b16 %v343
        %v482 = vunpack.c.l.b16 %v344
        %v483 = vunpack.c.h.b16 %v344
        %v484 = vunpack.c.l.b16 %v345
        %v485 = vunpack.c.h.b16 %v345
        %v486 = vunpack.c.l.b16 %v346
        %v487 = vunpack.c.h.b16 %v346
        %v488 = vunpack.c.l.b16 %v347
        %v489 = vunpack.c.h.b16 %v347
        %v490 = vunpack.c.l.b16 %v348
        %v491 = vunpack.c.h.b16 %v348
        %v492 = vunpack.c.l.b16 %v349
        %v493 = vunpack.c.h.b16 %v349
        %v494 = vunpack.c.l.b16 %v350
        %v495 = vunpack.c.h.b16 %v350
        %v496 = vunpack.c.l.b16 %v351
        %v497 = vunpack.c.h.b16 %v351
        %v498 = vunpack.c.l.b16 %v352
        %v499 = vunpack.c.h.b16 %v352
        %v500 = vunpack.c.l.b16 %v353
        %v501 = vunpack.c.h.b16 %v353
        %v502 = vunpack.c.l.b16 %v354
        %v503 = vunpack.c.h.b16 %v354
        %v504 = vunpack.c.l.b16 %v355
        %v505 = vunpack.c.h.b16 %v355
        %v506 = vunpack.c.l.b16 %v356
        %v507 = vunpack.c.h.b16 %v356
        %v508 = vunpack.c.l.b16 %v357
        %v509 = vunpack.c.h.b16 %v357
        %v510 = vunpack.c.l.b16 %v358
        %v511 = vunpack.c.h.b16 %v358
        %v512 = vunpack.c.l.b16 %v359
        %v513 = vunpack.c.h.b16 %v359
        %v514 = vunpack.c.l.b16 %v360
        %v515 = vunpack.c.h.b16 %v360
        %v516 = vunpack.c.l.b16 %v361
        %v517 = vunpack.c.h.b16 %v361
        %v518 = vunpack.c.l.b16 %v362
        %v519 = vunpack.c.h.b16 %v362
        %v520 = vunpack.c.l.b16 %v363
        %v521 = vunpack.c.h.b16 %v363
        %v522 = vunpack.c.l.b16 %v364
        %v523 = vunpack.c.h.b16 %v364
        %v524 = vunpack.c.l.b16 %v365
        %v525 = vunpack.c.h.b16 %v365
        %v526 = vunpack.c.l.b16 %v366
        %v527 = vunpack.c.h.b16 %v366
        %v528 = vunpack.c.l.b16 %v367
        %v529 = vunpack.c.h.b16 %v367
        %v530 = vunpack.c.l.b16 %v368
        %v531 = vunpack.c.h.b16 %v368
        %v532 = vunpack.c.l.b16 %v369
        %v533 = vunpack.c.h.b16 %v369
        %v534 = vunpack.c.l.b16 %v370
        %v535 = vunpack.c.h.b16 %v370
        %v536 = vunpack.c.l.b16 %v371
        %v537 = vunpack.c.h.b16 %v371
        %v538 = vunpack.c.l.b16 %v372
        %v539 = vunpack.c.h.b16 %v372
        %v540 = vunpack.c.l.b16 %v373
        %v541 = vunpack.c.h.b16 %v373
        %v542 = vunpack.c.l.b16 %v374
        %v543 = vunpack.c.h.b16 %v374
        %v544 = vunpack.c.l.b16 %v375
        %v545 = vunpack.c.h.b16 %v375
        %v546 = vunpack.c.l.b16 %v376
        %v547 = vunpack.c.h.b16 %v376
        %v548 = vunpack.c.l.b16 %v377
        %v549 = vunpack.c.h.b16 %v377
        %v550 = vunpack.c.l.b16 %v378
        %v551 = vunpack.c.h.b16 %v378
        %v552 = vunpack.c.l.b16 %v379
        %v553 = vunpack.c.h.b16 %v379
        %v554 = vunpack.c.l.b16 %v380
        %v555 = vunpack.c.h.b16 %v380
        %v556 = vunpack.c.l.b16 %v381
        %v557 = vunpack.c.h.b16 %v381
        %v558 = vunpack.c.l.b16 %v382
        %v559 = vunpack.c.h.b16 %v382
        %v560 = vunpack.c.l.b16 %v383
        %v561 = vunpack.c.h.b16 %v383
        %v562 = vunpack.c.l.b16 %v384
        %v563 = vunpack.c.h.b16 %v384
        %v564 = vunpack.c.l.b16 %v385
        %v565 = vunpack.c.h.b16 %v385
        %v566 = vunpack.c.l.b16 %v386
        %v567 = vunpack.c.h.b16 %v386
        %v568 = vunpack.c.l.b16 %v387
        %v569 = vunpack.c.h.b16 %v387
        %v570 = vunpack.c.l.b16 %v388
        %v571 = vunpack.c.h.b16 %v388
        %v572 = vunpack.c.l.b16 %v389
        %v573 = vunpack.c.h.b16 %v389
        %v574 = vunpack.c.l.b16 %v390
        %v575 = vunpack.c.h.b16 %v390
        %v576 = vunpack.c.l.b16 %v391
        %v577 = vunpack.c.h.b16 %v391
        %v578 = vunpack.c.l.b16 %v392
        %v579 = vunpack.c.h.b16 %v392
        %v580 = vunpack.c.l.b16 %v393
        %v581 = vunpack.c.h.b16 %v393
        %v582 = vunpack.c.l.b16 %v394
        %v583 = vunpack.c.h.b16 %v394
        %v584 = vunpack.c.l.b16 %v395
        %v585 = vunpack.c.h.b16 %v395
        %v586 = vunpack.c.l.b16 %v396
        %v587 = vunpack.c.h.b16 %v396
        %v588 = vunpack.c.l.b16 %v397
        %v589 = vunpack.c.h.b16 %v397
        %v590 = vpack.c.b16 %v470, %v462
        %v591 = vpack.c.b16 %v471, %v463
        %v592 = vpack.c.b16 %v472, %v464
        %v593 = vpack.c.b16 %v473, %v465
        %v594 = vpack.c.b16 %v474, %v466
        %v595 = vpack.c.b16 %v475, %v467
        %v596 = vpack.c.b16 %v476, %v468
        %v597 = vpack.c.b16 %v477, %v469
        %v598 = vpack.c.b16 %v486, %v478
        %v599 = vpack.c.b16 %v487, %v479
        %v600 = vpack.c.b16 %v488, %v480
        %v601 = vpack.c.b16 %v489, %v481
        %v602 = vpack.c.b16 %v490, %v482
        %v603 = vpack.c.b16 %v491, %v483
        %v604 = vpack.c.b16 %v492, %v484
        %v605 = vpack.c.b16 %v493, %v485
        %v606 = vpack.c.b16 %v502, %v494
        %v607 = vpack.c.b16 %v503, %v495
        %v608 = vpack.c.b16 %v504, %v496
        %v609 = vpack.c.b16 %v505, %v497
        %v610 = vpack.c.b16 %v506, %v498
        %v611 = vpack.c.b16 %v507, %v499
        %v612 = vpack.c.b16 %v508, %v500
        %v613 = vpack.c.b16 %v509, %v501
        %v614 = vpack.c.b16 %v518, %v510
        %v615 = vpack.c.b16 %v519, %v511
        %v616 = vpack.c.b16 %v520, %v512
        %v617 = vpack.c.b16 %v521, %v513
        %v618 = vpack.c.b16 %v522, %v514
        %v619 = vpack.c.b16 %v523, %v515
        %v620 = vpack.c.b16 %v524, %v516
        %v621 = vpack.c.b16 %v525, %v517
        %v622 = vpack.c.b16 %v534, %v526
        %v623 = vpack.c.b16 %v535, %v527
        %v624 = vpack.c.b16 %v536, %v528
        %v625 = vpack.c.b16 %v537, %v529
        %v626 = vpack.c.b16 %v538, %v530
        %v627 = vpack.c.b16 %v539, %v531
        %v628 = vpack.c.b16 %v540, %v532
        %v629 = vpack.c.b16 %v541, %v533
        %v630 = vpack.c.b16 %v550, %v542
        %v631 = vpack.c.b16 %v551, %v543
        %v632 = vpack.c.b16 %v552, %v544
        %v633 = vpack.c.b16 %v553, %v545
        %v634 = vpack.c.b16 %v554, %v546
        %v635 = vpack.c.b16 %v555, %v547
        %v636 = vpack.c.b16 %v556, %v548
        %v637 = vpack.c.b16 %v557, %v549
        %v638 = vpack.c.b16 %v566, %v558
        %v639 = vpack.c.b16 %v567, %v559
        %v640 = vpack.c.b16 %v568, %v560
        %v641 = vpack.c.b16 %v569, %v561
        %v642 = vpack.c.b16 %v570, %v562
        %v643 = vpack.c.b16 %v571, %v563
        %v644 = vpack.c.b16 %v572, %v564
        %v645 = vpack.c.b16 %v573, %v565
        %v646 = vpack.c.b16 %v582, %v574
        %v647 = vpack.c.b16 %v583, %v575
        %v648 = vpack.c.b16 %v584, %v576
        %v649 = vpack.c.b16 %v585, %v577
        %v650 = vpack.c.b16 %v586, %v578
        %v651 = vpack.c.b16 %v587, %v579
        %v652 = vpack.c.b16 %v588, %v580
        %v653 = vpack.c.b16 %v589, %v581
        %718 = vmatprep.subr.bf16.mxu0 %v647
        %719 = vmatpush1.bf16.msra.mxu0 %v646
        %720 = vmatprep.subr.bf16.mxu0 %v639
        %721 = vmatpush1.bf16.msra.mxu0 %v638
        %722 = vmatprep.subr.bf16.mxu0 %v631
        %723 = vmatpush1.bf16.msra.mxu0 %v630
        %724 = vmatprep.subr.bf16.mxu0 %v623
        %725 = vmatpush1.bf16.msra.mxu0 %v622
        %726 = vmatprep.subr.bf16.mxu0 %v615
        %727 = vmatpush1.bf16.msra.mxu0 %v614
        %728 = vmatprep.subr.bf16.mxu0 %v607
        %729 = vmatpush1.bf16.msra.mxu0 %v606
        %730 = vmatprep.subr.bf16.mxu0 %v599
        %731 = vmatpush1.bf16.msra.mxu0 %v598
        %732 = vmatprep.subr.bf16.mxu0 %v591
        %733 = vmatpush1.bf16.msra.mxu0 %v590
        %734 = vmatprep.subr.bf16.mxu0 0
        %735 = vmatpush2.bf16.msra.mxu0 0
        %736 = vmatprep.subr.bf16.mxu0 0
        %737 = vmatpush2.bf16.msra.mxu0 0
        %738 = vmatprep.subr.bf16.mxu0 0
        %739 = vmatpush2.bf16.msra.mxu0 0
        %740 = vmatprep.subr.bf16.mxu0 0
        %741 = vmatpush2.bf16.msra.mxu0 0
        %742 = vmatprep.subr.bf16.mxu0 0
        %743 = vmatpush2.bf16.msra.mxu0 0
        %744 = vmatprep.subr.bf16.mxu0 0
        %745 = vmatpush2.bf16.msra.mxu0 0
        %746 = vmatprep.subr.bf16.mxu0 0
        %747 = vmatpush2.bf16.msra.mxu0 0
        %748 = vmatprep.subr.bf16.mxu0 0
        %749 = vmatpush2.bf16.msra.mxu0 0
        %750 = vmatprep.mubr.bf16.mxu0 0
        %751 = vmatmul.mubr.bf16.gmra.mxu0 %v318
        %v752 = vpop.f32.mrf.mxu0
        %v753 = vadd.f32 0.0, %v752
        %v754 = vpop.f32.mrf.mxu0
        %v755 = vadd.f32 0.0, %v754
        %v756 = vpop.f32.mrf.mxu0
        %v757 = vadd.f32 0.0, %v756
        %v758 = vpop.f32.mrf.mxu0
        %v759 = vadd.f32 0.0, %v758
        %760 = vmatprep.mubr.bf16.mxu0 0
        %761 = vmatmul.mubr.bf16.gmra.mxu0 %v319
        %v762 = vpop.f32.mrf.mxu0
        %v763 = vadd.f32 0.0, %v762
        %v764 = vpop.f32.mrf.mxu0
        %v765 = vadd.f32 0.0, %v764
        %v766 = vpop.f32.mrf.mxu0
        %v767 = vadd.f32 0.0, %v766
        %v768 = vpop.f32.mrf.mxu0
        %v769 = vadd.f32 0.0, %v768
        %770 = vmatprep.mubr.bf16.mxu0 0
        %771 = vmatmul.mubr.bf16.gmra.mxu0 %v320
        %v772 = vpop.f32.mrf.mxu0
        %v773 = vadd.f32 0.0, %v772
        %v774 = vpop.f32.mrf.mxu0
        %v775 = vadd.f32 0.0, %v774
        %v776 = vpop.f32.mrf.mxu0
        %v777 = vadd.f32 0.0, %v776
        %v778 = vpop.f32.mrf.mxu0
        %v779 = vadd.f32 0.0, %v778
        %780 = vmatprep.mubr.bf16.mxu0 0
        %781 = vmatmul.mubr.bf16.gmra.mxu0 %v321
        %v782 = vpop.f32.mrf.mxu0
        %v783 = vadd.f32 0.0, %v782
        %v784 = vpop.f32.mrf.mxu0
        %v785 = vadd.f32 0.0, %v784
        %v786 = vpop.f32.mrf.mxu0
        %v787 = vadd.f32 0.0, %v786
        %v788 = vpop.f32.mrf.mxu0
        %v789 = vadd.f32 0.0, %v788
        %790 = vmatprep.mubr.bf16.mxu0 0
        %791 = vmatmul.mubr.bf16.gmra.mxu0 %v322
        %v792 = vpop.f32.mrf.mxu0
        %v793 = vadd.f32 0.0, %v792
        %v794 = vpop.f32.mrf.mxu0
        %v795 = vadd.f32 0.0, %v794
        %v796 = vpop.f32.mrf.mxu0
        %v797 = vadd.f32 0.0, %v796
        %v798 = vpop.f32.mrf.mxu0
        %v799 = vadd.f32 0.0, %v798
        %800 = vmatprep.mubr.bf16.mxu0 0
        %801 = vmatmul.mubr.bf16.gmra.mxu0 %v323
        %v802 = vpop.f32.mrf.mxu0
        %v803 = vadd.f32 0.0, %v802
        %v804 = vpop.f32.mrf.mxu0
        %v805 = vadd.f32 0.0, %v804
        %v806 = vpop.f32.mrf.mxu0
        %v807 = vadd.f32 0.0, %v806
        %v808 = vpop.f32.mrf.mxu0
        %v809 = vadd.f32 0.0, %v808
        %810 = vmatprep.mubr.bf16.mxu0 0
        %811 = vmatmul.mubr.bf16.gmra.mxu0 %v324
        %v812 = vpop.f32.mrf.mxu0
        %v813 = vadd.f32 0.0, %v812
        %v814 = vpop.f32.mrf.mxu0
        %v815 = vadd.f32 0.0, %v814
        %v816 = vpop.f32.mrf.mxu0
        %v817 = vadd.f32 0.0, %v816
        %v818 = vpop.f32.mrf.mxu0
        %v819 = vadd.f32 0.0, %v818
        %820 = vmatprep.mubr.bf16.mxu0 0
        %821 = vmatmul.mubr.bf16.gmra.mxu0 %v325
        %v822 = vpop.f32.mrf.mxu0
        %v823 = vadd.f32 0.0, %v822
        %v824 = vpop.f32.mrf.mxu0
        %v825 = vadd.f32 0.0, %v824
        %v826 = vpop.f32.mrf.mxu0
        %v827 = vadd.f32 0.0, %v826
        %v828 = vpop.f32.mrf.mxu0
        %v829 = vadd.f32 0.0, %v828
        %830 = vmatprep.mubr.bf16.mxu0 0
        %831 = vmatmul.mubr.bf16.gmra.mxu0 %v326
        %v832 = vpop.f32.mrf.mxu0
        %v833 = vadd.f32 0.0, %v832
        %v834 = vpop.f32.mrf.mxu0
        %v835 = vadd.f32 0.0, %v834
        %v836 = vpop.f32.mrf.mxu0
        %v837 = vadd.f32 0.0, %v836
        %v838 = vpop.f32.mrf.mxu0
        %v839 = vadd.f32 0.0, %v838
        %840 = vmatprep.mubr.bf16.mxu0 0
        %841 = vmatmul.mubr.bf16.gmra.mxu0 %v327
        %v842 = vpop.f32.mrf.mxu0
        %v843 = vadd.f32 0.0, %v842
        %v844 = vpop.f32.mrf.mxu0
        %v845 = vadd.f32 0.0, %v844
        %v846 = vpop.f32.mrf.mxu0
        %v847 = vadd.f32 0.0, %v846
        %v848 = vpop.f32.mrf.mxu0
        %v849 = vadd.f32 0.0, %v848
        %850 = vmatprep.mubr.bf16.mxu0 0
        %851 = vmatmul.mubr.bf16.gmra.mxu0 %v328
        %v852 = vpop.f32.mrf.mxu0
        %v853 = vadd.f32 0.0, %v852
        %v854 = vpop.f32.mrf.mxu0
        %v855 = vadd.f32 0.0, %v854
        %v856 = vpop.f32.mrf.mxu0
        %v857 = vadd.f32 0.0, %v856
        %v858 = vpop.f32.mrf.mxu0
        %v859 = vadd.f32 0.0, %v858
        %860 = vmatprep.mubr.bf16.mxu0 0
        %861 = vmatmul.mubr.bf16.gmra.mxu0 %v329
        %v862 = vpop.f32.mrf.mxu0
        %v863 = vadd.f32 0.0, %v862
        %v864 = vpop.f32.mrf.mxu0
        %v865 = vadd.f32 0.0, %v864
        %v866 = vpop.f32.mrf.mxu0
        %v867 = vadd.f32 0.0, %v866
        %v868 = vpop.f32.mrf.mxu0
        %v869 = vadd.f32 0.0, %v868
        %870 = vmatprep.mubr.bf16.mxu0 0
        %871 = vmatmul.mubr.bf16.gmra.mxu0 %v330
        %v872 = vpop.f32.mrf.mxu0
        %v873 = vadd.f32 0.0, %v872
        %v874 = vpop.f32.mrf.mxu0
        %v875 = vadd.f32 0.0, %v874
        %v876 = vpop.f32.mrf.mxu0
        %v877 = vadd.f32 0.0, %v876
        %v878 = vpop.f32.mrf.mxu0
        %v879 = vadd.f32 0.0, %v878
        %880 = vmatprep.mubr.bf16.mxu0 0
        %881 = vmatmul.mubr.bf16.gmra.mxu0 %v331
        %v882 = vpop.f32.mrf.mxu0
        %v883 = vadd.f32 0.0, %v882
        %v884 = vpop.f32.mrf.mxu0
        %v885 = vadd.f32 0.0, %v884
        %v886 = vpop.f32.mrf.mxu0
        %v887 = vadd.f32 0.0, %v886
        %v888 = vpop.f32.mrf.mxu0
        %v889 = vadd.f32 0.0, %v888
        %890 = vmatprep.mubr.bf16.mxu0 0
        %891 = vmatmul.mubr.bf16.gmra.mxu0 %v332
        %v892 = vpop.f32.mrf.mxu0
        %v893 = vadd.f32 0.0, %v892
        %v894 = vpop.f32.mrf.mxu0
        %v895 = vadd.f32 0.0, %v894
        %v896 = vpop.f32.mrf.mxu0
        %v897 = vadd.f32 0.0, %v896
        %v898 = vpop.f32.mrf.mxu0
        %v899 = vadd.f32 0.0, %v898
        %900 = vmatprep.mubr.bf16.mxu0 0
        %901 = vmatmul.mubr.bf16.gmra.mxu0 %v333
        %v902 = vpop.f32.mrf.mxu0
        %v903 = vadd.f32 0.0, %v902
        %v904 = vpop.f32.mrf.mxu0
        %v905 = vadd.f32 0.0, %v904
        %v906 = vpop.f32.mrf.mxu0
        %v907 = vadd.f32 0.0, %v906
        %v908 = vpop.f32.mrf.mxu0
        %v909 = vadd.f32 0.0, %v908
        %910 = vdwg.mxu0
        %911 = vmatprep.subr.bf16.mxu0 %v649
        %912 = vmatpush1.bf16.msra.mxu0 %v648
        %913 = vmatprep.subr.bf16.mxu0 %v641
        %914 = vmatpush1.bf16.msra.mxu0 %v640
        %915 = vmatprep.subr.bf16.mxu0 %v633
        %916 = vmatpush1.bf16.msra.mxu0 %v632
        %917 = vmatprep.subr.bf16.mxu0 %v625
        %918 = vmatpush1.bf16.msra.mxu0 %v624
        %919 = vmatprep.subr.bf16.mxu0 %v617
        %920 = vmatpush1.bf16.msra.mxu0 %v616
        %921 = vmatprep.subr.bf16.mxu0 %v609
        %922 = vmatpush1.bf16.msra.mxu0 %v608
        %923 = vmatprep.subr.bf16.mxu0 %v601
        %924 = vmatpush1.bf16.msra.mxu0 %v600
        %925 = vmatprep.subr.bf16.mxu0 %v593
        %926 = vmatpush1.bf16.msra.mxu0 %v592
        %927 = vmatprep.subr.bf16.mxu0 0
        %928 = vmatpush2.bf16.msra.mxu0 0
        %929 = vmatprep.subr.bf16.mxu0 0
        %930 = vmatpush2.bf16.msra.mxu0 0
        %931 = vmatprep.subr.bf16.mxu0 0
        %932 = vmatpush2.bf16.msra.mxu0 0
        %933 = vmatprep.subr.bf16.mxu0 0
        %934 = vmatpush2.bf16.msra.mxu0 0
        %935 = vmatprep.subr.bf16.mxu0 0
        %936 = vmatpush2.bf16.msra.mxu0 0
        %937 = vmatprep.subr.bf16.mxu0 0
        %938 = vmatpush2.bf16.msra.mxu0 0
        %939 = vmatprep.subr.bf16.mxu0 0
        %940 = vmatpush2.bf16.msra.mxu0 0
        %941 = vmatprep.subr.bf16.mxu0 0
        %942 = vmatpush2.bf16.msra.mxu0 0
        %943 = vmatprep.mubr.bf16.mxu0 0
        %944 = vmatmul.mubr.bf16.gmra.mxu0 %v318
        %v945 = vpop.f32.mrf.mxu0
        %v946 = vadd.f32 0.0, %v945
        %v947 = vpop.f32.mrf.mxu0
        %v948 = vadd.f32 0.0, %v947
        %v949 = vpop.f32.mrf.mxu0
        %v950 = vadd.f32 0.0, %v949
        %v951 = vpop.f32.mrf.mxu0
        %v952 = vadd.f32 0.0, %v951
        %953 = vmatprep.mubr.bf16.mxu0 0
        %954 = vmatmul.mubr.bf16.gmra.mxu0 %v319
        %v955 = vpop.f32.mrf.mxu0
        %v956 = vadd.f32 0.0, %v955
        %v957 = vpop.f32.mrf.mxu0
        %v958 = vadd.f32 0.0, %v957
        %v959 = vpop.f32.mrf.mxu0
        %v960 = vadd.f32 0.0, %v959
        %v961 = vpop.f32.mrf.mxu0
        %v962 = vadd.f32 0.0, %v961
        %963 = vmatprep.mubr.bf16.mxu0 0
        %964 = vmatmul.mubr.bf16.gmra.mxu0 %v320
        %v965 = vpop.f32.mrf.mxu0
        %v966 = vadd.f32 0.0, %v965
        %v967 = vpop.f32.mrf.mxu0
        %v968 = vadd.f32 0.0, %v967
        %v969 = vpop.f32.mrf.mxu0
        %v970 = vadd.f32 0.0, %v969
        %v971 = vpop.f32.mrf.mxu0
        %v972 = vadd.f32 0.0, %v971
        %973 = vmatprep.mubr.bf16.mxu0 0
        %974 = vmatmul.mubr.bf16.gmra.mxu0 %v321
        %v975 = vpop.f32.mrf.mxu0
        %v976 = vadd.f32 0.0, %v975
        %v977 = vpop.f32.mrf.mxu0
        %v978 = vadd.f32 0.0, %v977
        %v979 = vpop.f32.mrf.mxu0
        %v980 = vadd.f32 0.0, %v979
        %v981 = vpop.f32.mrf.mxu0
        %v982 = vadd.f32 0.0, %v981
        %983 = vmatprep.mubr.bf16.mxu0 0
        %984 = vmatmul.mubr.bf16.gmra.mxu0 %v322
        %v985 = vpop.f32.mrf.mxu0
        %v986 = vadd.f32 0.0, %v985
        %v987 = vpop.f32.mrf.mxu0
        %v988 = vadd.f32 0.0, %v987
        %v989 = vpop.f32.mrf.mxu0
        %v990 = vadd.f32 0.0, %v989
        %v991 = vpop.f32.mrf.mxu0
        %v992 = vadd.f32 0.0, %v991
        %993 = vmatprep.mubr.bf16.mxu0 0
        %994 = vmatmul.mubr.bf16.gmra.mxu0 %v323
        %v995 = vpop.f32.mrf.mxu0
        %v996 = vadd.f32 0.0, %v995
        %v997 = vpop.f32.mrf.mxu0
        %v998 = vadd.f32 0.0, %v997
        %v999 = vpop.f32.mrf.mxu0
        %v1000 = vadd.f32 0.0, %v999
        %v1001 = vpop.f32.mrf.mxu0
        %v1002 = vadd.f32 0.0, %v1001
        %1003 = vmatprep.mubr.bf16.mxu0 0
        %1004 = vmatmul.mubr.bf16.gmra.mxu0 %v324
        %v1005 = vpop.f32.mrf.mxu0
        %v1006 = vadd.f32 0.0, %v1005
        %v1007 = vpop.f32.mrf.mxu0
        %v1008 = vadd.f32 0.0, %v1007
        %v1009 = vpop.f32.mrf.mxu0
        %v1010 = vadd.f32 0.0, %v1009
        %v1011 = vpop.f32.mrf.mxu0
        %v1012 = vadd.f32 0.0, %v1011
        %1013 = vmatprep.mubr.bf16.mxu0 0
        %1014 = vmatmul.mubr.bf16.gmra.mxu0 %v325
        %v1015 = vpop.f32.mrf.mxu0
        %v1016 = vadd.f32 0.0, %v1015
        %v1017 = vpop.f32.mrf.mxu0
        %v1018 = vadd.f32 0.0, %v1017
        %v1019 = vpop.f32.mrf.mxu0
        %v1020 = vadd.f32 0.0, %v1019
        %v1021 = vpop.f32.mrf.mxu0
        %v1022 = vadd.f32 0.0, %v1021
        %1023 = vmatprep.mubr.bf16.mxu0 0
        %1024 = vmatmul.mubr.bf16.gmra.mxu0 %v326
        %v1025 = vpop.f32.mrf.mxu0
        %v1026 = vadd.f32 0.0, %v1025
        %v1027 = vpop.f32.mrf.mxu0
        %v1028 = vadd.f32 0.0, %v1027
        %v1029 = vpop.f32.mrf.mxu0
        %v1030 = vadd.f32 0.0, %v1029
        %v1031 = vpop.f32.mrf.mxu0
        %v1032 = vadd.f32 0.0, %v1031
        %1033 = vmatprep.mubr.bf16.mxu0 0
        %1034 = vmatmul.mubr.bf16.gmra.mxu0 %v327
        %v1035 = vpop.f32.mrf.mxu0
        %v1036 = vadd.f32 0.0, %v1035
        %v1037 = vpop.f32.mrf.mxu0
        %v1038 = vadd.f32 0.0, %v1037
        %v1039 = vpop.f32.mrf.mxu0
        %v1040 = vadd.f32 0.0, %v1039
        %v1041 = vpop.f32.mrf.mxu0
        %v1042 = vadd.f32 0.0, %v1041
        %1043 = vmatprep.mubr.bf16.mxu0 0
        %1044 = vmatmul.mubr.bf16.gmra.mxu0 %v328
        %v1045 = vpop.f32.mrf.mxu0
        %v1046 = vadd.f32 0.0, %v1045
        %v1047 = vpop.f32.mrf.mxu0
        %v1048 = vadd.f32 0.0, %v1047
        %v1049 = vpop.f32.mrf.mxu0
        %v1050 = vadd.f32 0.0, %v1049
        %v1051 = vpop.f32.mrf.mxu0
        %v1052 = vadd.f32 0.0, %v1051
        %1053 = vmatprep.mubr.bf16.mxu0 0
        %1054 = vmatmul.mubr.bf16.gmra.mxu0 %v329
        %v1055 = vpop.f32.mrf.mxu0
        %v1056 = vadd.f32 0.0, %v1055
        %v1057 = vpop.f32.mrf.mxu0
        %v1058 = vadd.f32 0.0, %v1057
        %v1059 = vpop.f32.mrf.mxu0
        %v1060 = vadd.f32 0.0, %v1059
        %v1061 = vpop.f32.mrf.mxu0
        %v1062 = vadd.f32 0.0, %v1061
        %1063 = vmatprep.mubr.bf16.mxu0 0
        %1064 = vmatmul.mubr.bf16.gmra.mxu0 %v330
        %v1065 = vpop.f32.mrf.mxu0
        %v1066 = vadd.f32 0.0, %v1065
        %v1067 = vpop.f32.mrf.mxu0
        %v1068 = vadd.f32 0.0, %v1067
        %v1069 = vpop.f32.mrf.mxu0
        %v1070 = vadd.f32 0.0, %v1069
        %v1071 = vpop.f32.mrf.mxu0
        %v1072 = vadd.f32 0.0, %v1071
        %1073 = vmatprep.mubr.bf16.mxu0 0
        %1074 = vmatmul.mubr.bf16.gmra.mxu0 %v331
        %v1075 = vpop.f32.mrf.mxu0
        %v1076 = vadd.f32 0.0, %v1075
        %v1077 = vpop.f32.mrf.mxu0
        %v1078 = vadd.f32 0.0, %v1077
        %v1079 = vpop.f32.mrf.mxu0
        %v1080 = vadd.f32 0.0, %v1079
        %v1081 = vpop.f32.mrf.mxu0
        %v1082 = vadd.f32 0.0, %v1081
        %1083 = vmatprep.mubr.bf16.mxu0 0
        %1084 = vmatmul.mubr.bf16.gmra.mxu0 %v332
        %v1085 = vpop.f32.mrf.mxu0
        %v1086 = vadd.f32 0.0, %v1085
        %v1087 = vpop.f32.mrf.mxu0
        %v1088 = vadd.f32 0.0, %v1087
        %v1089 = vpop.f32.mrf.mxu0
        %v1090 = vadd.f32 0.0, %v1089
        %v1091 = vpop.f32.mrf.mxu0
        %v1092 = vadd.f32 0.0, %v1091
        %1093 = vmatprep.mubr.bf16.mxu0 0
        %1094 = vmatmul.mubr.bf16.gmra.mxu0 %v333
        %v1095 = vpop.f32.mrf.mxu0
        %v1096 = vadd.f32 0.0, %v1095
        %v1097 = vpop.f32.mrf.mxu0
        %v1098 = vadd.f32 0.0, %v1097
        %v1099 = vpop.f32.mrf.mxu0
        %v1100 = vadd.f32 0.0, %v1099
        %v1101 = vpop.f32.mrf.mxu0
        %v1102 = vadd.f32 0.0, %v1101
        %1103 = vdwg.mxu0
        %1104 = vmatprep.subr.bf16.mxu0 %v651
        %1105 = vmatpush1.bf16.msra.mxu0 %v650
        %1106 = vmatprep.subr.bf16.mxu0 %v643
        %1107 = vmatpush1.bf16.msra.mxu0 %v642
        %1108 = vmatprep.subr.bf16.mxu0 %v635
        %1109 = vmatpush1.bf16.msra.mxu0 %v634
        %1110 = vmatprep.subr.bf16.mxu0 %v627
        %1111 = vmatpush1.bf16.msra.mxu0 %v626
        %1112 = vmatprep.subr.bf16.mxu0 %v619
        %1113 = vmatpush1.bf16.msra.mxu0 %v618
        %1114 = vmatprep.subr.bf16.mxu0 %v611
        %1115 = vmatpush1.bf16.msra.mxu0 %v610
        %1116 = vmatprep.subr.bf16.mxu0 %v603
        %1117 = vmatpush1.bf16.msra.mxu0 %v602
        %1118 = vmatprep.subr.bf16.mxu0 %v595
        %1119 = vmatpush1.bf16.msra.mxu0 %v594
        %1120 = vmatprep.subr.bf16.mxu0 0
        %1121 = vmatpush2.bf16.msra.mxu0 0
        %1122 = vmatprep.subr.bf16.mxu0 0
        %1123 = vmatpush2.bf16.msra.mxu0 0
        %1124 = vmatprep.subr.bf16.mxu0 0
        %1125 = vmatpush2.bf16.msra.mxu0 0
        %1126 = vmatprep.subr.bf16.mxu0 0
        %1127 = vmatpush2.bf16.msra.mxu0 0
        %1128 = vmatprep.subr.bf16.mxu0 0
        %1129 = vmatpush2.bf16.msra.mxu0 0
        %1130 = vmatprep.subr.bf16.mxu0 0
        %1131 = vmatpush2.bf16.msra.mxu0 0
        %1132 = vmatprep.subr.bf16.mxu0 0
        %1133 = vmatpush2.bf16.msra.mxu0 0
        %1134 = vmatprep.subr.bf16.mxu0 0
        %1135 = vmatpush2.bf16.msra.mxu0 0
        %1136 = vmatprep.mubr.bf16.mxu0 0
        %1137 = vmatmul.mubr.bf16.gmra.mxu0 %v318
        %v1138 = vpop.f32.mrf.mxu0
        %v1139 = vadd.f32 0.0, %v1138
        %v1140 = vpop.f32.mrf.mxu0
        %v1141 = vadd.f32 0.0, %v1140
        %v1142 = vpop.f32.mrf.mxu0
        %v1143 = vadd.f32 0.0, %v1142
        %v1144 = vpop.f32.mrf.mxu0
        %v1145 = vadd.f32 0.0, %v1144
        %1146 = vmatprep.mubr.bf16.mxu0 0
        %1147 = vmatmul.mubr.bf16.gmra.mxu0 %v319
        %v1148 = vpop.f32.mrf.mxu0
        %v1149 = vadd.f32 0.0, %v1148
        %v1150 = vpop.f32.mrf.mxu0
        %v1151 = vadd.f32 0.0, %v1150
        %v1152 = vpop.f32.mrf.mxu0
        %v1153 = vadd.f32 0.0, %v1152
        %v1154 = vpop.f32.mrf.mxu0
        %v1155 = vadd.f32 0.0, %v1154
        %1156 = vmatprep.mubr.bf16.mxu0 0
        %1157 = vmatmul.mubr.bf16.gmra.mxu0 %v320
        %v1158 = vpop.f32.mrf.mxu0
        %v1159 = vadd.f32 0.0, %v1158
        %v1160 = vpop.f32.mrf.mxu0
        %v1161 = vadd.f32 0.0, %v1160
        %v1162 = vpop.f32.mrf.mxu0
        %v1163 = vadd.f32 0.0, %v1162
        %v1164 = vpop.f32.mrf.mxu0
        %v1165 = vadd.f32 0.0, %v1164
        %1166 = vmatprep.mubr.bf16.mxu0 0
        %1167 = vmatmul.mubr.bf16.gmra.mxu0 %v321
        %v1168 = vpop.f32.mrf.mxu0
        %v1169 = vadd.f32 0.0, %v1168
        %v1170 = vpop.f32.mrf.mxu0
        %v1171 = vadd.f32 0.0, %v1170
        %v1172 = vpop.f32.mrf.mxu0
        %v1173 = vadd.f32 0.0, %v1172
        %v1174 = vpop.f32.mrf.mxu0
        %v1175 = vadd.f32 0.0, %v1174
        %1176 = vmatprep.mubr.bf16.mxu0 0
        %1177 = vmatmul.mubr.bf16.gmra.mxu0 %v322
        %v1178 = vpop.f32.mrf.mxu0
        %v1179 = vadd.f32 0.0, %v1178
        %v1180 = vpop.f32.mrf.mxu0
        %v1181 = vadd.f32 0.0, %v1180
        %v1182 = vpop.f32.mrf.mxu0
        %v1183 = vadd.f32 0.0, %v1182
        %v1184 = vpop.f32.mrf.mxu0
        %v1185 = vadd.f32 0.0, %v1184
        %1186 = vmatprep.mubr.bf16.mxu0 0
        %1187 = vmatmul.mubr.bf16.gmra.mxu0 %v323
        %v1188 = vpop.f32.mrf.mxu0
        %v1189 = vadd.f32 0.0, %v1188
        %v1190 = vpop.f32.mrf.mxu0
        %v1191 = vadd.f32 0.0, %v1190
        %v1192 = vpop.f32.mrf.mxu0
        %v1193 = vadd.f32 0.0, %v1192
        %v1194 = vpop.f32.mrf.mxu0
        %v1195 = vadd.f32 0.0, %v1194
        %1196 = vmatprep.mubr.bf16.mxu0 0
        %1197 = vmatmul.mubr.bf16.gmra.mxu0 %v324
        %v1198 = vpop.f32.mrf.mxu0
        %v1199 = vadd.f32 0.0, %v1198
        %v1200 = vpop.f32.mrf.mxu0
        %v1201 = vadd.f32 0.0, %v1200
        %v1202 = vpop.f32.mrf.mxu0
        %v1203 = vadd.f32 0.0, %v1202
        %v1204 = vpop.f32.mrf.mxu0
        %v1205 = vadd.f32 0.0, %v1204
        %1206 = vmatprep.mubr.bf16.mxu0 0
        %1207 = vmatmul.mubr.bf16.gmra.mxu0 %v325
        %v1208 = vpop.f32.mrf.mxu0
        %v1209 = vadd.f32 0.0, %v1208
        %v1210 = vpop.f32.mrf.mxu0
        %v1211 = vadd.f32 0.0, %v1210
        %v1212 = vpop.f32.mrf.mxu0
        %v1213 = vadd.f32 0.0, %v1212
        %v1214 = vpop.f32.mrf.mxu0
        %v1215 = vadd.f32 0.0, %v1214
        %1216 = vmatprep.mubr.bf16.mxu0 0
        %1217 = vmatmul.mubr.bf16.gmra.mxu0 %v326
        %v1218 = vpop.f32.mrf.mxu0
        %v1219 = vadd.f32 0.0, %v1218
        %v1220 = vpop.f32.mrf.mxu0
        %v1221 = vadd.f32 0.0, %v1220
        %v1222 = vpop.f32.mrf.mxu0
        %v1223 = vadd.f32 0.0, %v1222
        %v1224 = vpop.f32.mrf.mxu0
        %v1225 = vadd.f32 0.0, %v1224
        %1226 = vmatprep.mubr.bf16.mxu0 0
        %1227 = vmatmul.mubr.bf16.gmra.mxu0 %v327
        %v1228 = vpop.f32.mrf.mxu0
        %v1229 = vadd.f32 0.0, %v1228
        %v1230 = vpop.f32.mrf.mxu0
        %v1231 = vadd.f32 0.0, %v1230
        %v1232 = vpop.f32.mrf.mxu0
        %v1233 = vadd.f32 0.0, %v1232
        %v1234 = vpop.f32.mrf.mxu0
        %v1235 = vadd.f32 0.0, %v1234
        %1236 = vmatprep.mubr.bf16.mxu0 0
        %1237 = vmatmul.mubr.bf16.gmra.mxu0 %v328
        %v1238 = vpop.f32.mrf.mxu0
        %v1239 = vadd.f32 0.0, %v1238
        %v1240 = vpop.f32.mrf.mxu0
        %v1241 = vadd.f32 0.0, %v1240
        %v1242 = vpop.f32.mrf.mxu0
        %v1243 = vadd.f32 0.0, %v1242
        %v1244 = vpop.f32.mrf.mxu0
        %v1245 = vadd.f32 0.0, %v1244
        %1246 = vmatprep.mubr.bf16.mxu0 0
        %1247 = vmatmul.mubr.bf16.gmra.mxu0 %v329
        %v1248 = vpop.f32.mrf.mxu0
        %v1249 = vadd.f32 0.0, %v1248
        %v1250 = vpop.f32.mrf.mxu0
        %v1251 = vadd.f32 0.0, %v1250
        %v1252 = vpop.f32.mrf.mxu0
        %v1253 = vadd.f32 0.0, %v1252
        %v1254 = vpop.f32.mrf.mxu0
        %v1255 = vadd.f32 0.0, %v1254
        %1256 = vmatprep.mubr.bf16.mxu0 0
        %1257 = vmatmul.mubr.bf16.gmra.mxu0 %v330
        %v1258 = vpop.f32.mrf.mxu0
        %v1259 = vadd.f32 0.0, %v1258
        %v1260 = vpop.f32.mrf.mxu0
        %v1261 = vadd.f32 0.0, %v1260
        %v1262 = vpop.f32.mrf.mxu0
        %v1263 = vadd.f32 0.0, %v1262
        %v1264 = vpop.f32.mrf.mxu0
        %v1265 = vadd.f32 0.0, %v1264
        %1266 = vmatprep.mubr.bf16.mxu0 0
        %1267 = vmatmul.mubr.bf16.gmra.mxu0 %v331
        %v1268 = vpop.f32.mrf.mxu0
        %v1269 = vadd.f32 0.0, %v1268
        %v1270 = vpop.f32.mrf.mxu0
        %v1271 = vadd.f32 0.0, %v1270
        %v1272 = vpop.f32.mrf.mxu0
        %v1273 = vadd.f32 0.0, %v1272
        %v1274 = vpop.f32.mrf.mxu0
        %v1275 = vadd.f32 0.0, %v1274
        %1276 = vmatprep.mubr.bf16.mxu0 0
        %1277 = vmatmul.mubr.bf16.gmra.mxu0 %v332
        %v1278 = vpop.f32.mrf.mxu0
        %v1279 = vadd.f32 0.0, %v1278
        %v1280 = vpop.f32.mrf.mxu0
        %v1281 = vadd.f32 0.0, %v1280
        %v1282 = vpop.f32.mrf.mxu0
        %v1283 = vadd.f32 0.0, %v1282
        %v1284 = vpop.f32.mrf.mxu0
        %v1285 = vadd.f32 0.0, %v1284
        %1286 = vmatprep.mubr.bf16.mxu0 0
        %1287 = vmatmul.mubr.bf16.gmra.mxu0 %v333
        %v1288 = vpop.f32.mrf.mxu0
        %v1289 = vadd.f32 0.0, %v1288
        %v1290 = vpop.f32.mrf.mxu0
        %v1291 = vadd.f32 0.0, %v1290
        %v1292 = vpop.f32.mrf.mxu0
        %v1293 = vadd.f32 0.0, %v1292
        %v1294 = vpop.f32.mrf.mxu0
        %v1295 = vadd.f32 0.0, %v1294
        %1296 = vdwg.mxu0
        %1297 = vmatprep.subr.bf16.mxu0 %v653
        %1298 = vmatpush1.bf16.msra.mxu0 %v652
        %1299 = vmatprep.subr.bf16.mxu0 %v645
        %1300 = vmatpush1.bf16.msra.mxu0 %v644
        %1301 = vmatprep.subr.bf16.mxu0 %v637
        %1302 = vmatpush1.bf16.msra.mxu0 %v636
        %1303 = vmatprep.subr.bf16.mxu0 %v629
        %1304 = vmatpush1.bf16.msra.mxu0 %v628
        %1305 = vmatprep.subr.bf16.mxu0 %v621
        %1306 = vmatpush1.bf16.msra.mxu0 %v620
        %1307 = vmatprep.subr.bf16.mxu0 %v613
        %1308 = vmatpush1.bf16.msra.mxu0 %v612
        %1309 = vmatprep.subr.bf16.mxu0 %v605
        %1310 = vmatpush1.bf16.msra.mxu0 %v604
        %1311 = vmatprep.subr.bf16.mxu0 %v597
        %1312 = vmatpush1.bf16.msra.mxu0 %v596
        %1313 = vmatprep.subr.bf16.mxu0 0
        %1314 = vmatpush2.bf16.msra.mxu0 0
        %1315 = vmatprep.subr.bf16.mxu0 0
        %1316 = vmatpush2.bf16.msra.mxu0 0
        %1317 = vmatprep.subr.bf16.mxu0 0
        %1318 = vmatpush2.bf16.msra.mxu0 0
        %1319 = vmatprep.subr.bf16.mxu0 0
        %1320 = vmatpush2.bf16.msra.mxu0 0
        %1321 = vmatprep.subr.bf16.mxu0 0
        %1322 = vmatpush2.bf16.msra.mxu0 0
        %1323 = vmatprep.subr.bf16.mxu0 0
        %1324 = vmatpush2.bf16.msra.mxu0 0
        %1325 = vmatprep.subr.bf16.mxu0 0
        %1326 = vmatpush2.bf16.msra.mxu0 0
        %1327 = vmatprep.subr.bf16.mxu0 0
        %1328 = vmatpush2.bf16.msra.mxu0 0
        %1329 = vmatprep.mubr.bf16.mxu0 0
        %1330 = vmatmul.mubr.bf16.gmra.mxu0 %v318
        %v1331 = vpop.f32.mrf.mxu0
        %v1332 = vadd.f32 0.0, %v1331
        %v1333 = vpop.f32.mrf.mxu0
        %v1334 = vadd.f32 0.0, %v1333
        %v1335 = vpop.f32.mrf.mxu0
        %v1336 = vadd.f32 0.0, %v1335
        %v1337 = vpop.f32.mrf.mxu0
        %v1338 = vadd.f32 0.0, %v1337
        %1339 = vmatprep.mubr.bf16.mxu0 0
        %1340 = vmatmul.mubr.bf16.gmra.mxu0 %v319
        %v1341 = vpop.f32.mrf.mxu0
        %v1342 = vadd.f32 0.0, %v1341
        %v1343 = vpop.f32.mrf.mxu0
        %v1344 = vadd.f32 0.0, %v1343
        %v1345 = vpop.f32.mrf.mxu0
        %v1346 = vadd.f32 0.0, %v1345
        %v1347 = vpop.f32.mrf.mxu0
        %v1348 = vadd.f32 0.0, %v1347
        %1349 = vmatprep.mubr.bf16.mxu0 0
        %1350 = vmatmul.mubr.bf16.gmra.mxu0 %v320
        %v1351 = vpop.f32.mrf.mxu0
        %v1352 = vadd.f32 0.0, %v1351
        %v1353 = vpop.f32.mrf.mxu0
        %v1354 = vadd.f32 0.0, %v1353
        %v1355 = vpop.f32.mrf.mxu0
        %v1356 = vadd.f32 0.0, %v1355
        %v1357 = vpop.f32.mrf.mxu0
        %v1358 = vadd.f32 0.0, %v1357
        %1359 = vmatprep.mubr.bf16.mxu0 0
        %1360 = vmatmul.mubr.bf16.gmra.mxu0 %v321
        %v1361 = vpop.f32.mrf.mxu0
        %v1362 = vadd.f32 0.0, %v1361
        %v1363 = vpop.f32.mrf.mxu0
        %v1364 = vadd.f32 0.0, %v1363
        %v1365 = vpop.f32.mrf.mxu0
        %v1366 = vadd.f32 0.0, %v1365
        %v1367 = vpop.f32.mrf.mxu0
        %v1368 = vadd.f32 0.0, %v1367
        %1369 = vmatprep.mubr.bf16.mxu0 0
        %1370 = vmatmul.mubr.bf16.gmra.mxu0 %v322
        %v1371 = vpop.f32.mrf.mxu0
        %v1372 = vadd.f32 0.0, %v1371
        %v1373 = vpop.f32.mrf.mxu0
        %v1374 = vadd.f32 0.0, %v1373
        %v1375 = vpop.f32.mrf.mxu0
        %v1376 = vadd.f32 0.0, %v1375
        %v1377 = vpop.f32.mrf.mxu0
        %v1378 = vadd.f32 0.0, %v1377
        %1379 = vmatprep.mubr.bf16.mxu0 0
        %1380 = vmatmul.mubr.bf16.gmra.mxu0 %v323
        %v1381 = vpop.f32.mrf.mxu0
        %v1382 = vadd.f32 0.0, %v1381
        %v1383 = vpop.f32.mrf.mxu0
        %v1384 = vadd.f32 0.0, %v1383
        %v1385 = vpop.f32.mrf.mxu0
        %v1386 = vadd.f32 0.0, %v1385
        %v1387 = vpop.f32.mrf.mxu0
        %v1388 = vadd.f32 0.0, %v1387
        %1389 = vmatprep.mubr.bf16.mxu0 0
        %1390 = vmatmul.mubr.bf16.gmra.mxu0 %v324
        %v1391 = vpop.f32.mrf.mxu0
        %v1392 = vadd.f32 0.0, %v1391
        %v1393 = vpop.f32.mrf.mxu0
        %v1394 = vadd.f32 0.0, %v1393
        %v1395 = vpop.f32.mrf.mxu0
        %v1396 = vadd.f32 0.0, %v1395
        %v1397 = vpop.f32.mrf.mxu0
        %v1398 = vadd.f32 0.0, %v1397
        %1399 = vmatprep.mubr.bf16.mxu0 0
        %1400 = vmatmul.mubr.bf16.gmra.mxu0 %v325
        %v1401 = vpop.f32.mrf.mxu0
        %v1402 = vadd.f32 0.0, %v1401
        %v1403 = vpop.f32.mrf.mxu0
        %v1404 = vadd.f32 0.0, %v1403
        %v1405 = vpop.f32.mrf.mxu0
        %v1406 = vadd.f32 0.0, %v1405
        %v1407 = vpop.f32.mrf.mxu0
        %v1408 = vadd.f32 0.0, %v1407
        %1409 = vmatprep.mubr.bf16.mxu0 0
        %1410 = vmatmul.mubr.bf16.gmra.mxu0 %v326
        %v1411 = vpop.f32.mrf.mxu0
        %v1412 = vadd.f32 0.0, %v1411
        %v1413 = vpop.f32.mrf.mxu0
        %v1414 = vadd.f32 0.0, %v1413
        %v1415 = vpop.f32.mrf.mxu0
        %v1416 = vadd.f32 0.0, %v1415
        %v1417 = vpop.f32.mrf.mxu0
        %v1418 = vadd.f32 0.0, %v1417
        %1419 = vmatprep.mubr.bf16.mxu0 0
        %1420 = vmatmul.mubr.bf16.gmra.mxu0 %v327
        %v1421 = vpop.f32.mrf.mxu0
        %v1422 = vadd.f32 0.0, %v1421
        %v1423 = vpop.f32.mrf.mxu0
        %v1424 = vadd.f32 0.0, %v1423
        %v1425 = vpop.f32.mrf.mxu0
        %v1426 = vadd.f32 0.0, %v1425
        %v1427 = vpop.f32.mrf.mxu0
        %v1428 = vadd.f32 0.0, %v1427
        %1429 = vmatprep.mubr.bf16.mxu0 0
        %1430 = vmatmul.mubr.bf16.gmra.mxu0 %v328
        %v1431 = vpop.f32.mrf.mxu0
        %v1432 = vadd.f32 0.0, %v1431
        %v1433 = vpop.f32.mrf.mxu0
        %v1434 = vadd.f32 0.0, %v1433
        %v1435 = vpop.f32.mrf.mxu0
        %v1436 = vadd.f32 0.0, %v1435
        %v1437 = vpop.f32.mrf.mxu0
        %v1438 = vadd.f32 0.0, %v1437
        %1439 = vmatprep.mubr.bf16.mxu0 0
        %1440 = vmatmul.mubr.bf16.gmra.mxu0 %v329
        %v1441 = vpop.f32.mrf.mxu0
        %v1442 = vadd.f32 0.0, %v1441
        %v1443 = vpop.f32.mrf.mxu0
        %v1444 = vadd.f32 0.0, %v1443
        %v1445 = vpop.f32.mrf.mxu0
        %v1446 = vadd.f32 0.0, %v1445
        %v1447 = vpop.f32.mrf.mxu0
        %v1448 = vadd.f32 0.0, %v1447
        %1449 = vmatprep.mubr.bf16.mxu0 0
        %1450 = vmatmul.mubr.bf16.gmra.mxu0 %v330
        %v1451 = vpop.f32.mrf.mxu0
        %v1452 = vadd.f32 0.0, %v1451
        %v1453 = vpop.f32.mrf.mxu0
        %v1454 = vadd.f32 0.0, %v1453
        %v1455 = vpop.f32.mrf.mxu0
        %v1456 = vadd.f32 0.0, %v1455
        %v1457 = vpop.f32.mrf.mxu0
        %v1458 = vadd.f32 0.0, %v1457
        %1459 = vmatprep.mubr.bf16.mxu0 0
        %1460 = vmatmul.mubr.bf16.gmra.mxu0 %v331
        %v1461 = vpop.f32.mrf.mxu0
        %v1462 = vadd.f32 0.0, %v1461
        %v1463 = vpop.f32.mrf.mxu0
        %v1464 = vadd.f32 0.0, %v1463
        %v1465 = vpop.f32.mrf.mxu0
        %v1466 = vadd.f32 0.0, %v1465
        %v1467 = vpop.f32.mrf.mxu0
        %v1468 = vadd.f32 0.0, %v1467
        %1469 = vmatprep.mubr.bf16.mxu0 0
        %1470 = vmatmul.mubr.bf16.gmra.mxu0 %v332
        %v1471 = vpop.f32.mrf.mxu0
        %v1472 = vadd.f32 0.0, %v1471
        %v1473 = vpop.f32.mrf.mxu0
        %v1474 = vadd.f32 0.0, %v1473
        %v1475 = vpop.f32.mrf.mxu0
        %v1476 = vadd.f32 0.0, %v1475
        %v1477 = vpop.f32.mrf.mxu0
        %v1478 = vadd.f32 0.0, %v1477
        %1479 = vmatprep.mubr.bf16.mxu0 0
        %1480 = vmatmul.mubr.bf16.gmra.mxu0 %v333
        %v1481 = vpop.f32.mrf.mxu0
        %v1482 = vadd.f32 0.0, %v1481
        %v1483 = vpop.f32.mrf.mxu0
        %v1484 = vadd.f32 0.0, %v1483
        %v1485 = vpop.f32.mrf.mxu0
        %v1486 = vadd.f32 0.0, %v1485
        %v1487 = vpop.f32.mrf.mxu0
        %v1488 = vadd.f32 0.0, %v1487
        %1489 = vdwg.mxu0
        %v1490 = vxor.u32 %v753, 2147483648
        %v1491 = vxor.u32 %v755, 2147483648
        %v1492 = vxor.u32 %v946, 2147483648
        %v1493 = vxor.u32 %v948, 2147483648
        %v1494 = vxor.u32 %v757, 2147483648
        %v1495 = vxor.u32 %v759, 2147483648
        %v1496 = vxor.u32 %v950, 2147483648
        %v1497 = vxor.u32 %v952, 2147483648
        %v1498 = vxor.u32 %v763, 2147483648
        %v1499 = vxor.u32 %v765, 2147483648
        %v1500 = vxor.u32 %v956, 2147483648
        %v1501 = vxor.u32 %v958, 2147483648
        %v1502 = vxor.u32 %v767, 2147483648
        %v1503 = vxor.u32 %v769, 2147483648
        %v1504 = vxor.u32 %v960, 2147483648
        %v1505 = vxor.u32 %v962, 2147483648
        %v1506 = vxor.u32 %v773, 2147483648
        %v1507 = vxor.u32 %v775, 2147483648
        %v1508 = vxor.u32 %v966, 2147483648
        %v1509 = vxor.u32 %v968, 2147483648
        %v1510 = vxor.u32 %v777, 2147483648
        %v1511 = vxor.u32 %v779, 2147483648
        %v1512 = vxor.u32 %v970, 2147483648
        %v1513 = vxor.u32 %v972, 2147483648
        %v1514 = vxor.u32 %v783, 2147483648
        %v1515 = vxor.u32 %v785, 2147483648
        %v1516 = vxor.u32 %v976, 2147483648
        %v1517 = vxor.u32 %v978, 2147483648
        %v1518 = vxor.u32 %v787, 2147483648
        %v1519 = vxor.u32 %v789, 2147483648
        %v1520 = vxor.u32 %v980, 2147483648
        %v1521 = vxor.u32 %v982, 2147483648
        %v1522 = vxor.u32 %v793, 2147483648
        %v1523 = vxor.u32 %v795, 2147483648
        %v1524 = vxor.u32 %v986, 2147483648
        %v1525 = vxor.u32 %v988, 2147483648
        %v1526 = vxor.u32 %v797, 2147483648
        %v1527 = vxor.u32 %v799, 2147483648
        %v1528 = vxor.u32 %v990, 2147483648
        %v1529 = vxor.u32 %v992, 2147483648
        %v1530 = vxor.u32 %v803, 2147483648
        %v1531 = vxor.u32 %v805, 2147483648
        %v1532 = vxor.u32 %v996, 2147483648
        %v1533 = vxor.u32 %v998, 2147483648
        %v1534 = vxor.u32 %v807, 2147483648
        %v1535 = vxor.u32 %v809, 2147483648
        %v1536 = vxor.u32 %v1000, 2147483648
        %v1537 = vxor.u32 %v1002, 2147483648
        %v1538 = vxor.u32 %v813, 2147483648
        %v1539 = vxor.u32 %v815, 2147483648
        %v1540 = vxor.u32 %v1006, 2147483648
        %v1541 = vxor.u32 %v1008, 2147483648
        %v1542 = vxor.u32 %v817, 2147483648
        %v1543 = vxor.u32 %v819, 2147483648
        %v1544 = vxor.u32 %v1010, 2147483648
        %v1545 = vxor.u32 %v1012, 2147483648
        %v1546 = vxor.u32 %v823, 2147483648
        %v1547 = vxor.u32 %v825, 2147483648
        %v1548 = vxor.u32 %v1016, 2147483648
        %v1549 = vxor.u32 %v1018, 2147483648
        %v1550 = vxor.u32 %v827, 2147483648
        %v1551 = vxor.u32 %v829, 2147483648
        %v1552 = vxor.u32 %v1020, 2147483648
        %v1553 = vxor.u32 %v1022, 2147483648
        %v1554 = vxor.u32 %v833, 2147483648
        %v1555 = vxor.u32 %v835, 2147483648
        %v1556 = vxor.u32 %v1026, 2147483648
        %v1557 = vxor.u32 %v1028, 2147483648
        %v1558 = vxor.u32 %v837, 2147483648
        %v1559 = vxor.u32 %v839, 2147483648
        %v1560 = vxor.u32 %v1030, 2147483648
        %v1561 = vxor.u32 %v1032, 2147483648
        %v1562 = vxor.u32 %v843, 2147483648
        %v1563 = vxor.u32 %v845, 2147483648
        %v1564 = vxor.u32 %v1036, 2147483648
        %v1565 = vxor.u32 %v1038, 2147483648
        %v1566 = vxor.u32 %v847, 2147483648
        %v1567 = vxor.u32 %v849, 2147483648
        %v1568 = vxor.u32 %v1040, 2147483648
        %v1569 = vxor.u32 %v1042, 2147483648
        %v1570 = vxor.u32 %v853, 2147483648
        %v1571 = vxor.u32 %v855, 2147483648
        %v1572 = vxor.u32 %v1046, 2147483648
        %v1573 = vxor.u32 %v1048, 2147483648
        %v1574 = vxor.u32 %v857, 2147483648
        %v1575 = vxor.u32 %v859, 2147483648
        %v1576 = vxor.u32 %v1050, 2147483648
        %v1577 = vxor.u32 %v1052, 2147483648
        %v1578 = vxor.u32 %v863, 2147483648
        %v1579 = vxor.u32 %v865, 2147483648
        %v1580 = vxor.u32 %v1056, 2147483648
        %v1581 = vxor.u32 %v1058, 2147483648
        %v1582 = vxor.u32 %v867, 2147483648
        %v1583 = vxor.u32 %v869, 2147483648
        %v1584 = vxor.u32 %v1060, 2147483648
        %v1585 = vxor.u32 %v1062, 2147483648
        %v1586 = vxor.u32 %v873, 2147483648
        %v1587 = vxor.u32 %v875, 2147483648
        %v1588 = vxor.u32 %v1066, 2147483648
        %v1589 = vxor.u32 %v1068, 2147483648
        %v1590 = vxor.u32 %v877, 2147483648
        %v1591 = vxor.u32 %v879, 2147483648
        %v1592 = vxor.u32 %v1070, 2147483648
        %v1593 = vxor.u32 %v1072, 2147483648
        %v1594 = vxor.u32 %v883, 2147483648
        %v1595 = vxor.u32 %v885, 2147483648
        %v1596 = vxor.u32 %v1076, 2147483648
        %v1597 = vxor.u32 %v1078, 2147483648
        %v1598 = vxor.u32 %v887, 2147483648
        %v1599 = vxor.u32 %v889, 2147483648
        %v1600 = vxor.u32 %v1080, 2147483648
        %v1601 = vxor.u32 %v1082, 2147483648
        %v1602 = vxor.u32 %v893, 2147483648
        %v1603 = vxor.u32 %v895, 2147483648
        %v1604 = vxor.u32 %v1086, 2147483648
        %v1605 = vxor.u32 %v1088, 2147483648
        %v1606 = vxor.u32 %v897, 2147483648
        %v1607 = vxor.u32 %v899, 2147483648
        %v1608 = vxor.u32 %v1090, 2147483648
        %v1609 = vxor.u32 %v1092, 2147483648
        %v1610 = vxor.u32 %v903, 2147483648
        %v1611 = vxor.u32 %v905, 2147483648
        %v1612 = vxor.u32 %v1096, 2147483648
        %v1613 = vxor.u32 %v1098, 2147483648
        %v1614 = vxor.u32 %v907, 2147483648
        %v1615 = vxor.u32 %v909, 2147483648
        %v1616 = vxor.u32 %v1100, 2147483648
        %v1617 = vxor.u32 %v1102, 2147483648
        %v1618 = vmul.f32 %v1490, 1.442695
        %v1619 = vpow.pop %v1618
        %v1620 = vmul.f32 %v1491, 1.442695
        %v1621 = vpow.pop %v1620
        %v1622 = vmul.f32 %v1492, 1.442695
        %v1623 = vpow.pop %v1622
        %v1624 = vmul.f32 %v1493, 1.442695
        %v1625 = vpow.pop %v1624
        %v1626 = vmul.f32 %v1494, 1.442695
        %v1627 = vpow.pop %v1626
        %v1628 = vmul.f32 %v1495, 1.442695
        %v1629 = vpow.pop %v1628
        %v1630 = vmul.f32 %v1496, 1.442695
        %v1631 = vpow.pop %v1630
        %v1632 = vmul.f32 %v1497, 1.442695
        %v1633 = vpow.pop %v1632
        %v1634 = vmul.f32 %v1498, 1.442695
        %v1635 = vpow.pop %v1634
        %v1636 = vmul.f32 %v1499, 1.442695
        %v1637 = vpow.pop %v1636
        %v1638 = vmul.f32 %v1500, 1.442695
        %v1639 = vpow.pop %v1638
        %v1640 = vmul.f32 %v1501, 1.442695
        %v1641 = vpow.pop %v1640
        %v1642 = vmul.f32 %v1502, 1.442695
        %v1643 = vpow.pop %v1642
        %v1644 = vmul.f32 %v1503, 1.442695
        %v1645 = vpow.pop %v1644
        %v1646 = vmul.f32 %v1504, 1.442695
        %v1647 = vpow.pop %v1646
        %v1648 = vmul.f32 %v1505, 1.442695
        %v1649 = vpow.pop %v1648
        %v1650 = vmul.f32 %v1506, 1.442695
        %v1651 = vpow.pop %v1650
        %v1652 = vmul.f32 %v1507, 1.442695
        %v1653 = vpow.pop %v1652
        %v1654 = vmul.f32 %v1508, 1.442695
        %v1655 = vpow.pop %v1654
        %v1656 = vmul.f32 %v1509, 1.442695
        %v1657 = vpow.pop %v1656
        %v1658 = vmul.f32 %v1510, 1.442695
        %v1659 = vpow.pop %v1658
        %v1660 = vmul.f32 %v1511, 1.442695
        %v1661 = vpow.pop %v1660
        %v1662 = vmul.f32 %v1512, 1.442695
        %v1663 = vpow.pop %v1662
        %v1664 = vmul.f32 %v1513, 1.442695
        %v1665 = vpow.pop %v1664
        %v1666 = vmul.f32 %v1514, 1.442695
        %v1667 = vpow.pop %v1666
        %v1668 = vmul.f32 %v1515, 1.442695
        %v1669 = vpow.pop %v1668
        %v1670 = vmul.f32 %v1516, 1.442695
        %v1671 = vpow.pop %v1670
        %v1672 = vmul.f32 %v1517, 1.442695
        %v1673 = vpow.pop %v1672
        %v1674 = vmul.f32 %v1518, 1.442695
        %v1675 = vpow.pop %v1674
        %v1676 = vmul.f32 %v1519, 1.442695
        %v1677 = vpow.pop %v1676
        %v1678 = vmul.f32 %v1520, 1.442695
        %v1679 = vpow.pop %v1678
        %v1680 = vmul.f32 %v1521, 1.442695
        %v1681 = vpow.pop %v1680
        %v1682 = vmul.f32 %v1522, 1.442695
        %v1683 = vpow.pop %v1682
        %v1684 = vmul.f32 %v1523, 1.442695
        %v1685 = vpow.pop %v1684
        %v1686 = vmul.f32 %v1524, 1.442695
        %v1687 = vpow.pop %v1686
        %v1688 = vmul.f32 %v1525, 1.442695
        %v1689 = vpow.pop %v1688
        %v1690 = vmul.f32 %v1526, 1.442695
        %v1691 = vpow.pop %v1690
        %v1692 = vmul.f32 %v1527, 1.442695
        %v1693 = vpow.pop %v1692
        %v1694 = vmul.f32 %v1528, 1.442695
        %v1695 = vpow.pop %v1694
        %v1696 = vmul.f32 %v1529, 1.442695
        %v1697 = vpow.pop %v1696
        %v1698 = vmul.f32 %v1530, 1.442695
        %v1699 = vpow.pop %v1698
        %v1700 = vmul.f32 %v1531, 1.442695
        %v1701 = vpow.pop %v1700
        %v1702 = vmul.f32 %v1532, 1.442695
        %v1703 = vpow.pop %v1702
        %v1704 = vmul.f32 %v1533, 1.442695
        %v1705 = vpow.pop %v1704
        %v1706 = vmul.f32 %v1534, 1.442695
        %v1707 = vpow.pop %v1706
        %v1708 = vmul.f32 %v1535, 1.442695
        %v1709 = vpow.pop %v1708
        %v1710 = vmul.f32 %v1536, 1.442695
        %v1711 = vpow.pop %v1710
        %v1712 = vmul.f32 %v1537, 1.442695
        %v1713 = vpow.pop %v1712
        %v1714 = vmul.f32 %v1538, 1.442695
        %v1715 = vpow.pop %v1714
        %v1716 = vmul.f32 %v1539, 1.442695
        %v1717 = vpow.pop %v1716
        %v1718 = vmul.f32 %v1540, 1.442695
        %v1719 = vpow.pop %v1718
        %v1720 = vmul.f32 %v1541, 1.442695
        %v1721 = vpow.pop %v1720
        %v1722 = vmul.f32 %v1542, 1.442695
        %v1723 = vpow.pop %v1722
        %v1724 = vmul.f32 %v1543, 1.442695
        %v1725 = vpow.pop %v1724
        %v1726 = vmul.f32 %v1544, 1.442695
        %v1727 = vpow.pop %v1726
        %v1728 = vmul.f32 %v1545, 1.442695
        %v1729 = vpow.pop %v1728
        %v1730 = vmul.f32 %v1546, 1.442695
        %v1731 = vpow.pop %v1730
        %v1732 = vmul.f32 %v1547, 1.442695
        %v1733 = vpow.pop %v1732
        %v1734 = vmul.f32 %v1548, 1.442695
        %v1735 = vpow.pop %v1734
        %v1736 = vmul.f32 %v1549, 1.442695
        %v1737 = vpow.pop %v1736
        %v1738 = vmul.f32 %v1550, 1.442695
        %v1739 = vpow.pop %v1738
        %v1740 = vmul.f32 %v1551, 1.442695
        %v1741 = vpow.pop %v1740
        %v1742 = vmul.f32 %v1552, 1.442695
        %v1743 = vpow.pop %v1742
        %v1744 = vmul.f32 %v1553, 1.442695
        %v1745 = vpow.pop %v1744
        %v1746 = vmul.f32 %v1554, 1.442695
        %v1747 = vpow.pop %v1746
        %v1748 = vmul.f32 %v1555, 1.442695
        %v1749 = vpow.pop %v1748
        %v1750 = vmul.f32 %v1556, 1.442695
        %v1751 = vpow.pop %v1750
        %v1752 = vmul.f32 %v1557, 1.442695
        %v1753 = vpow.pop %v1752
        %v1754 = vmul.f32 %v1558, 1.442695
        %v1755 = vpow.pop %v1754
        %v1756 = vmul.f32 %v1559, 1.442695
        %v1757 = vpow.pop %v1756
        %v1758 = vmul.f32 %v1560, 1.442695
        %v1759 = vpow.pop %v1758
        %v1760 = vmul.f32 %v1561, 1.442695
        %v1761 = vpow.pop %v1760
        %v1762 = vmul.f32 %v1562, 1.442695
        %v1763 = vpow.pop %v1762
        %v1764 = vmul.f32 %v1563, 1.442695
        %v1765 = vpow.pop %v1764
        %v1766 = vmul.f32 %v1564, 1.442695
        %v1767 = vpow.pop %v1766
        %v1768 = vmul.f32 %v1565, 1.442695
        %v1769 = vpow.pop %v1768
        %v1770 = vmul.f32 %v1566, 1.442695
        %v1771 = vpow.pop %v1770
        %v1772 = vmul.f32 %v1567, 1.442695
        %v1773 = vpow.pop %v1772
        %v1774 = vmul.f32 %v1568, 1.442695
        %v1775 = vpow.pop %v1774
        %v1776 = vmul.f32 %v1569, 1.442695
        %v1777 = vpow.pop %v1776
        %v1778 = vmul.f32 %v1570, 1.442695
        %v1779 = vpow.pop %v1778
        %v1780 = vmul.f32 %v1571, 1.442695
        %v1781 = vpow.pop %v1780
        %v1782 = vmul.f32 %v1572, 1.442695
        %v1783 = vpow.pop %v1782
        %v1784 = vmul.f32 %v1573, 1.442695
        %v1785 = vpow.pop %v1784
        %v1786 = vmul.f32 %v1574, 1.442695
        %v1787 = vpow.pop %v1786
        %v1788 = vmul.f32 %v1575, 1.442695
        %v1789 = vpow.pop %v1788
        %v1790 = vmul.f32 %v1576, 1.442695
        %v1791 = vpow.pop %v1790
        %v1792 = vmul.f32 %v1577, 1.442695
        %v1793 = vpow.pop %v1792
        %v1794 = vmul.f32 %v1578, 1.442695
        %v1795 = vpow.pop %v1794
        %v1796 = vmul.f32 %v1579, 1.442695
        %v1797 = vpow.pop %v1796
        %v1798 = vmul.f32 %v1580, 1.442695
        %v1799 = vpow.pop %v1798
        %v1800 = vmul.f32 %v1581, 1.442695
        %v1801 = vpow.pop %v1800
        %v1802 = vmul.f32 %v1582, 1.442695
        %v1803 = vpow.pop %v1802
        %v1804 = vmul.f32 %v1583, 1.442695
        %v1805 = vpow.pop %v1804
        %v1806 = vmul.f32 %v1584, 1.442695
        %v1807 = vpow.pop %v1806
        %v1808 = vmul.f32 %v1585, 1.442695
        %v1809 = vpow.pop %v1808
        %v1810 = vmul.f32 %v1586, 1.442695
        %v1811 = vpow.pop %v1810
        %v1812 = vmul.f32 %v1587, 1.442695
        %v1813 = vpow.pop %v1812
        %v1814 = vmul.f32 %v1588, 1.442695
        %v1815 = vpow.pop %v1814
        %v1816 = vmul.f32 %v1589, 1.442695
        %v1817 = vpow.pop %v1816
        %v1818 = vmul.f32 %v1590, 1.442695
        %v1819 = vpow.pop %v1818
        %v1820 = vmul.f32 %v1591, 1.442695
        %v1821 = vpow.pop %v1820
        %v1822 = vmul.f32 %v1592, 1.442695
        %v1823 = vpow.pop %v1822
        %v1824 = vmul.f32 %v1593, 1.442695
        %v1825 = vpow.pop %v1824
        %v1826 = vmul.f32 %v1594, 1.442695
        %v1827 = vpow.pop %v1826
        %v1828 = vmul.f32 %v1595, 1.442695
        %v1829 = vpow.pop %v1828
        %v1830 = vmul.f32 %v1596, 1.442695
        %v1831 = vpow.pop %v1830
        %v1832 = vmul.f32 %v1597, 1.442695
        %v1833 = vpow.pop %v1832
        %v1834 = vmul.f32 %v1598, 1.442695
        %v1835 = vpow.pop %v1834
        %v1836 = vmul.f32 %v1599, 1.442695
        %v1837 = vpow.pop %v1836
        %v1838 = vmul.f32 %v1600, 1.442695
        %v1839 = vpow.pop %v1838
        %v1840 = vmul.f32 %v1601, 1.442695
        %v1841 = vpow.pop %v1840
        %v1842 = vmul.f32 %v1602, 1.442695
        %v1843 = vpow.pop %v1842
        %v1844 = vmul.f32 %v1603, 1.442695
        %v1845 = vpow.pop %v1844
        %v1846 = vmul.f32 %v1604, 1.442695
        %v1847 = vpow.pop %v1846
        %v1848 = vmul.f32 %v1605, 1.442695
        %v1849 = vpow.pop %v1848
        %v1850 = vmul.f32 %v1606, 1.442695
        %v1851 = vpow.pop %v1850
        %v1852 = vmul.f32 %v1607, 1.442695
        %v1853 = vpow.pop %v1852
        %v1854 = vmul.f32 %v1608, 1.442695
        %v1855 = vpow.pop %v1854
        %v1856 = vmul.f32 %v1609, 1.442695
        %v1857 = vpow.pop %v1856
        %v1858 = vmul.f32 %v1610, 1.442695
        %v1859 = vpow.pop %v1858
        %v1860 = vmul.f32 %v1611, 1.442695
        %v1861 = vpow.pop %v1860
        %v1862 = vmul.f32 %v1612, 1.442695
        %v1863 = vpow.pop %v1862
        %v1864 = vmul.f32 %v1613, 1.442695
        %v1865 = vpow.pop %v1864
        %v1866 = vmul.f32 %v1614, 1.442695
        %v1867 = vpow.pop %v1866
        %v1868 = vmul.f32 %v1615, 1.442695
        %v1869 = vpow.pop %v1868
        %v1870 = vmul.f32 %v1616, 1.442695
        %v1871 = vpow.pop %v1870
        %v1872 = vmul.f32 %v1617, 1.442695
        %v1873 = vpow.pop %v1872
        %v1874 = vadd.f32 %v1619, 1.0
        %v1875 = vadd.f32 %v1621, 1.0
        %v1876 = vadd.f32 %v1623, 1.0
        %v1877 = vadd.f32 %v1625, 1.0
        %v1878 = vadd.f32 %v1627, 1.0
        %v1879 = vadd.f32 %v1629, 1.0
        %v1880 = vadd.f32 %v1631, 1.0
        %v1881 = vadd.f32 %v1633, 1.0
        %v1882 = vadd.f32 %v1635, 1.0
        %v1883 = vadd.f32 %v1637, 1.0
        %v1884 = vadd.f32 %v1639, 1.0
        %v1885 = vadd.f32 %v1641, 1.0
        %v1886 = vadd.f32 %v1643, 1.0
        %v1887 = vadd.f32 %v1645, 1.0
        %v1888 = vadd.f32 %v1647, 1.0
        %v1889 = vadd.f32 %v1649, 1.0
        %v1890 = vadd.f32 %v1651, 1.0
        %v1891 = vadd.f32 %v1653, 1.0
        %v1892 = vadd.f32 %v1655, 1.0
        %v1893 = vadd.f32 %v1657, 1.0
        %v1894 = vadd.f32 %v1659, 1.0
        %v1895 = vadd.f32 %v1661, 1.0
        %v1896 = vadd.f32 %v1663, 1.0
        %v1897 = vadd.f32 %v1665, 1.0
        %v1898 = vadd.f32 %v1667, 1.0
        %v1899 = vadd.f32 %v1669, 1.0
        %v1900 = vadd.f32 %v1671, 1.0
        %v1901 = vadd.f32 %v1673, 1.0
        %v1902 = vadd.f32 %v1675, 1.0
        %v1903 = vadd.f32 %v1677, 1.0
        %v1904 = vadd.f32 %v1679, 1.0
        %v1905 = vadd.f32 %v1681, 1.0
        %v1906 = vadd.f32 %v1683, 1.0
        %v1907 = vadd.f32 %v1685, 1.0
        %v1908 = vadd.f32 %v1687, 1.0
        %v1909 = vadd.f32 %v1689, 1.0
        %v1910 = vadd.f32 %v1691, 1.0
        %v1911 = vadd.f32 %v1693, 1.0
        %v1912 = vadd.f32 %v1695, 1.0
        %v1913 = vadd.f32 %v1697, 1.0
        %v1914 = vadd.f32 %v1699, 1.0
        %v1915 = vadd.f32 %v1701, 1.0
        %v1916 = vadd.f32 %v1703, 1.0
        %v1917 = vadd.f32 %v1705, 1.0
        %v1918 = vadd.f32 %v1707, 1.0
        %v1919 = vadd.f32 %v1709, 1.0
        %v1920 = vadd.f32 %v1711, 1.0
        %v1921 = vadd.f32 %v1713, 1.0
        %v1922 = vadd.f32 %v1715, 1.0
        %v1923 = vadd.f32 %v1717, 1.0
        %v1924 = vadd.f32 %v1719, 1.0
        %v1925 = vadd.f32 %v1721, 1.0
        %v1926 = vadd.f32 %v1723, 1.0
        %v1927 = vadd.f32 %v1725, 1.0
        %v1928 = vadd.f32 %v1727, 1.0
        %v1929 = vadd.f32 %v1729, 1.0
        %v1930 = vadd.f32 %v1731, 1.0
        %v1931 = vadd.f32 %v1733, 1.0
        %v1932 = vadd.f32 %v1735, 1.0
        %v1933 = vadd.f32 %v1737, 1.0
        %v1934 = vadd.f32 %v1739, 1.0
        %v1935 = vadd.f32 %v1741, 1.0
        %v1936 = vadd.f32 %v1743, 1.0
        %v1937 = vadd.f32 %v1745, 1.0
        %v1938 = vadd.f32 %v1747, 1.0
        %v1939 = vadd.f32 %v1749, 1.0
        %v1940 = vadd.f32 %v1751, 1.0
        %v1941 = vadd.f32 %v1753, 1.0
        %v1942 = vadd.f32 %v1755, 1.0
        %v1943 = vadd.f32 %v1757, 1.0
        %v1944 = vadd.f32 %v1759, 1.0
        %v1945 = vadd.f32 %v1761, 1.0
        %v1946 = vadd.f32 %v1763, 1.0
        %v1947 = vadd.f32 %v1765, 1.0
        %v1948 = vadd.f32 %v1767, 1.0
        %v1949 = vadd.f32 %v1769, 1.0
        %v1950 = vadd.f32 %v1771, 1.0
        %v1951 = vadd.f32 %v1773, 1.0
        %v1952 = vadd.f32 %v1775, 1.0
        %v1953 = vadd.f32 %v1777, 1.0
        %v1954 = vadd.f32 %v1779, 1.0
        %v1955 = vadd.f32 %v1781, 1.0
        %v1956 = vadd.f32 %v1783, 1.0
        %v1957 = vadd.f32 %v1785, 1.0
        %v1958 = vadd.f32 %v1787, 1.0
        %v1959 = vadd.f32 %v1789, 1.0
        %v1960 = vadd.f32 %v1791, 1.0
        %v1961 = vadd.f32 %v1793, 1.0
        %v1962 = vadd.f32 %v1795, 1.0
        %v1963 = vadd.f32 %v1797, 1.0
        %v1964 = vadd.f32 %v1799, 1.0
        %v1965 = vadd.f32 %v1801, 1.0
        %v1966 = vadd.f32 %v1803, 1.0
        %v1967 = vadd.f32 %v1805, 1.0
        %v1968 = vadd.f32 %v1807, 1.0
        %v1969 = vadd.f32 %v1809, 1.0
        %v1970 = vadd.f32 %v1811, 1.0
        %v1971 = vadd.f32 %v1813, 1.0
        %v1972 = vadd.f32 %v1815, 1.0
        %v1973 = vadd.f32 %v1817, 1.0
        %v1974 = vadd.f32 %v1819, 1.0
        %v1975 = vadd.f32 %v1821, 1.0
        %v1976 = vadd.f32 %v1823, 1.0
        %v1977 = vadd.f32 %v1825, 1.0
        %v1978 = vadd.f32 %v1827, 1.0
        %v1979 = vadd.f32 %v1829, 1.0
        %v1980 = vadd.f32 %v1831, 1.0
        %v1981 = vadd.f32 %v1833, 1.0
        %v1982 = vadd.f32 %v1835, 1.0
        %v1983 = vadd.f32 %v1837, 1.0
        %v1984 = vadd.f32 %v1839, 1.0
        %v1985 = vadd.f32 %v1841, 1.0
        %v1986 = vadd.f32 %v1843, 1.0
        %v1987 = vadd.f32 %v1845, 1.0
        %v1988 = vadd.f32 %v1847, 1.0
        %v1989 = vadd.f32 %v1849, 1.0
        %v1990 = vadd.f32 %v1851, 1.0
        %v1991 = vadd.f32 %v1853, 1.0
        %v1992 = vadd.f32 %v1855, 1.0
        %v1993 = vadd.f32 %v1857, 1.0
        %v1994 = vadd.f32 %v1859, 1.0
        %v1995 = vadd.f32 %v1861, 1.0
        %v1996 = vadd.f32 %v1863, 1.0
        %v1997 = vadd.f32 %v1865, 1.0
        %v1998 = vadd.f32 %v1867, 1.0
        %v1999 = vadd.f32 %v1869, 1.0
        %v2000 = vadd.f32 %v1871, 1.0
        %v2001 = vadd.f32 %v1873, 1.0
        %v2002 = vrcp.pop %v1874
        %v2003 = vmul.f32 1.0, %v2002
        %v2004 = vrcp.pop %v1875
        %v2005 = vmul.f32 1.0, %v2004
        %v2006 = vrcp.pop %v1876
        %v2007 = vmul.f32 1.0, %v2006
        %v2008 = vrcp.pop %v1877
        %v2009 = vmul.f32 1.0, %v2008
        %v2010 = vrcp.pop %v1878
        %v2011 = vmul.f32 1.0, %v2010
        %v2012 = vrcp.pop %v1879
        %v2013 = vmul.f32 1.0, %v2012
        %v2014 = vrcp.pop %v1880
        %v2015 = vmul.f32 1.0, %v2014
        %v2016 = vrcp.pop %v1881
        %v2017 = vmul.f32 1.0, %v2016
        %v2018 = vrcp.pop %v1882
        %v2019 = vmul.f32 1.0, %v2018
        %v2020 = vrcp.pop %v1883
        %v2021 = vmul.f32 1.0, %v2020
        %v2022 = vrcp.pop %v1884
        %v2023 = vmul.f32 1.0, %v2022
        %v2024 = vrcp.pop %v1885
        %v2025 = vmul.f32 1.0, %v2024
        %v2026 = vrcp.pop %v1886
        %v2027 = vmul.f32 1.0, %v2026
        %v2028 = vrcp.pop %v1887
        %v2029 = vmul.f32 1.0, %v2028
        %v2030 = vrcp.pop %v1888
        %v2031 = vmul.f32 1.0, %v2030
        %v2032 = vrcp.pop %v1889
        %v2033 = vmul.f32 1.0, %v2032
        %v2034 = vrcp.pop %v1890
        %v2035 = vmul.f32 1.0, %v2034
        %v2036 = vrcp.pop %v1891
        %v2037 = vmul.f32 1.0, %v2036
        %v2038 = vrcp.pop %v1892
        %v2039 = vmul.f32 1.0, %v2038
        %v2040 = vrcp.pop %v1893
        %v2041 = vmul.f32 1.0, %v2040
        %v2042 = vrcp.pop %v1894
        %v2043 = vmul.f32 1.0, %v2042
        %v2044 = vrcp.pop %v1895
        %v2045 = vmul.f32 1.0, %v2044
        %v2046 = vrcp.pop %v1896
        %v2047 = vmul.f32 1.0, %v2046
        %v2048 = vrcp.pop %v1897
        %v2049 = vmul.f32 1.0, %v2048
        %v2050 = vrcp.pop %v1898
        %v2051 = vmul.f32 1.0, %v2050
        %v2052 = vrcp.pop %v1899
        %v2053 = vmul.f32 1.0, %v2052
        %v2054 = vrcp.pop %v1900
        %v2055 = vmul.f32 1.0, %v2054
        %v2056 = vrcp.pop %v1901
        %v2057 = vmul.f32 1.0, %v2056
        %v2058 = vrcp.pop %v1902
        %v2059 = vmul.f32 1.0, %v2058
        %v2060 = vrcp.pop %v1903
        %v2061 = vmul.f32 1.0, %v2060
        %v2062 = vrcp.pop %v1904
        %v2063 = vmul.f32 1.0, %v2062
        %v2064 = vrcp.pop %v1905
        %v2065 = vmul.f32 1.0, %v2064
        %v2066 = vrcp.pop %v1906
        %v2067 = vmul.f32 1.0, %v2066
        %v2068 = vrcp.pop %v1907
        %v2069 = vmul.f32 1.0, %v2068
        %v2070 = vrcp.pop %v1908
        %v2071 = vmul.f32 1.0, %v2070
        %v2072 = vrcp.pop %v1909
        %v2073 = vmul.f32 1.0, %v2072
        %v2074 = vrcp.pop %v1910
        %v2075 = vmul.f32 1.0, %v2074
        %v2076 = vrcp.pop %v1911
        %v2077 = vmul.f32 1.0, %v2076
        %v2078 = vrcp.pop %v1912
        %v2079 = vmul.f32 1.0, %v2078
        %v2080 = vrcp.pop %v1913
        %v2081 = vmul.f32 1.0, %v2080
        %v2082 = vrcp.pop %v1914
        %v2083 = vmul.f32 1.0, %v2082
        %v2084 = vrcp.pop %v1915
        %v2085 = vmul.f32 1.0, %v2084
        %v2086 = vrcp.pop %v1916
        %v2087 = vmul.f32 1.0, %v2086
        %v2088 = vrcp.pop %v1917
        %v2089 = vmul.f32 1.0, %v2088
        %v2090 = vrcp.pop %v1918
        %v2091 = vmul.f32 1.0, %v2090
        %v2092 = vrcp.pop %v1919
        %v2093 = vmul.f32 1.0, %v2092
        %v2094 = vrcp.pop %v1920
        %v2095 = vmul.f32 1.0, %v2094
        %v2096 = vrcp.pop %v1921
        %v2097 = vmul.f32 1.0, %v2096
        %v2098 = vrcp.pop %v1922
        %v2099 = vmul.f32 1.0, %v2098
        %v2100 = vrcp.pop %v1923
        %v2101 = vmul.f32 1.0, %v2100
        %v2102 = vrcp.pop %v1924
        %v2103 = vmul.f32 1.0, %v2102
        %v2104 = vrcp.pop %v1925
        %v2105 = vmul.f32 1.0, %v2104
        %v2106 = vrcp.pop %v1926
        %v2107 = vmul.f32 1.0, %v2106
        %v2108 = vrcp.pop %v1927
        %v2109 = vmul.f32 1.0, %v2108
        %v2110 = vrcp.pop %v1928
        %v2111 = vmul.f32 1.0, %v2110
        %v2112 = vrcp.pop %v1929
        %v2113 = vmul.f32 1.0, %v2112
        %v2114 = vrcp.pop %v1930
        %v2115 = vmul.f32 1.0, %v2114
        %v2116 = vrcp.pop %v1931
        %v2117 = vmul.f32 1.0, %v2116
        %v2118 = vrcp.pop %v1932
        %v2119 = vmul.f32 1.0, %v2118
        %v2120 = vrcp.pop %v1933
        %v2121 = vmul.f32 1.0, %v2120
        %v2122 = vrcp.pop %v1934
        %v2123 = vmul.f32 1.0, %v2122
        %v2124 = vrcp.pop %v1935
        %v2125 = vmul.f32 1.0, %v2124
        %v2126 = vrcp.pop %v1936
        %v2127 = vmul.f32 1.0, %v2126
        %v2128 = vrcp.pop %v1937
        %v2129 = vmul.f32 1.0, %v2128
        %v2130 = vrcp.pop %v1938
        %v2131 = vmul.f32 1.0, %v2130
        %v2132 = vrcp.pop %v1939
        %v2133 = vmul.f32 1.0, %v2132
        %v2134 = vrcp.pop %v1940
        %v2135 = vmul.f32 1.0, %v2134
        %v2136 = vrcp.pop %v1941
        %v2137 = vmul.f32 1.0, %v2136
        %v2138 = vrcp.pop %v1942
        %v2139 = vmul.f32 1.0, %v2138
        %v2140 = vrcp.pop %v1943
        %v2141 = vmul.f32 1.0, %v2140
        %v2142 = vrcp.pop %v1944
        %v2143 = vmul.f32 1.0, %v2142
        %v2144 = vrcp.pop %v1945
        %v2145 = vmul.f32 1.0, %v2144
        %v2146 = vrcp.pop %v1946
        %v2147 = vmul.f32 1.0, %v2146
        %v2148 = vrcp.pop %v1947
        %v2149 = vmul.f32 1.0, %v2148
        %v2150 = vrcp.pop %v1948
        %v2151 = vmul.f32 1.0, %v2150
        %v2152 = vrcp.pop %v1949
        %v2153 = vmul.f32 1.0, %v2152
        %v2154 = vrcp.pop %v1950
        %v2155 = vmul.f32 1.0, %v2154
        %v2156 = vrcp.pop %v1951
        %v2157 = vmul.f32 1.0, %v2156
        %v2158 = vrcp.pop %v1952
        %v2159 = vmul.f32 1.0, %v2158
        %v2160 = vrcp.pop %v1953
        %v2161 = vmul.f32 1.0, %v2160
        %v2162 = vrcp.pop %v1954
        %v2163 = vmul.f32 1.0, %v2162
        %v2164 = vrcp.pop %v1955
        %v2165 = vmul.f32 1.0, %v2164
        %v2166 = vrcp.pop %v1956
        %v2167 = vmul.f32 1.0, %v2166
        %v2168 = vrcp.pop %v1957
        %v2169 = vmul.f32 1.0, %v2168
        %v2170 = vrcp.pop %v1958
        %v2171 = vmul.f32 1.0, %v2170
        %v2172 = vrcp.pop %v1959
        %v2173 = vmul.f32 1.0, %v2172
        %v2174 = vrcp.pop %v1960
        %v2175 = vmul.f32 1.0, %v2174
        %v2176 = vrcp.pop %v1961
        %v2177 = vmul.f32 1.0, %v2176
        %v2178 = vrcp.pop %v1962
        %v2179 = vmul.f32 1.0, %v2178
        %v2180 = vrcp.pop %v1963
        %v2181 = vmul.f32 1.0, %v2180
        %v2182 = vrcp.pop %v1964
        %v2183 = vmul.f32 1.0, %v2182
        %v2184 = vrcp.pop %v1965
        %v2185 = vmul.f32 1.0, %v2184
        %v2186 = vrcp.pop %v1966
        %v2187 = vmul.f32 1.0, %v2186
        %v2188 = vrcp.pop %v1967
        %v2189 = vmul.f32 1.0, %v2188
        %v2190 = vrcp.pop %v1968
        %v2191 = vmul.f32 1.0, %v2190
        %v2192 = vrcp.pop %v1969
        %v2193 = vmul.f32 1.0, %v2192
        %v2194 = vrcp.pop %v1970
        %v2195 = vmul.f32 1.0, %v2194
        %v2196 = vrcp.pop %v1971
        %v2197 = vmul.f32 1.0, %v2196
        %v2198 = vrcp.pop %v1972
        %v2199 = vmul.f32 1.0, %v2198
        %v2200 = vrcp.pop %v1973
        %v2201 = vmul.f32 1.0, %v2200
        %v2202 = vrcp.pop %v1974
        %v2203 = vmul.f32 1.0, %v2202
        %v2204 = vrcp.pop %v1975
        %v2205 = vmul.f32 1.0, %v2204
        %v2206 = vrcp.pop %v1976
        %v2207 = vmul.f32 1.0, %v2206
        %v2208 = vrcp.pop %v1977
        %v2209 = vmul.f32 1.0, %v2208
        %v2210 = vrcp.pop %v1978
        %v2211 = vmul.f32 1.0, %v2210
        %v2212 = vrcp.pop %v1979
        %v2213 = vmul.f32 1.0, %v2212
        %v2214 = vrcp.pop %v1980
        %v2215 = vmul.f32 1.0, %v2214
        %v2216 = vrcp.pop %v1981
        %v2217 = vmul.f32 1.0, %v2216
        %v2218 = vrcp.pop %v1982
        %v2219 = vmul.f32 1.0, %v2218
        %v2220 = vrcp.pop %v1983
        %v2221 = vmul.f32 1.0, %v2220
        %v2222 = vrcp.pop %v1984
        %v2223 = vmul.f32 1.0, %v2222
        %v2224 = vrcp.pop %v1985
        %v2225 = vmul.f32 1.0, %v2224
        %v2226 = vrcp.pop %v1986
        %v2227 = vmul.f32 1.0, %v2226
        %v2228 = vrcp.pop %v1987
        %v2229 = vmul.f32 1.0, %v2228
        %v2230 = vrcp.pop %v1988
        %v2231 = vmul.f32 1.0, %v2230
        %v2232 = vrcp.pop %v1989
        %v2233 = vmul.f32 1.0, %v2232
        %v2234 = vrcp.pop %v1990
        %v2235 = vmul.f32 1.0, %v2234
        %v2236 = vrcp.pop %v1991
        %v2237 = vmul.f32 1.0, %v2236
        %v2238 = vrcp.pop %v1992
        %v2239 = vmul.f32 1.0, %v2238
        %v2240 = vrcp.pop %v1993
        %v2241 = vmul.f32 1.0, %v2240
        %v2242 = vrcp.pop %v1994
        %v2243 = vmul.f32 1.0, %v2242
        %v2244 = vrcp.pop %v1995
        %v2245 = vmul.f32 1.0, %v2244
        %v2246 = vrcp.pop %v1996
        %v2247 = vmul.f32 1.0, %v2246
        %v2248 = vrcp.pop %v1997
        %v2249 = vmul.f32 1.0, %v2248
        %v2250 = vrcp.pop %v1998
        %v2251 = vmul.f32 1.0, %v2250
        %v2252 = vrcp.pop %v1999
        %v2253 = vmul.f32 1.0, %v2252
        %v2254 = vrcp.pop %v2000
        %v2255 = vmul.f32 1.0, %v2254
        %v2256 = vrcp.pop %v2001
        %v2257 = vmul.f32 1.0, %v2256
        %v2258 = vmul.f32 %v753, %v2003
        %v2259 = vmul.f32 %v755, %v2005
        %v2260 = vmul.f32 %v946, %v2007
        %v2261 = vmul.f32 %v948, %v2009
        %v2262 = vmul.f32 %v757, %v2011
        %v2263 = vmul.f32 %v759, %v2013
        %v2264 = vmul.f32 %v950, %v2015
        %v2265 = vmul.f32 %v952, %v2017
        %v2266 = vmul.f32 %v763, %v2019
        %v2267 = vmul.f32 %v765, %v2021
        %v2268 = vmul.f32 %v956, %v2023
        %v2269 = vmul.f32 %v958, %v2025
        %v2270 = vmul.f32 %v767, %v2027
        %v2271 = vmul.f32 %v769, %v2029
        %v2272 = vmul.f32 %v960, %v2031
        %v2273 = vmul.f32 %v962, %v2033
        %v2274 = vmul.f32 %v773, %v2035
        %v2275 = vmul.f32 %v775, %v2037
        %v2276 = vmul.f32 %v966, %v2039
        %v2277 = vmul.f32 %v968, %v2041
        %v2278 = vmul.f32 %v777, %v2043
        %v2279 = vmul.f32 %v779, %v2045
        %v2280 = vmul.f32 %v970, %v2047
        %v2281 = vmul.f32 %v972, %v2049
        %v2282 = vmul.f32 %v783, %v2051
        %v2283 = vmul.f32 %v785, %v2053
        %v2284 = vmul.f32 %v976, %v2055
        %v2285 = vmul.f32 %v978, %v2057
        %v2286 = vmul.f32 %v787, %v2059
        %v2287 = vmul.f32 %v789, %v2061
        %v2288 = vmul.f32 %v980, %v2063
        %v2289 = vmul.f32 %v982, %v2065
        %v2290 = vmul.f32 %v793, %v2067
        %v2291 = vmul.f32 %v795, %v2069
        %v2292 = vmul.f32 %v986, %v2071
        %v2293 = vmul.f32 %v988, %v2073
        %v2294 = vmul.f32 %v797, %v2075
        %v2295 = vmul.f32 %v799, %v2077
        %v2296 = vmul.f32 %v990, %v2079
        %v2297 = vmul.f32 %v992, %v2081
        %v2298 = vmul.f32 %v803, %v2083
        %v2299 = vmul.f32 %v805, %v2085
        %v2300 = vmul.f32 %v996, %v2087
        %v2301 = vmul.f32 %v998, %v2089
        %v2302 = vmul.f32 %v807, %v2091
        %v2303 = vmul.f32 %v809, %v2093
        %v2304 = vmul.f32 %v1000, %v2095
        %v2305 = vmul.f32 %v1002, %v2097
        %v2306 = vmul.f32 %v813, %v2099
        %v2307 = vmul.f32 %v815, %v2101
        %v2308 = vmul.f32 %v1006, %v2103
        %v2309 = vmul.f32 %v1008, %v2105
        %v2310 = vmul.f32 %v817, %v2107
        %v2311 = vmul.f32 %v819, %v2109
        %v2312 = vmul.f32 %v1010, %v2111
        %v2313 = vmul.f32 %v1012, %v2113
        %v2314 = vmul.f32 %v823, %v2115
        %v2315 = vmul.f32 %v825, %v2117
        %v2316 = vmul.f32 %v1016, %v2119
        %v2317 = vmul.f32 %v1018, %v2121
        %v2318 = vmul.f32 %v827, %v2123
        %v2319 = vmul.f32 %v829, %v2125
        %v2320 = vmul.f32 %v1020, %v2127
        %v2321 = vmul.f32 %v1022, %v2129
        %v2322 = vmul.f32 %v833, %v2131
        %v2323 = vmul.f32 %v835, %v2133
        %v2324 = vmul.f32 %v1026, %v2135
        %v2325 = vmul.f32 %v1028, %v2137
        %v2326 = vmul.f32 %v837, %v2139
        %v2327 = vmul.f32 %v839, %v2141
        %v2328 = vmul.f32 %v1030, %v2143
        %v2329 = vmul.f32 %v1032, %v2145
        %v2330 = vmul.f32 %v843, %v2147
        %v2331 = vmul.f32 %v845, %v2149
        %v2332 = vmul.f32 %v1036, %v2151
        %v2333 = vmul.f32 %v1038, %v2153
        %v2334 = vmul.f32 %v847, %v2155
        %v2335 = vmul.f32 %v849, %v2157
        %v2336 = vmul.f32 %v1040, %v2159
        %v2337 = vmul.f32 %v1042, %v2161
        %v2338 = vmul.f32 %v853, %v2163
        %v2339 = vmul.f32 %v855, %v2165
        %v2340 = vmul.f32 %v1046, %v2167
        %v2341 = vmul.f32 %v1048, %v2169
        %v2342 = vmul.f32 %v857, %v2171
        %v2343 = vmul.f32 %v859, %v2173
        %v2344 = vmul.f32 %v1050, %v2175
        %v2345 = vmul.f32 %v1052, %v2177
        %v2346 = vmul.f32 %v863, %v2179
        %v2347 = vmul.f32 %v865, %v2181
        %v2348 = vmul.f32 %v1056, %v2183
        %v2349 = vmul.f32 %v1058, %v2185
        %v2350 = vmul.f32 %v867, %v2187
        %v2351 = vmul.f32 %v869, %v2189
        %v2352 = vmul.f32 %v1060, %v2191
        %v2353 = vmul.f32 %v1062, %v2193
        %v2354 = vmul.f32 %v873, %v2195
        %v2355 = vmul.f32 %v875, %v2197
        %v2356 = vmul.f32 %v1066, %v2199
        %v2357 = vmul.f32 %v1068, %v2201
        %v2358 = vmul.f32 %v877, %v2203
        %v2359 = vmul.f32 %v879, %v2205
        %v2360 = vmul.f32 %v1070, %v2207
        %v2361 = vmul.f32 %v1072, %v2209
        %v2362 = vmul.f32 %v883, %v2211
        %v2363 = vmul.f32 %v885, %v2213
        %v2364 = vmul.f32 %v1076, %v2215
        %v2365 = vmul.f32 %v1078, %v2217
        %v2366 = vmul.f32 %v887, %v2219
        %v2367 = vmul.f32 %v889, %v2221
        %v2368 = vmul.f32 %v1080, %v2223
        %v2369 = vmul.f32 %v1082, %v2225
        %v2370 = vmul.f32 %v893, %v2227
        %v2371 = vmul.f32 %v895, %v2229
        %v2372 = vmul.f32 %v1086, %v2231
        %v2373 = vmul.f32 %v1088, %v2233
        %v2374 = vmul.f32 %v897, %v2235
        %v2375 = vmul.f32 %v899, %v2237
        %v2376 = vmul.f32 %v1090, %v2239
        %v2377 = vmul.f32 %v1092, %v2241
        %v2378 = vmul.f32 %v903, %v2243
        %v2379 = vmul.f32 %v905, %v2245
        %v2380 = vmul.f32 %v1096, %v2247
        %v2381 = vmul.f32 %v1098, %v2249
        %v2382 = vmul.f32 %v907, %v2251
        %v2383 = vmul.f32 %v909, %v2253
        %v2384 = vmul.f32 %v1100, %v2255
        %v2385 = vmul.f32 %v1102, %v2257
        %v2386 = vmul.f32 %v2258, %v1139
        %v2387 = vmul.f32 %v2259, %v1141
        %v2388 = vmul.f32 %v2260, %v1332
        %v2389 = vmul.f32 %v2261, %v1334
        %v2390 = vmul.f32 %v2262, %v1143
        %v2391 = vmul.f32 %v2263, %v1145
        %v2392 = vmul.f32 %v2264, %v1336
        %v2393 = vmul.f32 %v2265, %v1338
        %v2394 = vmul.f32 %v2266, %v1149
        %v2395 = vmul.f32 %v2267, %v1151
        %v2396 = vmul.f32 %v2268, %v1342
        %v2397 = vmul.f32 %v2269, %v1344
        %v2398 = vmul.f32 %v2270, %v1153
        %v2399 = vmul.f32 %v2271, %v1155
        %v2400 = vmul.f32 %v2272, %v1346
        %v2401 = vmul.f32 %v2273, %v1348
        %v2402 = vmul.f32 %v2274, %v1159
        %v2403 = vmul.f32 %v2275, %v1161
        %v2404 = vmul.f32 %v2276, %v1352
        %v2405 = vmul.f32 %v2277, %v1354
        %v2406 = vmul.f32 %v2278, %v1163
        %v2407 = vmul.f32 %v2279, %v1165
        %v2408 = vmul.f32 %v2280, %v1356
        %v2409 = vmul.f32 %v2281, %v1358
        %v2410 = vmul.f32 %v2282, %v1169
        %v2411 = vmul.f32 %v2283, %v1171
        %v2412 = vmul.f32 %v2284, %v1362
        %v2413 = vmul.f32 %v2285, %v1364
        %v2414 = vmul.f32 %v2286, %v1173
        %v2415 = vmul.f32 %v2287, %v1175
        %v2416 = vmul.f32 %v2288, %v1366
        %v2417 = vmul.f32 %v2289, %v1368
        %v2418 = vmul.f32 %v2290, %v1179
        %v2419 = vmul.f32 %v2291, %v1181
        %v2420 = vmul.f32 %v2292, %v1372
        %v2421 = vmul.f32 %v2293, %v1374
        %v2422 = vmul.f32 %v2294, %v1183
        %v2423 = vmul.f32 %v2295, %v1185
        %v2424 = vmul.f32 %v2296, %v1376
        %v2425 = vmul.f32 %v2297, %v1378
        %v2426 = vmul.f32 %v2298, %v1189
        %v2427 = vmul.f32 %v2299, %v1191
        %v2428 = vmul.f32 %v2300, %v1382
        %v2429 = vmul.f32 %v2301, %v1384
        %v2430 = vmul.f32 %v2302, %v1193
        %v2431 = vmul.f32 %v2303, %v1195
        %v2432 = vmul.f32 %v2304, %v1386
        %v2433 = vmul.f32 %v2305, %v1388
        %v2434 = vmul.f32 %v2306, %v1199
        %v2435 = vmul.f32 %v2307, %v1201
        %v2436 = vmul.f32 %v2308, %v1392
        %v2437 = vmul.f32 %v2309, %v1394
        %v2438 = vmul.f32 %v2310, %v1203
        %v2439 = vmul.f32 %v2311, %v1205
        %v2440 = vmul.f32 %v2312, %v1396
        %v2441 = vmul.f32 %v2313, %v1398
        %v2442 = vmul.f32 %v2314, %v1209
        %v2443 = vmul.f32 %v2315, %v1211
        %v2444 = vmul.f32 %v2316, %v1402
        %v2445 = vmul.f32 %v2317, %v1404
        %v2446 = vmul.f32 %v2318, %v1213
        %v2447 = vmul.f32 %v2319, %v1215
        %v2448 = vmul.f32 %v2320, %v1406
        %v2449 = vmul.f32 %v2321, %v1408
        %v2450 = vmul.f32 %v2322, %v1219
        %v2451 = vmul.f32 %v2323, %v1221
        %v2452 = vmul.f32 %v2324, %v1412
        %v2453 = vmul.f32 %v2325, %v1414
        %v2454 = vmul.f32 %v2326, %v1223
        %v2455 = vmul.f32 %v2327, %v1225
        %v2456 = vmul.f32 %v2328, %v1416
        %v2457 = vmul.f32 %v2329, %v1418
        %v2458 = vmul.f32 %v2330, %v1229
        %v2459 = vmul.f32 %v2331, %v1231
        %v2460 = vmul.f32 %v2332, %v1422
        %v2461 = vmul.f32 %v2333, %v1424
        %v2462 = vmul.f32 %v2334, %v1233
        %v2463 = vmul.f32 %v2335, %v1235
        %v2464 = vmul.f32 %v2336, %v1426
        %v2465 = vmul.f32 %v2337, %v1428
        %v2466 = vmul.f32 %v2338, %v1239
        %v2467 = vmul.f32 %v2339, %v1241
        %v2468 = vmul.f32 %v2340, %v1432
        %v2469 = vmul.f32 %v2341, %v1434
        %v2470 = vmul.f32 %v2342, %v1243
        %v2471 = vmul.f32 %v2343, %v1245
        %v2472 = vmul.f32 %v2344, %v1436
        %v2473 = vmul.f32 %v2345, %v1438
        %v2474 = vmul.f32 %v2346, %v1249
        %v2475 = vmul.f32 %v2347, %v1251
        %v2476 = vmul.f32 %v2348, %v1442
        %v2477 = vmul.f32 %v2349, %v1444
        %v2478 = vmul.f32 %v2350, %v1253
        %v2479 = vmul.f32 %v2351, %v1255
        %v2480 = vmul.f32 %v2352, %v1446
        %v2481 = vmul.f32 %v2353, %v1448
        %v2482 = vmul.f32 %v2354, %v1259
        %v2483 = vmul.f32 %v2355, %v1261
        %v2484 = vmul.f32 %v2356, %v1452
        %v2485 = vmul.f32 %v2357, %v1454
        %v2486 = vmul.f32 %v2358, %v1263
        %v2487 = vmul.f32 %v2359, %v1265
        %v2488 = vmul.f32 %v2360, %v1456
        %v2489 = vmul.f32 %v2361, %v1458
        %v2490 = vmul.f32 %v2362, %v1269
        %v2491 = vmul.f32 %v2363, %v1271
        %v2492 = vmul.f32 %v2364, %v1462
        %v2493 = vmul.f32 %v2365, %v1464
        %v2494 = vmul.f32 %v2366, %v1273
        %v2495 = vmul.f32 %v2367, %v1275
        %v2496 = vmul.f32 %v2368, %v1466
        %v2497 = vmul.f32 %v2369, %v1468
        %v2498 = vmul.f32 %v2370, %v1279
        %v2499 = vmul.f32 %v2371, %v1281
        %v2500 = vmul.f32 %v2372, %v1472
        %v2501 = vmul.f32 %v2373, %v1474
        %v2502 = vmul.f32 %v2374, %v1283
        %v2503 = vmul.f32 %v2375, %v1285
        %v2504 = vmul.f32 %v2376, %v1476
        %v2505 = vmul.f32 %v2377, %v1478
        %v2506 = vmul.f32 %v2378, %v1289
        %v2507 = vmul.f32 %v2379, %v1291
        %v2508 = vmul.f32 %v2380, %v1482
        %v2509 = vmul.f32 %v2381, %v1484
        %v2510 = vmul.f32 %v2382, %v1293
        %v2511 = vmul.f32 %v2383, %v1295
        %v2512 = vmul.f32 %v2384, %v1486
        %v2513 = vmul.f32 %v2385, %v1488
        %v2514 = vld [vmem:[#allocation2] sm:$0xff]
        %v2515 = vld [vmem:[#allocation2 + $0x8] sm:$0xff]
        %v2516 = vld [vmem:[#allocation2 + $0x10] sm:$0xff]
        %v2517 = vld [vmem:[#allocation2 + $0x18] sm:$0xff]
        %v2518 = vld [vmem:[#allocation2 + $0x20] sm:$0xff]
        %v2519 = vld [vmem:[#allocation2 + $0x28] sm:$0xff]
        %v2520 = vld [vmem:[#allocation2 + $0x30] sm:$0xff]
        %v2521 = vld [vmem:[#allocation2 + $0x38] sm:$0xff]
        %v2522 = vld [vmem:[#allocation2 + $0x40] sm:$0xff]
        %v2523 = vld [vmem:[#allocation2 + $0x48] sm:$0xff]
        %v2524 = vld [vmem:[#allocation2 + $0x50] sm:$0xff]
        %v2525 = vld [vmem:[#allocation2 + $0x58] sm:$0xff]
        %v2526 = vld [vmem:[#allocation2 + $0x60] sm:$0xff]
        %v2527 = vld [vmem:[#allocation2 + $0x68] sm:$0xff]
        %v2528 = vld [vmem:[#allocation2 + $0x70] sm:$0xff]
        %v2529 = vld [vmem:[#allocation2 + $0x78] sm:$0xff]
        %v2530 = vld [vmem:[#allocation2 + $0x80] sm:$0xff]
        %v2531 = vld [vmem:[#allocation2 + $0x88] sm:$0xff]
        %v2532 = vld [vmem:[#allocation2 + $0x90] sm:$0xff]
        %v2533 = vld [vmem:[#allocation2 + $0x98] sm:$0xff]
        %v2534 = vld [vmem:[#allocation2 + $0xa0] sm:$0xff]
        %v2535 = vld [vmem:[#allocation2 + $0xa8] sm:$0xff]
        %v2536 = vld [vmem:[#allocation2 + $0xb0] sm:$0xff]
        %v2537 = vld [vmem:[#allocation2 + $0xb8] sm:$0xff]
        %v2538 = vld [vmem:[#allocation2 + $0xc0] sm:$0xff]
        %v2539 = vld [vmem:[#allocation2 + $0xc8] sm:$0xff]
        %v2540 = vld [vmem:[#allocation2 + $0xd0] sm:$0xff]
        %v2541 = vld [vmem:[#allocation2 + $0xd8] sm:$0xff]
        %v2542 = vld [vmem:[#allocation2 + $0xe0] sm:$0xff]
        %v2543 = vld [vmem:[#allocation2 + $0xe8] sm:$0xff]
        %v2544 = vld [vmem:[#allocation2 + $0xf0] sm:$0xff]
        %v2545 = vld [vmem:[#allocation2 + $0xf8] sm:$0xff]
        %v2546 = vpack.c.bf16 %v2390, %v2386
        %v2547 = vpack.c.bf16 %v2391, %v2387
        %v2548 = vpack.c.bf16 %v2392, %v2388
        %v2549 = vpack.c.bf16 %v2393, %v2389
        %v2550 = vpack.c.bf16 %v2398, %v2394
        %v2551 = vpack.c.bf16 %v2399, %v2395
        %v2552 = vpack.c.bf16 %v2400, %v2396
        %v2553 = vpack.c.bf16 %v2401, %v2397
        %v2554 = vpack.c.bf16 %v2406, %v2402
        %v2555 = vpack.c.bf16 %v2407, %v2403
        %v2556 = vpack.c.bf16 %v2408, %v2404
        %v2557 = vpack.c.bf16 %v2409, %v2405
        %v2558 = vpack.c.bf16 %v2414, %v2410
        %v2559 = vpack.c.bf16 %v2415, %v2411
        %v2560 = vpack.c.bf16 %v2416, %v2412
        %v2561 = vpack.c.bf16 %v2417, %v2413
        %v2562 = vpack.c.bf16 %v2422, %v2418
        %v2563 = vpack.c.bf16 %v2423, %v2419
        %v2564 = vpack.c.bf16 %v2424, %v2420
        %v2565 = vpack.c.bf16 %v2425, %v2421
        %v2566 = vpack.c.bf16 %v2430, %v2426
        %v2567 = vpack.c.bf16 %v2431, %v2427
        %v2568 = vpack.c.bf16 %v2432, %v2428
        %v2569 = vpack.c.bf16 %v2433, %v2429
        %v2570 = vpack.c.bf16 %v2438, %v2434
        %v2571 = vpack.c.bf16 %v2439, %v2435
        %v2572 = vpack.c.bf16 %v2440, %v2436
        %v2573 = vpack.c.bf16 %v2441, %v2437
        %v2574 = vpack.c.bf16 %v2446, %v2442
        %v2575 = vpack.c.bf16 %v2447, %v2443
        %v2576 = vpack.c.bf16 %v2448, %v2444
        %v2577 = vpack.c.bf16 %v2449, %v2445
        %v2578 = vpack.c.bf16 %v2454, %v2450
        %v2579 = vpack.c.bf16 %v2455, %v2451
        %v2580 = vpack.c.bf16 %v2456, %v2452
        %v2581 = vpack.c.bf16 %v2457, %v2453
        %v2582 = vpack.c.bf16 %v2462, %v2458
        %v2583 = vpack.c.bf16 %v2463, %v2459
        %v2584 = vpack.c.bf16 %v2464, %v2460
        %v2585 = vpack.c.bf16 %v2465, %v2461
        %v2586 = vpack.c.bf16 %v2470, %v2466
        %v2587 = vpack.c.bf16 %v2471, %v2467
        %v2588 = vpack.c.bf16 %v2472, %v2468
        %v2589 = vpack.c.bf16 %v2473, %v2469
        %v2590 = vpack.c.bf16 %v2478, %v2474
        %v2591 = vpack.c.bf16 %v2479, %v2475
        %v2592 = vpack.c.bf16 %v2480, %v2476
        %v2593 = vpack.c.bf16 %v2481, %v2477
        %v2594 = vpack.c.bf16 %v2486, %v2482
        %v2595 = vpack.c.bf16 %v2487, %v2483
        %v2596 = vpack.c.bf16 %v2488, %v2484
        %v2597 = vpack.c.bf16 %v2489, %v2485
        %v2598 = vpack.c.bf16 %v2494, %v2490
        %v2599 = vpack.c.bf16 %v2495, %v2491
        %v2600 = vpack.c.bf16 %v2496, %v2492
        %v2601 = vpack.c.bf16 %v2497, %v2493
        %v2602 = vpack.c.bf16 %v2502, %v2498
        %v2603 = vpack.c.bf16 %v2503, %v2499
        %v2604 = vpack.c.bf16 %v2504, %v2500
        %v2605 = vpack.c.bf16 %v2505, %v2501
        %v2606 = vpack.c.bf16 %v2510, %v2506
        %v2607 = vpack.c.bf16 %v2511, %v2507
        %v2608 = vpack.c.bf16 %v2512, %v2508
        %v2609 = vpack.c.bf16 %v2513, %v2509
        %v2610 = vld [vmem:[#allocation8] sm:$0xf]
        %v2611 = vld [vmem:[#allocation8 + $0x4] sm:$0xf]
        %v2612 = vld [vmem:[#allocation8 + $0x8] sm:$0xf]
        %v2613 = vld [vmem:[#allocation8 + $0xc] sm:$0xf]
        %v2614 = vld [vmem:[#allocation8 + $0x10] sm:$0xf]
        %v2615 = vld [vmem:[#allocation8 + $0x14] sm:$0xf]
        %v2616 = vld [vmem:[#allocation8 + $0x18] sm:$0xf]
        %v2617 = vld [vmem:[#allocation8 + $0x1c] sm:$0xf]
        %v2618 = vld [vmem:[#allocation8 + $0x20] sm:$0xf]
        %v2619 = vld [vmem:[#allocation8 + $0x24] sm:$0xf]
        %v2620 = vld [vmem:[#allocation8 + $0x28] sm:$0xf]
        %v2621 = vld [vmem:[#allocation8 + $0x2c] sm:$0xf]
        %v2622 = vld [vmem:[#allocation8 + $0x30] sm:$0xf]
        %v2623 = vld [vmem:[#allocation8 + $0x34] sm:$0xf]
        %v2624 = vld [vmem:[#allocation8 + $0x38] sm:$0xf]
        %v2625 = vld [vmem:[#allocation8 + $0x3c] sm:$0xf]
        %v2626 = vld [vmem:[#allocation8 + $0x40] sm:$0xf]
        %v2627 = vld [vmem:[#allocation8 + $0x44] sm:$0xf]
        %v2628 = vld [vmem:[#allocation8 + $0x48] sm:$0xf]
        %v2629 = vld [vmem:[#allocation8 + $0x4c] sm:$0xf]
        %v2630 = vld [vmem:[#allocation8 + $0x50] sm:$0xf]
        %v2631 = vld [vmem:[#allocation8 + $0x54] sm:$0xf]
        %v2632 = vld [vmem:[#allocation8 + $0x58] sm:$0xf]
        %v2633 = vld [vmem:[#allocation8 + $0x5c] sm:$0xf]
        %v2634 = vld [vmem:[#allocation8 + $0x60] sm:$0xf]
        %v2635 = vld [vmem:[#allocation8 + $0x64] sm:$0xf]
        %v2636 = vld [vmem:[#allocation8 + $0x68] sm:$0xf]
        %v2637 = vld [vmem:[#allocation8 + $0x6c] sm:$0xf]
        %v2638 = vld [vmem:[#allocation8 + $0x70] sm:$0xf]
        %v2639 = vld [vmem:[#allocation8 + $0x74] sm:$0xf]
        %v2640 = vld [vmem:[#allocation8 + $0x78] sm:$0xf]
        %v2641 = vld [vmem:[#allocation8 + $0x7c] sm:$0xf]
        %v2642 = vld [vmem:[#allocation8 + $0x80] sm:$0xf]
        %v2643 = vld [vmem:[#allocation8 + $0x84] sm:$0xf]
        %v2644 = vld [vmem:[#allocation8 + $0x88] sm:$0xf]
        %v2645 = vld [vmem:[#allocation8 + $0x8c] sm:$0xf]
        %v2646 = vld [vmem:[#allocation8 + $0x90] sm:$0xf]
        %v2647 = vld [vmem:[#allocation8 + $0x94] sm:$0xf]
        %v2648 = vld [vmem:[#allocation8 + $0x98] sm:$0xf]
        %v2649 = vld [vmem:[#allocation8 + $0x9c] sm:$0xf]
        %v2650 = vld [vmem:[#allocation8 + $0xa0] sm:$0xf]
        %v2651 = vld [vmem:[#allocation8 + $0xa4] sm:$0xf]
        %v2652 = vld [vmem:[#allocation8 + $0xa8] sm:$0xf]
        %v2653 = vld [vmem:[#allocation8 + $0xac] sm:$0xf]
        %v2654 = vld [vmem:[#allocation8 + $0xb0] sm:$0xf]
        %v2655 = vld [vmem:[#allocation8 + $0xb4] sm:$0xf]
        %v2656 = vld [vmem:[#allocation8 + $0xb8] sm:$0xf]
        %v2657 = vld [vmem:[#allocation8 + $0xbc] sm:$0xf]
        %v2658 = vld [vmem:[#allocation8 + $0xc0] sm:$0xf]
        %v2659 = vld [vmem:[#allocation8 + $0xc4] sm:$0xf]
        %v2660 = vld [vmem:[#allocation8 + $0xc8] sm:$0xf]
        %v2661 = vld [vmem:[#allocation8 + $0xcc] sm:$0xf]
        %v2662 = vld [vmem:[#allocation8 + $0xd0] sm:$0xf]
        %v2663 = vld [vmem:[#allocation8 + $0xd4] sm:$0xf]
        %v2664 = vld [vmem:[#allocation8 + $0xd8] sm:$0xf]
        %v2665 = vld [vmem:[#allocation8 + $0xdc] sm:$0xf]
        %v2666 = vld [vmem:[#allocation8 + $0xe0] sm:$0xf]
        %v2667 = vld [vmem:[#allocation8 + $0xe4] sm:$0xf]
        %v2668 = vld [vmem:[#allocation8 + $0xe8] sm:$0xf]
        %v2669 = vld [vmem:[#allocation8 + $0xec] sm:$0xf]
        %v2670 = vld [vmem:[#allocation8 + $0xf0] sm:$0xf]
        %v2671 = vld [vmem:[#allocation8 + $0xf4] sm:$0xf]
        %v2672 = vld [vmem:[#allocation8 + $0xf8] sm:$0xf]
        %v2673 = vld [vmem:[#allocation8 + $0xfc] sm:$0xf]
        %v2738 = vunpack.c.l.b16 %v2610
        %v2739 = vunpack.c.l.b16 %v2611
        %v2740 = vunpack.c.l.b16 %v2612
        %v2741 = vunpack.c.l.b16 %v2613
        %v2742 = vunpack.c.l.b16 %v2614
        %v2743 = vunpack.c.l.b16 %v2615
        %v2744 = vunpack.c.l.b16 %v2616
        %v2745 = vunpack.c.l.b16 %v2617
        %v2746 = vunpack.c.l.b16 %v2618
        %v2747 = vunpack.c.l.b16 %v2619
        %v2748 = vunpack.c.l.b16 %v2620
        %v2749 = vunpack.c.l.b16 %v2621
        %v2750 = vunpack.c.l.b16 %v2622
        %v2751 = vunpack.c.l.b16 %v2623
        %v2752 = vunpack.c.l.b16 %v2624
        %v2753 = vunpack.c.l.b16 %v2625
        %v2754 = vunpack.c.l.b16 %v2626
        %v2755 = vunpack.c.l.b16 %v2627
        %v2756 = vunpack.c.l.b16 %v2628
        %v2757 = vunpack.c.l.b16 %v2629
        %v2758 = vunpack.c.l.b16 %v2630
        %v2759 = vunpack.c.l.b16 %v2631
        %v2760 = vunpack.c.l.b16 %v2632
        %v2761 = vunpack.c.l.b16 %v2633
        %v2762 = vunpack.c.l.b16 %v2634
        %v2763 = vunpack.c.l.b16 %v2635
        %v2764 = vunpack.c.l.b16 %v2636
        %v2765 = vunpack.c.l.b16 %v2637
        %v2766 = vunpack.c.l.b16 %v2638
        %v2767 = vunpack.c.l.b16 %v2639
        %v2768 = vunpack.c.l.b16 %v2640
        %v2769 = vunpack.c.l.b16 %v2641
        %v2770 = vunpack.c.l.b16 %v2642
        %v2771 = vunpack.c.l.b16 %v2643
        %v2772 = vunpack.c.l.b16 %v2644
        %v2773 = vunpack.c.l.b16 %v2645
        %v2774 = vunpack.c.l.b16 %v2646
        %v2775 = vunpack.c.l.b16 %v2647
        %v2776 = vunpack.c.l.b16 %v2648
        %v2777 = vunpack.c.l.b16 %v2649
        %v2778 = vunpack.c.l.b16 %v2650
        %v2779 = vunpack.c.l.b16 %v2651
        %v2780 = vunpack.c.l.b16 %v2652
        %v2781 = vunpack.c.l.b16 %v2653
        %v2782 = vunpack.c.l.b16 %v2654
        %v2783 = vunpack.c.l.b16 %v2655
        %v2784 = vunpack.c.l.b16 %v2656
        %v2785 = vunpack.c.l.b16 %v2657
        %v2786 = vunpack.c.l.b16 %v2658
        %v2787 = vunpack.c.l.b16 %v2659
        %v2788 = vunpack.c.l.b16 %v2660
        %v2789 = vunpack.c.l.b16 %v2661
        %v2790 = vunpack.c.l.b16 %v2662
        %v2791 = vunpack.c.l.b16 %v2663
        %v2792 = vunpack.c.l.b16 %v2664
        %v2793 = vunpack.c.l.b16 %v2665
        %v2794 = vunpack.c.l.b16 %v2666
        %v2795 = vunpack.c.l.b16 %v2667
        %v2796 = vunpack.c.l.b16 %v2668
        %v2797 = vunpack.c.l.b16 %v2669
        %v2798 = vunpack.c.l.b16 %v2670
        %v2799 = vunpack.c.l.b16 %v2671
        %v2800 = vunpack.c.l.b16 %v2672
        %v2801 = vunpack.c.l.b16 %v2673
        %v2802 = vpack.c.b16 %v2739, %v2738
        %v2803 = vpack.c.b16 %v2741, %v2740
        %v2804 = vpack.c.b16 %v2743, %v2742
        %v2805 = vpack.c.b16 %v2745, %v2744
        %v2806 = vpack.c.b16 %v2747, %v2746
        %v2807 = vpack.c.b16 %v2749, %v2748
        %v2808 = vpack.c.b16 %v2751, %v2750
        %v2809 = vpack.c.b16 %v2753, %v2752
        %v2810 = vpack.c.b16 %v2755, %v2754
        %v2811 = vpack.c.b16 %v2757, %v2756
        %v2812 = vpack.c.b16 %v2759, %v2758
        %v2813 = vpack.c.b16 %v2761, %v2760
        %v2814 = vpack.c.b16 %v2763, %v2762
        %v2815 = vpack.c.b16 %v2765, %v2764
        %v2816 = vpack.c.b16 %v2767, %v2766
        %v2817 = vpack.c.b16 %v2769, %v2768
        %v2818 = vpack.c.b16 %v2771, %v2770
        %v2819 = vpack.c.b16 %v2773, %v2772
        %v2820 = vpack.c.b16 %v2775, %v2774
        %v2821 = vpack.c.b16 %v2777, %v2776
        %v2822 = vpack.c.b16 %v2779, %v2778
        %v2823 = vpack.c.b16 %v2781, %v2780
        %v2824 = vpack.c.b16 %v2783, %v2782
        %v2825 = vpack.c.b16 %v2785, %v2784
        %v2826 = vpack.c.b16 %v2787, %v2786
        %v2827 = vpack.c.b16 %v2789, %v2788
        %v2828 = vpack.c.b16 %v2791, %v2790
        %v2829 = vpack.c.b16 %v2793, %v2792
        %v2830 = vpack.c.b16 %v2795, %v2794
        %v2831 = vpack.c.b16 %v2797, %v2796
        %v2832 = vpack.c.b16 %v2799, %v2798
        %v2833 = vpack.c.b16 %v2801, %v2800
        %2866 = vmatprep.subr.bf16.mxu0 0
        %2867 = vmatpush1.bf16.msra.mxu0 %v2809
        %2868 = vmatprep.subr.bf16.mxu0 0
        %2869 = vmatpush1.bf16.msra.mxu0 %v2808
        %2870 = vmatprep.subr.bf16.mxu0 0
        %2871 = vmatpush1.bf16.msra.mxu0 %v2807
        %2872 = vmatprep.subr.bf16.mxu0 0
        %2873 = vmatpush1.bf16.msra.mxu0 %v2806
        %2874 = vmatprep.subr.bf16.mxu0 0
        %2875 = vmatpush1.bf16.msra.mxu0 %v2805
        %2876 = vmatprep.subr.bf16.mxu0 0
        %2877 = vmatpush1.bf16.msra.mxu0 %v2804
        %2878 = vmatprep.subr.bf16.mxu0 0
        %2879 = vmatpush1.bf16.msra.mxu0 %v2803
        %2880 = vmatprep.subr.bf16.mxu0 0
        %2881 = vmatpush1.bf16.msra.mxu0 %v2802
        %2882 = vmatprep.subr.bf16.mxu0 0
        %2883 = vmatpush2.bf16.msra.mxu0 %v2817
        %2884 = vmatprep.subr.bf16.mxu0 0
        %2885 = vmatpush2.bf16.msra.mxu0 %v2816
        %2886 = vmatprep.subr.bf16.mxu0 0
        %2887 = vmatpush2.bf16.msra.mxu0 %v2815
        %2888 = vmatprep.subr.bf16.mxu0 0
        %2889 = vmatpush2.bf16.msra.mxu0 %v2814
        %2890 = vmatprep.subr.bf16.mxu0 0
        %2891 = vmatpush2.bf16.msra.mxu0 %v2813
        %2892 = vmatprep.subr.bf16.mxu0 0
        %2893 = vmatpush2.bf16.msra.mxu0 %v2812
        %2894 = vmatprep.subr.bf16.mxu0 0
        %2895 = vmatpush2.bf16.msra.mxu0 %v2811
        %2896 = vmatprep.subr.bf16.mxu0 0
        %2897 = vmatpush2.bf16.msra.mxu0 %v2810
        %2898 = vmatprep.mubr.bf16.mxu0 %v2547
        %2899 = vmatmul.mubr.bf16.gmra.mxu0 %v2546
        %v2900 = vpop.f32.mrf.mxu0
        %v2901 = vadd.f32 0.0, %v2900
        %v2902 = vpop.f32.mrf.mxu0
        %v2903 = vpop.f32.mrf.mxu0
        %v2904 = vadd.f32 0.0, %v2903
        %v2905 = vpop.f32.mrf.mxu0
        %2906 = vmatprep.mubr.bf16.mxu0 %v2551
        %2907 = vmatmul.mubr.bf16.gmra.mxu0 %v2550
        %v2908 = vpop.f32.mrf.mxu0
        %v2909 = vadd.f32 0.0, %v2908
        %v2910 = vpop.f32.mrf.mxu0
        %v2911 = vpop.f32.mrf.mxu0
        %v2912 = vadd.f32 0.0, %v2911
        %v2913 = vpop.f32.mrf.mxu0
        %2914 = vmatprep.mubr.bf16.mxu0 %v2555
        %2915 = vmatmul.mubr.bf16.gmra.mxu0 %v2554
        %v2916 = vpop.f32.mrf.mxu0
        %v2917 = vadd.f32 0.0, %v2916
        %v2918 = vpop.f32.mrf.mxu0
        %v2919 = vpop.f32.mrf.mxu0
        %v2920 = vadd.f32 0.0, %v2919
        %v2921 = vpop.f32.mrf.mxu0
        %2922 = vmatprep.mubr.bf16.mxu0 %v2559
        %2923 = vmatmul.mubr.bf16.gmra.mxu0 %v2558
        %v2924 = vpop.f32.mrf.mxu0
        %v2925 = vadd.f32 0.0, %v2924
        %v2926 = vpop.f32.mrf.mxu0
        %v2927 = vpop.f32.mrf.mxu0
        %v2928 = vadd.f32 0.0, %v2927
        %v2929 = vpop.f32.mrf.mxu0
        %2930 = vmatprep.mubr.bf16.mxu0 %v2563
        %2931 = vmatmul.mubr.bf16.gmra.mxu0 %v2562
        %v2932 = vpop.f32.mrf.mxu0
        %v2933 = vadd.f32 0.0, %v2932
        %v2934 = vpop.f32.mrf.mxu0
        %v2935 = vpop.f32.mrf.mxu0
        %v2936 = vadd.f32 0.0, %v2935
        %v2937 = vpop.f32.mrf.mxu0
        %2938 = vmatprep.mubr.bf16.mxu0 %v2567
        %2939 = vmatmul.mubr.bf16.gmra.mxu0 %v2566
        %v2940 = vpop.f32.mrf.mxu0
        %v2941 = vadd.f32 0.0, %v2940
        %v2942 = vpop.f32.mrf.mxu0
        %v2943 = vpop.f32.mrf.mxu0
        %v2944 = vadd.f32 0.0, %v2943
        %v2945 = vpop.f32.mrf.mxu0
        %2946 = vmatprep.mubr.bf16.mxu0 %v2571
        %2947 = vmatmul.mubr.bf16.gmra.mxu0 %v2570
        %v2948 = vpop.f32.mrf.mxu0
        %v2949 = vadd.f32 0.0, %v2948
        %v2950 = vpop.f32.mrf.mxu0
        %v2951 = vpop.f32.mrf.mxu0
        %v2952 = vadd.f32 0.0, %v2951
        %v2953 = vpop.f32.mrf.mxu0
        %2954 = vmatprep.mubr.bf16.mxu0 %v2575
        %2955 = vmatmul.mubr.bf16.gmra.mxu0 %v2574
        %v2956 = vpop.f32.mrf.mxu0
        %v2957 = vadd.f32 0.0, %v2956
        %v2958 = vpop.f32.mrf.mxu0
        %v2959 = vpop.f32.mrf.mxu0
        %v2960 = vadd.f32 0.0, %v2959
        %v2961 = vpop.f32.mrf.mxu0
        %2962 = vmatprep.mubr.bf16.mxu0 %v2579
        %2963 = vmatmul.mubr.bf16.gmra.mxu0 %v2578
        %v2964 = vpop.f32.mrf.mxu0
        %v2965 = vadd.f32 0.0, %v2964
        %v2966 = vpop.f32.mrf.mxu0
        %v2967 = vpop.f32.mrf.mxu0
        %v2968 = vadd.f32 0.0, %v2967
        %v2969 = vpop.f32.mrf.mxu0
        %2970 = vmatprep.mubr.bf16.mxu0 %v2583
        %2971 = vmatmul.mubr.bf16.gmra.mxu0 %v2582
        %v2972 = vpop.f32.mrf.mxu0
        %v2973 = vadd.f32 0.0, %v2972
        %v2974 = vpop.f32.mrf.mxu0
        %v2975 = vpop.f32.mrf.mxu0
        %v2976 = vadd.f32 0.0, %v2975
        %v2977 = vpop.f32.mrf.mxu0
        %2978 = vmatprep.mubr.bf16.mxu0 %v2587
        %2979 = vmatmul.mubr.bf16.gmra.mxu0 %v2586
        %v2980 = vpop.f32.mrf.mxu0
        %v2981 = vadd.f32 0.0, %v2980
        %v2982 = vpop.f32.mrf.mxu0
        %v2983 = vpop.f32.mrf.mxu0
        %v2984 = vadd.f32 0.0, %v2983
        %v2985 = vpop.f32.mrf.mxu0
        %2986 = vmatprep.mubr.bf16.mxu0 %v2591
        %2987 = vmatmul.mubr.bf16.gmra.mxu0 %v2590
        %v2988 = vpop.f32.mrf.mxu0
        %v2989 = vadd.f32 0.0, %v2988
        %v2990 = vpop.f32.mrf.mxu0
        %v2991 = vpop.f32.mrf.mxu0
        %v2992 = vadd.f32 0.0, %v2991
        %v2993 = vpop.f32.mrf.mxu0
        %2994 = vmatprep.mubr.bf16.mxu0 %v2595
        %2995 = vmatmul.mubr.bf16.gmra.mxu0 %v2594
        %v2996 = vpop.f32.mrf.mxu0
        %v2997 = vadd.f32 0.0, %v2996
        %v2998 = vpop.f32.mrf.mxu0
        %v2999 = vpop.f32.mrf.mxu0
        %v3000 = vadd.f32 0.0, %v2999
        %v3001 = vpop.f32.mrf.mxu0
        %3002 = vmatprep.mubr.bf16.mxu0 %v2599
        %3003 = vmatmul.mubr.bf16.gmra.mxu0 %v2598
        %v3004 = vpop.f32.mrf.mxu0
        %v3005 = vadd.f32 0.0, %v3004
        %v3006 = vpop.f32.mrf.mxu0
        %v3007 = vpop.f32.mrf.mxu0
        %v3008 = vadd.f32 0.0, %v3007
        %v3009 = vpop.f32.mrf.mxu0
        %3010 = vmatprep.mubr.bf16.mxu0 %v2603
        %3011 = vmatmul.mubr.bf16.gmra.mxu0 %v2602
        %v3012 = vpop.f32.mrf.mxu0
        %v3013 = vadd.f32 0.0, %v3012
        %v3014 = vpop.f32.mrf.mxu0
        %v3015 = vpop.f32.mrf.mxu0
        %v3016 = vadd.f32 0.0, %v3015
        %v3017 = vpop.f32.mrf.mxu0
        %3018 = vmatprep.mubr.bf16.mxu0 %v2607
        %3019 = vmatmul.mubr.bf16.gmra.mxu0 %v2606
        %v3020 = vpop.f32.mrf.mxu0
        %v3021 = vadd.f32 0.0, %v3020
        %v3022 = vpop.f32.mrf.mxu0
        %v3023 = vpop.f32.mrf.mxu0
        %v3024 = vadd.f32 0.0, %v3023
        %v3025 = vpop.f32.mrf.mxu0
        %3026 = vdwg.mxu0
        %3027 = vmatprep.subr.bf16.mxu0 0
        %3028 = vmatpush1.bf16.msra.mxu0 %v2825
        %3029 = vmatprep.subr.bf16.mxu0 0
        %3030 = vmatpush1.bf16.msra.mxu0 %v2824
        %3031 = vmatprep.subr.bf16.mxu0 0
        %3032 = vmatpush1.bf16.msra.mxu0 %v2823
        %3033 = vmatprep.subr.bf16.mxu0 0
        %3034 = vmatpush1.bf16.msra.mxu0 %v2822
        %3035 = vmatprep.subr.bf16.mxu0 0
        %3036 = vmatpush1.bf16.msra.mxu0 %v2821
        %3037 = vmatprep.subr.bf16.mxu0 0
        %3038 = vmatpush1.bf16.msra.mxu0 %v2820
        %3039 = vmatprep.subr.bf16.mxu0 0
        %3040 = vmatpush1.bf16.msra.mxu0 %v2819
        %3041 = vmatprep.subr.bf16.mxu0 0
        %3042 = vmatpush1.bf16.msra.mxu0 %v2818
        %3043 = vmatprep.subr.bf16.mxu0 0
        %3044 = vmatpush2.bf16.msra.mxu0 %v2833
        %3045 = vmatprep.subr.bf16.mxu0 0
        %3046 = vmatpush2.bf16.msra.mxu0 %v2832
        %3047 = vmatprep.subr.bf16.mxu0 0
        %3048 = vmatpush2.bf16.msra.mxu0 %v2831
        %3049 = vmatprep.subr.bf16.mxu0 0
        %3050 = vmatpush2.bf16.msra.mxu0 %v2830
        %3051 = vmatprep.subr.bf16.mxu0 0
        %3052 = vmatpush2.bf16.msra.mxu0 %v2829
        %3053 = vmatprep.subr.bf16.mxu0 0
        %3054 = vmatpush2.bf16.msra.mxu0 %v2828
        %3055 = vmatprep.subr.bf16.mxu0 0
        %3056 = vmatpush2.bf16.msra.mxu0 %v2827
        %3057 = vmatprep.subr.bf16.mxu0 0
        %3058 = vmatpush2.bf16.msra.mxu0 %v2826
        %3059 = vmatprep.mubr.bf16.mxu0 %v2549
        %3060 = vmatmul.mubr.bf16.gmra.mxu0 %v2548
        %v3061 = vpop.f32.mrf.mxu0
        %v3062 = vadd.f32 %v2901, %v3061
        %v3063 = vpop.f32.mrf.mxu0
        %v3064 = vpop.f32.mrf.mxu0
        %v3065 = vadd.f32 %v2904, %v3064
        %v3066 = vpop.f32.mrf.mxu0
        %3067 = vmatprep.mubr.bf16.mxu0 %v2553
        %3068 = vmatmul.mubr.bf16.gmra.mxu0 %v2552
        %v3069 = vpop.f32.mrf.mxu0
        %v3070 = vadd.f32 %v2909, %v3069
        %v3071 = vpop.f32.mrf.mxu0
        %v3072 = vpop.f32.mrf.mxu0
        %v3073 = vadd.f32 %v2912, %v3072
        %v3074 = vpop.f32.mrf.mxu0
        %3075 = vmatprep.mubr.bf16.mxu0 %v2557
        %3076 = vmatmul.mubr.bf16.gmra.mxu0 %v2556
        %v3077 = vpop.f32.mrf.mxu0
        %v3078 = vadd.f32 %v2917, %v3077
        %v3079 = vpop.f32.mrf.mxu0
        %v3080 = vpop.f32.mrf.mxu0
        %v3081 = vadd.f32 %v2920, %v3080
        %v3082 = vpop.f32.mrf.mxu0
        %3083 = vmatprep.mubr.bf16.mxu0 %v2561
        %3084 = vmatmul.mubr.bf16.gmra.mxu0 %v2560
        %v3085 = vpop.f32.mrf.mxu0
        %v3086 = vadd.f32 %v2925, %v3085
        %v3087 = vpop.f32.mrf.mxu0
        %v3088 = vpop.f32.mrf.mxu0
        %v3089 = vadd.f32 %v2928, %v3088
        %v3090 = vpop.f32.mrf.mxu0
        %3091 = vmatprep.mubr.bf16.mxu0 %v2565
        %3092 = vmatmul.mubr.bf16.gmra.mxu0 %v2564
        %v3093 = vpop.f32.mrf.mxu0
        %v3094 = vadd.f32 %v2933, %v3093
        %v3095 = vpop.f32.mrf.mxu0
        %v3096 = vpop.f32.mrf.mxu0
        %v3097 = vadd.f32 %v2936, %v3096
        %v3098 = vpop.f32.mrf.mxu0
        %3099 = vmatprep.mubr.bf16.mxu0 %v2569
        %3100 = vmatmul.mubr.bf16.gmra.mxu0 %v2568
        %v3101 = vpop.f32.mrf.mxu0
        %v3102 = vadd.f32 %v2941, %v3101
        %v3103 = vpop.f32.mrf.mxu0
        %v3104 = vpop.f32.mrf.mxu0
        %v3105 = vadd.f32 %v2944, %v3104
        %v3106 = vpop.f32.mrf.mxu0
        %3107 = vmatprep.mubr.bf16.mxu0 %v2573
        %3108 = vmatmul.mubr.bf16.gmra.mxu0 %v2572
        %v3109 = vpop.f32.mrf.mxu0
        %v3110 = vadd.f32 %v2949, %v3109
        %v3111 = vpop.f32.mrf.mxu0
        %v3112 = vpop.f32.mrf.mxu0
        %v3113 = vadd.f32 %v2952, %v3112
        %v3114 = vpop.f32.mrf.mxu0
        %3115 = vmatprep.mubr.bf16.mxu0 %v2577
        %3116 = vmatmul.mubr.bf16.gmra.mxu0 %v2576
        %v3117 = vpop.f32.mrf.mxu0
        %v3118 = vadd.f32 %v2957, %v3117
        %v3119 = vpop.f32.mrf.mxu0
        %v3120 = vpop.f32.mrf.mxu0
        %v3121 = vadd.f32 %v2960, %v3120
        %v3122 = vpop.f32.mrf.mxu0
        %3123 = vmatprep.mubr.bf16.mxu0 %v2581
        %3124 = vmatmul.mubr.bf16.gmra.mxu0 %v2580
        %v3125 = vpop.f32.mrf.mxu0
        %v3126 = vadd.f32 %v2965, %v3125
        %v3127 = vpop.f32.mrf.mxu0
        %v3128 = vpop.f32.mrf.mxu0
        %v3129 = vadd.f32 %v2968, %v3128
        %v3130 = vpop.f32.mrf.mxu0
        %3131 = vmatprep.mubr.bf16.mxu0 %v2585
        %3132 = vmatmul.mubr.bf16.gmra.mxu0 %v2584
        %v3133 = vpop.f32.mrf.mxu0
        %v3134 = vadd.f32 %v2973, %v3133
        %v3135 = vpop.f32.mrf.mxu0
        %v3136 = vpop.f32.mrf.mxu0
        %v3137 = vadd.f32 %v2976, %v3136
        %v3138 = vpop.f32.mrf.mxu0
        %3139 = vmatprep.mubr.bf16.mxu0 %v2589
        %3140 = vmatmul.mubr.bf16.gmra.mxu0 %v2588
        %v3141 = vpop.f32.mrf.mxu0
        %v3142 = vadd.f32 %v2981, %v3141
        %v3143 = vpop.f32.mrf.mxu0
        %v3144 = vpop.f32.mrf.mxu0
        %v3145 = vadd.f32 %v2984, %v3144
        %v3146 = vpop.f32.mrf.mxu0
        %3147 = vmatprep.mubr.bf16.mxu0 %v2593
        %3148 = vmatmul.mubr.bf16.gmra.mxu0 %v2592
        %v3149 = vpop.f32.mrf.mxu0
        %v3150 = vadd.f32 %v2989, %v3149
        %v3151 = vpop.f32.mrf.mxu0
        %v3152 = vpop.f32.mrf.mxu0
        %v3153 = vadd.f32 %v2992, %v3152
        %v3154 = vpop.f32.mrf.mxu0
        %3155 = vmatprep.mubr.bf16.mxu0 %v2597
        %3156 = vmatmul.mubr.bf16.gmra.mxu0 %v2596
        %v3157 = vpop.f32.mrf.mxu0
        %v3158 = vadd.f32 %v2997, %v3157
        %v3159 = vpop.f32.mrf.mxu0
        %v3160 = vpop.f32.mrf.mxu0
        %v3161 = vadd.f32 %v3000, %v3160
        %v3162 = vpop.f32.mrf.mxu0
        %3163 = vmatprep.mubr.bf16.mxu0 %v2601
        %3164 = vmatmul.mubr.bf16.gmra.mxu0 %v2600
        %v3165 = vpop.f32.mrf.mxu0
        %v3166 = vadd.f32 %v3005, %v3165
        %v3167 = vpop.f32.mrf.mxu0
        %v3168 = vpop.f32.mrf.mxu0
        %v3169 = vadd.f32 %v3008, %v3168
        %v3170 = vpop.f32.mrf.mxu0
        %3171 = vmatprep.mubr.bf16.mxu0 %v2605
        %3172 = vmatmul.mubr.bf16.gmra.mxu0 %v2604
        %v3173 = vpop.f32.mrf.mxu0
        %v3174 = vadd.f32 %v3013, %v3173
        %v3175 = vpop.f32.mrf.mxu0
        %v3176 = vpop.f32.mrf.mxu0
        %v3177 = vadd.f32 %v3016, %v3176
        %v3178 = vpop.f32.mrf.mxu0
        %3179 = vmatprep.mubr.bf16.mxu0 %v2609
        %3180 = vmatmul.mubr.bf16.gmra.mxu0 %v2608
        %v3181 = vpop.f32.mrf.mxu0
        %v3182 = vadd.f32 %v3021, %v3181
        %v3183 = vpop.f32.mrf.mxu0
        %v3184 = vpop.f32.mrf.mxu0
        %v3185 = vadd.f32 %v3024, %v3184
        %v3186 = vpop.f32.mrf.mxu0
        %3187 = vdwg.mxu0
        %v3188 = vadd.f32 %v2514, %v3062
        %v3189 = vadd.f32 %v2515, %v3065
        %v3190 = vadd.f32 %v2516, %v3070
        %v3191 = vadd.f32 %v2517, %v3073
        %v3192 = vadd.f32 %v2518, %v3078
        %v3193 = vadd.f32 %v2519, %v3081
        %v3194 = vadd.f32 %v2520, %v3086
        %v3195 = vadd.f32 %v2521, %v3089
        %v3196 = vadd.f32 %v2522, %v3094
        %v3197 = vadd.f32 %v2523, %v3097
        %v3198 = vadd.f32 %v2524, %v3102
        %v3199 = vadd.f32 %v2525, %v3105
        %v3200 = vadd.f32 %v2526, %v3110
        %v3201 = vadd.f32 %v2527, %v3113
        %v3202 = vadd.f32 %v2528, %v3118
        %v3203 = vadd.f32 %v2529, %v3121
        %v3204 = vadd.f32 %v2530, %v3126
        %v3205 = vadd.f32 %v2531, %v3129
        %v3206 = vadd.f32 %v2532, %v3134
        %v3207 = vadd.f32 %v2533, %v3137
        %v3208 = vadd.f32 %v2534, %v3142
        %v3209 = vadd.f32 %v2535, %v3145
        %v3210 = vadd.f32 %v2536, %v3150
        %v3211 = vadd.f32 %v2537, %v3153
        %v3212 = vadd.f32 %v2538, %v3158
        %v3213 = vadd.f32 %v2539, %v3161
        %v3214 = vadd.f32 %v2540, %v3166
        %v3215 = vadd.f32 %v2541, %v3169
        %v3216 = vadd.f32 %v2542, %v3174
        %v3217 = vadd.f32 %v2543, %v3177
        %v3218 = vadd.f32 %v2544, %v3182
        %v3219 = vadd.f32 %v2545, %v3185
        %3220 = vst [vmem:[#allocation2] sm:$0xff] %v3188
        %3221 = vst [vmem:[#allocation2 + $0x8] sm:$0xff] %v3189
        %3222 = vst [vmem:[#allocation2 + $0x10] sm:$0xff] %v3190
        %3223 = vst [vmem:[#allocation2 + $0x18] sm:$0xff] %v3191
        %3224 = vst [vmem:[#allocation2 + $0x20] sm:$0xff] %v3192
        %3225 = vst [vmem:[#allocation2 + $0x28] sm:$0xff] %v3193
        %3226 = vst [vmem:[#allocation2 + $0x30] sm:$0xff] %v3194
        %3227 = vst [vmem:[#allocation2 + $0x38] sm:$0xff] %v3195
        %3228 = vst [vmem:[#allocation2 + $0x40] sm:$0xff] %v3196
        %3229 = vst [vmem:[#allocation2 + $0x48] sm:$0xff] %v3197
        %3230 = vst [vmem:[#allocation2 + $0x50] sm:$0xff] %v3198
        %3231 = vst [vmem:[#allocation2 + $0x58] sm:$0xff] %v3199
        %3232 = vst [vmem:[#allocation2 + $0x60] sm:$0xff] %v3200
        %3233 = vst [vmem:[#allocation2 + $0x68] sm:$0xff] %v3201
        %3234 = vst [vmem:[#allocation2 + $0x70] sm:$0xff] %v3202
        %3235 = vst [vmem:[#allocation2 + $0x78] sm:$0xff] %v3203
        %3236 = vst [vmem:[#allocation2 + $0x80] sm:$0xff] %v3204
        %3237 = vst [vmem:[#allocation2 + $0x88] sm:$0xff] %v3205
        %3238 = vst [vmem:[#allocation2 + $0x90] sm:$0xff] %v3206
        %3239 = vst [vmem:[#allocation2 + $0x98] sm:$0xff] %v3207
        %3240 = vst [vmem:[#allocation2 + $0xa0] sm:$0xff] %v3208
        %3241 = vst [vmem:[#allocation2 + $0xa8] sm:$0xff] %v3209
        %3242 = vst [vmem:[#allocation2 + $0xb0] sm:$0xff] %v3210
        %3243 = vst [vmem:[#allocation2 + $0xb8] sm:$0xff] %v3211
        %3244 = vst [vmem:[#allocation2 + $0xc0] sm:$0xff] %v3212
        %3245 = vst [vmem:[#allocation2 + $0xc8] sm:$0xff] %v3213
        %3246 = vst [vmem:[#allocation2 + $0xd0] sm:$0xff] %v3214
        %3247 = vst [vmem:[#allocation2 + $0xd8] sm:$0xff] %v3215
        %3248 = vst [vmem:[#allocation2 + $0xe0] sm:$0xff] %v3216
        %3249 = vst [vmem:[#allocation2 + $0xe8] sm:$0xff] %v3217
        %3250 = vst [vmem:[#allocation2 + $0xf0] sm:$0xff] %v3218
        %3251 = vst [vmem:[#allocation2 + $0xf8] sm:$0xff] %v3219
        // Predicated region
        $region49: #{tpu_custom_call.1} parent=31 // pred_check
          %p3252 = pneg %p250
        $region50: #{tpu_custom_call.1} parent=31 // pred_check_branch
          %3254 = sbr.rel (%p3252) target = $region52
        $region51: #{tpu_custom_call.1} parent=31 // pred_region
          %v3255 = vld [vmem:[#allocation2] sm:$0xff]
          %v3256 = vld [vmem:[#allocation2 + $0x8] sm:$0xff]
          %v3257 = vld [vmem:[#allocation2 + $0x10] sm:$0xff]
          %v3258 = vld [vmem:[#allocation2 + $0x18] sm:$0xff]
          %v3259 = vld [vmem:[#allocation2 + $0x20] sm:$0xff]
          %v3260 = vld [vmem:[#allocation2 + $0x28] sm:$0xff]
          %v3261 = vld [vmem:[#allocation2 + $0x30] sm:$0xff]
          %v3262 = vld [vmem:[#allocation2 + $0x38] sm:$0xff]
          %v3263 = vld [vmem:[#allocation2 + $0x40] sm:$0xff]
          %v3264 = vld [vmem:[#allocation2 + $0x48] sm:$0xff]
          %v3265 = vld [vmem:[#allocation2 + $0x50] sm:$0xff]
          %v3266 = vld [vmem:[#allocation2 + $0x58] sm:$0xff]
          %v3267 = vld [vmem:[#allocation2 + $0x60] sm:$0xff]
          %v3268 = vld [vmem:[#allocation2 + $0x68] sm:$0xff]
          %v3269 = vld [vmem:[#allocation2 + $0x70] sm:$0xff]
          %v3270 = vld [vmem:[#allocation2 + $0x78] sm:$0xff]
          %v3271 = vld [vmem:[#allocation2 + $0x80] sm:$0xff]
          %v3272 = vld [vmem:[#allocation2 + $0x88] sm:$0xff]
          %v3273 = vld [vmem:[#allocation2 + $0x90] sm:$0xff]
          %v3274 = vld [vmem:[#allocation2 + $0x98] sm:$0xff]
          %v3275 = vld [vmem:[#allocation2 + $0xa0] sm:$0xff]
          %v3276 = vld [vmem:[#allocation2 + $0xa8] sm:$0xff]
          %v3277 = vld [vmem:[#allocation2 + $0xb0] sm:$0xff]
          %v3278 = vld [vmem:[#allocation2 + $0xb8] sm:$0xff]
          %v3279 = vld [vmem:[#allocation2 + $0xc0] sm:$0xff]
          %v3280 = vld [vmem:[#allocation2 + $0xc8] sm:$0xff]
          %v3281 = vld [vmem:[#allocation2 + $0xd0] sm:$0xff]
          %v3282 = vld [vmem:[#allocation2 + $0xd8] sm:$0xff]
          %v3283 = vld [vmem:[#allocation2 + $0xe0] sm:$0xff]
          %v3284 = vld [vmem:[#allocation2 + $0xe8] sm:$0xff]
          %v3285 = vld [vmem:[#allocation2 + $0xf0] sm:$0xff]
          %v3286 = vld [vmem:[#allocation2 + $0xf8] sm:$0xff]
          %3287 = vst [vmem:[%s245] sm:$0xff] %v3255
          %3288 = vst [vmem:[%s245 + $0x8] sm:$0xff] %v3256
          %3289 = vst [vmem:[%s245 + $0x10] sm:$0xff] %v3257
          %3290 = vst [vmem:[%s245 + $0x18] sm:$0xff] %v3258
          %3291 = vst [vmem:[%s245 + $0x20] sm:$0xff] %v3259
          %3292 = vst [vmem:[%s245 + $0x28] sm:$0xff] %v3260
          %3293 = vst [vmem:[%s245 + $0x30] sm:$0xff] %v3261
          %3294 = vst [vmem:[%s245 + $0x38] sm:$0xff] %v3262
          %3295 = vst [vmem:[%s245 + $0x40] sm:$0xff] %v3263
          %3296 = vst [vmem:[%s245 + $0x48] sm:$0xff] %v3264
          %3297 = vst [vmem:[%s245 + $0x50] sm:$0xff] %v3265
          %3298 = vst [vmem:[%s245 + $0x58] sm:$0xff] %v3266
          %3299 = vst [vmem:[%s245 + $0x60] sm:$0xff] %v3267
          %3300 = vst [vmem:[%s245 + $0x68] sm:$0xff] %v3268
          %3301 = vst [vmem:[%s245 + $0x70] sm:$0xff] %v3269
          %3302 = vst [vmem:[%s245 + $0x78] sm:$0xff] %v3270
          %3303 = vst [vmem:[%s245 + $0x80] sm:$0xff] %v3271
          %3304 = vst [vmem:[%s245 + $0x88] sm:$0xff] %v3272
          %3305 = vst [vmem:[%s245 + $0x90] sm:$0xff] %v3273
          %3306 = vst [vmem:[%s245 + $0x98] sm:$0xff] %v3274
          %3307 = vst [vmem:[%s245 + $0xa0] sm:$0xff] %v3275
          %3308 = vst [vmem:[%s245 + $0xa8] sm:$0xff] %v3276
          %3309 = vst [vmem:[%s245 + $0xb0] sm:$0xff] %v3277
          %3310 = vst [vmem:[%s245 + $0xb8] sm:$0xff] %v3278
          %3311 = vst [vmem:[%s245 + $0xc0] sm:$0xff] %v3279
          %3312 = vst [vmem:[%s245 + $0xc8] sm:$0xff] %v3280
          %3313 = vst [vmem:[%s245 + $0xd0] sm:$0xff] %v3281
          %3314 = vst [vmem:[%s245 + $0xd8] sm:$0xff] %v3282
          %3315 = vst [vmem:[%s245 + $0xe0] sm:$0xff] %v3283
          %3316 = vst [vmem:[%s245 + $0xe8] sm:$0xff] %v3284
          %3317 = vst [vmem:[%s245 + $0xf0] sm:$0xff] %v3285
          %3318 = vst [vmem:[%s245 + $0xf8] sm:$0xff] %v3286
        $region52: #{tpu_custom_call.1} parent=31 // pred_fallthru
          _
        %s3319 = sand.u32 %s119, 1
        %s3320 = scalar_lea.sflag [#allocation5], %s3319
        %s3321 = sand.u32 %s119, 1
        %s3322 = smul.addr %s3321, 256
        %s3323 = scalar_lea.vmem [#allocation9], %s3322
        // Predicated region
        $region53: #{tpu_custom_call.1} parent=31 // pred_check
          %p3324 = pneg %p129
        $region54: #{tpu_custom_call.1} parent=31 // pred_check_branch
          %3326 = sbr.rel (%p3324) target = $region56
        $region55: #{tpu_custom_call.1} parent=31 // pred_region
          %s3327 = smul.u32 32, %s25
          %s3329 = ssub.s32 4096, 4096
          %3330 = vsyncadd %s3320, %s3329
          %s3331 = smul.addr %s3327, 128
          %s3332 = scalar_lea.hbm %s3, %s3331
          %s3333 = sshll.u32 %s3323, 4
          %s3334 = int_to_ptr.vmem [resolvable:$true] %s3333
          %3339 = dma.vmem_to_hbm [thread:$0]  %s3334, 4096, %s3332, %s3320, 128, 128, 8
        $region56: #{tpu_custom_call.1} parent=31 // pred_fallthru
          _
      $region32: #{tpu_custom_call.1} parent=5 // pred_fallthru
        _
      %p3340 = scmp.le.s32.totalorder 2, %s16
      // Predicated region
      $region57: #{tpu_custom_call.1} parent=5 // pred_check
        %p3341 = pneg %p3340
      $region58: #{tpu_custom_call.1} parent=5 // pred_check_branch
        %3343 = sbr.rel (%p3341) target = $region60
      $region59: #{tpu_custom_call.1} parent=5 // pred_region
        %s3344 = ssub.s32 %s16, 2
        // Predicated region
        $region61: #{tpu_custom_call.1} parent=59 // pred_check
          %p3345 = pneg %p135
        $region62: #{tpu_custom_call.1} parent=59 // pred_check_branch
          %3347 = sbr.rel (%p3345) target = $region64
        $region63: #{tpu_custom_call.1} parent=59 // pred_region
          %s3348 = sand.u32 %s120, 1
          %s3349 = scalar_lea.sflag [#allocation5], %s3348
          %s3350 = sand.u32 %s120, 1
          %s3351 = smul.addr %s3350, 256
          %s3352 = scalar_lea.vmem [#allocation9], %s3351
          %3353 = dma.done %s3349, 4096
        $region64: #{tpu_custom_call.1} parent=59 // pred_fallthru
          _
      $region60: #{tpu_custom_call.1} parent=5 // pred_fallthru
        _
    $region6: #{tpu_custom_call.1} parent=1 // loop_footer
      %s20 = sadd.s32 1, %s16
    $region7: #{tpu_custom_call.1} parent=1 // loop_footer_branch
      %15 = sbr.rel target = $region3
    $region8: #{tpu_custom_call.1} parent=1 // loop_exit
      _
    %3354 = vsyncpa [#allocation4], 1
    %s3355 = scalar_lea.sflag [#allocation4], 1
    %3356 = vsyncpa %s3355, 1
    %3357 = vsyncpa [#allocation7], 1
    %3358 = vsyncpa [#allocation5], 1
    %s3359 = scalar_lea.sflag [#allocation5], 1
    %3360 = vsyncpa %s3359, 1

</llo_original>
